<compile_context>
chip_gen: v7x
topology: tpu7x:2x2x1
jax: 0.10.0
libtpu: 0.0.40
codegen_flags: <defaults>
</compile_context>

<pallas_src>
import functools
import math

import numpy as np
import jax
import jax.numpy as jnp
from jax.experimental import pallas as pl
from jax.experimental.pallas import tpu as pltpu


# ----------------------------------------------------------------------------
# Fused Pallas kernel: embedding -> num_layers encoder layers -> head
# ----------------------------------------------------------------------------

def _fused_forward_kernel(
        x_ref, emb_w_ref, emb_scale_ref, emb_add_ref,
        wq_ref, bq_ref, wk_ref, bk_ref, wv_ref, bv_ref,
        wo_ref, bo_ref, ln1g_ref, ln1b_ref,
        w1_ref, b1_ref, w2_ref, b2_ref, ln2g_ref, ln2b_ref,
        out_w_ref, out_b_ref,
        o_ref,
        h_ref,                               # persistent VMEM scratch (M, E)
        *, num_heads, batch, seq_len):
    layer = pl.program_id(0)

    # ---- layer-0 prologue: embedding Linear + PE + eval-mode BatchNorm1d ----
    @pl.when(layer == 0)
    def _():
        z = jnp.dot(x_ref[...], emb_w_ref[...],
                    preferred_element_type=jnp.float32)
        # (S, E) scale / add broadcast to (B*S, E) in-kernel (tiny).
        scale = jnp.concatenate([emb_scale_ref[...]] * batch, axis=0)
        add = jnp.concatenate([emb_add_ref[...]] * batch, axis=0)
        h_ref[...] = z * scale + add

    # ---- one post-norm TransformerEncoderLayer (all operands in VMEM) ------
    h = h_ref[...]                                   # (M, E), M = B * S
    M, E = h.shape
    H = num_heads
    Dh = E // H
    sm_scale = 1.0 / math.sqrt(Dh)

    q = jnp.dot(h, wq_ref[...], preferred_element_type=jnp.float32) + bq_ref[...]
    k = jnp.dot(h, wk_ref[...], preferred_element_type=jnp.float32) + bk_ref[...]
    v = jnp.dot(h, wv_ref[...], preferred_element_type=jnp.float32) + bv_ref[...]

    # Per-sequence, per-head attention via static slices: no masked full-width
    # matmuls, no (M, M) block-diagonal mask tensor, no wasted MXU work.
    ctx_seqs = []
    for b in range(batch):                           # static unroll (tiny B)
        r0 = b * seq_len
        head_outs = []
        for hd in range(H):                          # static unroll over heads
            c0 = hd * Dh
            q_h = q[r0:r0 + seq_len, c0:c0 + Dh]     # (S, Dh)
            k_h = k[r0:r0 + seq_len, c0:c0 + Dh]
            v_h = v[r0:r0 + seq_len, c0:c0 + Dh]
            s = jax.lax.dot_general(
                q_h, k_h, (((1,), (1,)), ((), ())),
                preferred_element_type=jnp.float32) * sm_scale
            s = s - jnp.max(s, axis=-1, keepdims=True)
            p = jnp.exp(s)
            p = p / jnp.sum(p, axis=-1, keepdims=True)      # exact softmax
            head_outs.append(
                jnp.dot(p, v_h, preferred_element_type=jnp.float32))
        ctx_seqs.append(jnp.concatenate(head_outs, axis=-1))  # (S, E)
    ctx = jnp.concatenate(ctx_seqs, axis=0)                   # (M, E)

    attn_out = (jnp.dot(ctx, wo_ref[...], preferred_element_type=jnp.float32)
                + bo_ref[...])

    # residual + LayerNorm 1 (post-norm)
    y = h + attn_out
    mu = jnp.mean(y, axis=-1, keepdims=True)
    var = jnp.mean(jnp.square(y - mu), axis=-1, keepdims=True)
    h1 = (y - mu) * jax.lax.rsqrt(var + 1e-5) * ln1g_ref[...] + ln1b_ref[...]

    # feed-forward (Linear -> ReLU -> Linear); intermediate stays in VMEM
    ff = jnp.maximum(
        jnp.dot(h1, w1_ref[...], preferred_element_type=jnp.float32)
        + b1_ref[...], 0.0)
    ff = (jnp.dot(ff, w2_ref[...], preferred_element_type=jnp.float32)
          + b2_ref[...])

    # residual + LayerNorm 2
    y2 = h1 + ff
    mu2 = jnp.mean(y2, axis=-1, keepdims=True)
    var2 = jnp.mean(jnp.square(y2 - mu2), axis=-1, keepdims=True)
    h2 = ((y2 - mu2) * jax.lax.rsqrt(var2 + 1e-5) * ln2g_ref[...]
          + ln2b_ref[...])
    h_ref[...] = h2

    # ---- last-layer epilogue: fc_out on last time step + Softplus ----------
    @pl.when(layer == pl.num_programs(0) - 1)
    def _():
        last = jnp.concatenate(
            [h2[(b + 1) * seq_len - 1:(b + 1) * seq_len, :]
             for b in range(batch)], axis=0)                   # (B, E)
        z = (jnp.dot(last, out_w_ref[...],
                     preferred_element_type=jnp.float32) + out_b_ref[...])
        # PyTorch Softplus(beta=1, threshold=20).
        safe = jnp.minimum(z, 20.0)
        o_ref[...] = jnp.where(z > 20.0, z, jnp.log(1.0 + jnp.exp(safe)))


# ----------------------------------------------------------------------------
# Parameter construction (deterministic, synthetic)
# ----------------------------------------------------------------------------

def init_params(key, input_dim, embed_dim, num_heads, num_layers, output_dim,
                max_length, dim_feedforward=2048):
    assert embed_dim % num_heads == 0

    def dense(k, fan_in, fan_out):
        kw, kb = jax.random.split(k)
        bound = 1.0 / math.sqrt(fan_in)
        w = jax.random.uniform(kw, (fan_in, fan_out), jnp.float32, -bound, bound)
        b = jax.random.uniform(kb, (1, fan_out), jnp.float32, -bound, bound)
        return w, b

    keys = jax.random.split(key, 2 + num_layers)
    params = {}

    emb_w, emb_b = dense(keys[0], input_dim, embed_dim)
    params["emb_w"] = emb_w

    # sinusoidal positional encoding (same formula as the PyTorch module)
    pos = np.arange(max_length, dtype=np.float32)[:, None]
    div = np.exp(np.arange(0, embed_dim, 2, dtype=np.float32)
                 * -(np.log(10000.0) / embed_dim))
    pe = np.zeros((max_length, embed_dim), dtype=np.float32)
    pe[:, 0::2] = np.sin(pos * div)
    pe[:, 1::2] = np.cos(pos * div)
    pe = jnp.asarray(pe)                              # (S, E)

    # BatchNorm1d(max_length) eval-mode (running_mean=0, running_var=1,
    # gamma=1, beta=0) -> per-position affine, folded with Linear bias + PE.
    eps = 1e-5
    gamma = jnp.ones((max_length,), jnp.float32)
    beta = jnp.zeros((max_length,), jnp.float32)
    rmean = jnp.zeros((max_length,), jnp.float32)
    rvar = jnp.ones((max_length,), jnp.float32)
    scale_s = gamma / jnp.sqrt(rvar + eps)            # (S,)
    shift_s = beta - rmean * scale_s                  # (S,)

    params["embed_scale"] = jnp.broadcast_to(
        scale_s[:, None], (max_length, embed_dim)).astype(jnp.float32)
    params["embed_add"] = ((emb_b + pe) * scale_s[:, None]
                           + shift_s[:, None]).astype(jnp.float32)

    # Per-layer weights, stacked along a leading layer axis for the grid.
    names = ["wq", "bq", "wk", "bk", "wv", "bv", "wo", "bo",
             "ln1_g", "ln1_b", "w1", "b1", "w2", "b2", "ln2_g", "ln2_b"]
    per = {n: [] for n in names}
    for li in range(num_layers):
        ks = jax.random.split(keys[1 + li], 6)
        wq, bq = dense(ks[0], embed_dim, embed_dim)
        wk, bk = dense(ks[1], embed_dim, embed_dim)
        wv, bv = dense(ks[2], embed_dim, embed_dim)
        wo, bo = dense(ks[3], embed_dim, embed_dim)
        w1, b1 = dense(ks[4], embed_dim, dim_feedforward)
        w2, b2 = dense(ks[5], dim_feedforward, embed_dim)
        vals = dict(
            wq=wq, bq=bq, wk=wk, bk=bk, wv=wv, bv=bv, wo=wo, bo=bo,
            ln1_g=jnp.ones((1, embed_dim), jnp.float32),
            ln1_b=jnp.zeros((1, embed_dim), jnp.float32),
            w1=w1, b1=b1, w2=w2, b2=b2,
            ln2_g=jnp.ones((1, embed_dim), jnp.float32),
            ln2_b=jnp.zeros((1, embed_dim), jnp.float32))
        for n in names:
            per[n].append(vals[n])
    for n in names:
        params[n] = jnp.stack(per[n], axis=0)

    params["out_w"], params["out_b"] = dense(keys[-1], embed_dim, output_dim)
    return params


# ----------------------------------------------------------------------------
# Forward pass: a single pallas_call with grid = (num_layers,)
# ----------------------------------------------------------------------------

def forward(x, params, num_heads):
    B, S, Din = x.shape
    E = params["emb_w"].shape[1]
    L = params["wq"].shape[0]
    F = params["w1"].shape[2]
    O = params["out_w"].shape[1]
    M = B * S

    kernel = functools.partial(_fused_forward_kernel,
                               num_heads=num_heads, batch=B, seq_len=S)

    def const(shape):       # fetched once (block index constant across grid)
        return pl.BlockSpec(shape, lambda l: (0, 0))

    def per_layer(shape):   # leading layer axis indexed by grid, then squeezed
        return pl.BlockSpec((None,) + shape, lambda l: (l, 0, 0))

    # TODO(synk): weights kept in f32 for numeric parity with the PyTorch
    # reference; casting to bf16 would further halve per-layer weight DMA.
    out = pl.pallas_call(
        kernel,
        grid=(L,),
        in_specs=[
            const((M, Din)),            # x
            const((Din, E)),            # emb_w
            const((S, E)),              # embed_scale
            const((S, E)),              # embed_add
            per_layer((E, E)),          # wq
            per_layer((1, E)),          # bq
            per_layer((E, E)),          # wk
            per_layer((1, E)),          # bk
            per_layer((E, E)),          # wv
            per_layer((1, E)),          # bv
            per_layer((E, E)),          # wo
            per_layer((1, E)),          # bo
            per_layer((1, E)),          # ln1_g
            per_layer((1, E)),          # ln1_b
            per_layer((E, F)),          # w1
            per_layer((1, F)),          # b1
            per_layer((F, E)),          # w2
            per_layer((1, E)),          # b2
            per_layer((1, E)),          # ln2_g
            per_layer((1, E)),          # ln2_b
            const((E, O)),              # out_w
            const((1, O)),              # out_b
        ],
        out_specs=pl.BlockSpec((B, O), lambda l: (0, 0)),
        out_shape=jax.ShapeDtypeStruct((B, O), jnp.float32),
        scratch_shapes=[pltpu.VMEM((M, E), jnp.float32)],
        compiler_params=pltpu.CompilerParams(
            dimension_semantics=("arbitrary",)),
    )(x.reshape(M, Din),
      params["emb_w"], params["embed_scale"], params["embed_add"],
      params["wq"], params["bq"], params["wk"], params["bk"],
      params["wv"], params["bv"], params["wo"], params["bo"],
      params["ln1_g"], params["ln1_b"],
      params["w1"], params["b1"], params["w2"], params["b2"],
      params["ln2_g"], params["ln2_b"],
      params["out_w"], params["out_b"])
    return out


# ----------------------------------------------------------------------------
# Demo
# ----------------------------------------------------------------------------

if __name__ == "__main__":
    INPUT_DIM = 4
    EMBED_DIM = 32
    NUM_HEADS = 4
    NUM_LAYERS = 2
    OUTPUT_DIM = 3
    MAX_LENGTH = 8
    BATCH = 2

    key = jax.random.PRNGKey(0)
    pkey, xkey = jax.random.split(key)

    params = init_params(pkey, INPUT_DIM, EMBED_DIM, NUM_HEADS, NUM_LAYERS,
                         OUTPUT_DIM, MAX_LENGTH)
    x = jax.random.normal(xkey, (BATCH, MAX_LENGTH, INPUT_DIM), jnp.float32)

    fwd = jax.jit(functools.partial(forward, num_heads=NUM_HEADS))
    out = fwd(x, params)
    out = jax.block_until_ready(out)

    assert out.shape == (BATCH, OUTPUT_DIM)
    assert bool(jnp.all(jnp.isfinite(out)))
    assert bool(jnp.all(out >= 0.0))  # softplus output is non-negative
    print("KERNEL_OK")
</pallas_src>

<mosaic_0001>
module attributes {stable_mosaic.version = 11 : i64} {
  func.func @_fused_forward_kernel(%arg0: i32, %arg1: memref<16x4xf32, #tpu.memory_space<vmem>>, %arg2: memref<4x32xf32, #tpu.memory_space<vmem>>, %arg3: memref<8x32xf32, #tpu.memory_space<vmem>>, %arg4: memref<8x32xf32, #tpu.memory_space<vmem>>, %arg5: memref<1x32x32xf32, #tpu.memory_space<vmem>>, %arg6: memref<1x1x32xf32, #tpu.memory_space<vmem>>, %arg7: memref<1x32x32xf32, #tpu.memory_space<vmem>>, %arg8: memref<1x1x32xf32, #tpu.memory_space<vmem>>, %arg9: memref<1x32x32xf32, #tpu.memory_space<vmem>>, %arg10: memref<1x1x32xf32, #tpu.memory_space<vmem>>, %arg11: memref<1x32x32xf32, #tpu.memory_space<vmem>>, %arg12: memref<1x1x32xf32, #tpu.memory_space<vmem>>, %arg13: memref<1x1x32xf32, #tpu.memory_space<vmem>>, %arg14: memref<1x1x32xf32, #tpu.memory_space<vmem>>, %arg15: memref<1x32x2048xf32, #tpu.memory_space<vmem>>, %arg16: memref<1x1x2048xf32, #tpu.memory_space<vmem>>, %arg17: memref<1x2048x32xf32, #tpu.memory_space<vmem>>, %arg18: memref<1x1x32xf32, #tpu.memory_space<vmem>>, %arg19: memref<1x1x32xf32, #tpu.memory_space<vmem>>, %arg20: memref<1x1x32xf32, #tpu.memory_space<vmem>>, %arg21: memref<32x3xf32, #tpu.memory_space<vmem>>, %arg22: memref<1x3xf32, #tpu.memory_space<vmem>>, %arg23: memref<2x3xf32, #tpu.memory_space<vmem>>, %arg24: memref<16x32xf32, #tpu.memory_space<vmem>>) attributes {dimension_semantics = [#tpu.dimension_semantics<arbitrary>], iteration_bounds = array<i64: 2>, scalar_prefetch = 0 : i64, scratch_operands = 1 : i64, tpu.core_type = #tpu.core_type<tc>, window_params = [{pipeline_mode = #tpu.pipeline_mode<synchronous>, transform_indices = @transform_0, window_bounds = array<i64: 16, 4>}, {pipeline_mode = #tpu.pipeline_mode<synchronous>, transform_indices = @transform_1, window_bounds = array<i64: 4, 32>}, {pipeline_mode = #tpu.pipeline_mode<synchronous>, transform_indices = @transform_2, window_bounds = array<i64: 8, 32>}, {pipeline_mode = #tpu.pipeline_mode<synchronous>, transform_indices = @transform_3, window_bounds = array<i64: 8, 32>}, {transform_indices = @transform_4, window_bounds = array<i64: 1, 32, 32>}, {transform_indices = @transform_5, window_bounds = array<i64: 1, 1, 32>}, {transform_indices = @transform_6, window_bounds = array<i64: 1, 32, 32>}, {transform_indices = @transform_7, window_bounds = array<i64: 1, 1, 32>}, {transform_indices = @transform_8, window_bounds = array<i64: 1, 32, 32>}, {transform_indices = @transform_9, window_bounds = array<i64: 1, 1, 32>}, {transform_indices = @transform_10, window_bounds = array<i64: 1, 32, 32>}, {transform_indices = @transform_11, window_bounds = array<i64: 1, 1, 32>}, {transform_indices = @transform_12, window_bounds = array<i64: 1, 1, 32>}, {transform_indices = @transform_13, window_bounds = array<i64: 1, 1, 32>}, {transform_indices = @transform_14, window_bounds = array<i64: 1, 32, 2048>}, {transform_indices = @transform_15, window_bounds = array<i64: 1, 1, 2048>}, {transform_indices = @transform_16, window_bounds = array<i64: 1, 2048, 32>}, {transform_indices = @transform_17, window_bounds = array<i64: 1, 1, 32>}, {transform_indices = @transform_18, window_bounds = array<i64: 1, 1, 32>}, {transform_indices = @transform_19, window_bounds = array<i64: 1, 1, 32>}, {pipeline_mode = #tpu.pipeline_mode<synchronous>, transform_indices = @transform_20, window_bounds = array<i64: 32, 3>}, {pipeline_mode = #tpu.pipeline_mode<synchronous>, transform_indices = @transform_21, window_bounds = array<i64: 1, 3>}, {pipeline_mode = #tpu.pipeline_mode<synchronous>, transform_indices = @transform_22, window_bounds = array<i64: 2, 3>}]} {
    %c0_i32 = arith.constant 0 : i32
    %0 = arith.cmpi eq, %arg0, %c0_i32 : i32
    %1 = arith.extui %0 : i1 to i32
    %c0_i32_0 = arith.constant 0 : i32
    %2 = arith.cmpi ne, %1, %c0_i32_0 : i32
    scf.if %2 {
      %c0_109 = arith.constant 0 : index
      %c0_110 = arith.constant 0 : index
      %237 = vector.load %arg1[%c0_109, %c0_110] : memref<16x4xf32, #tpu.memory_space<vmem>>, vector<16x4xf32>
      %c0_111 = arith.constant 0 : index
      %c0_112 = arith.constant 0 : index
      %238 = vector.load %arg2[%c0_111, %c0_112] : memref<4x32xf32, #tpu.memory_space<vmem>>, vector<4x32xf32>
      %cst_113 = arith.constant dense<0.000000e+00> : vector<16x32xf32>
      %239 = tpu.matmul %237, %238, %cst_113 {dimension_numbers = #tpu.dot_dimension_numbers<[1], [0], [0], [1], [0, 0, 1, 1], [], []>} : vector<16x4xf32>, vector<4x32xf32>, vector<16x32xf32> -> vector<16x32xf32>
      %c0_114 = arith.constant 0 : index
      %c0_115 = arith.constant 0 : index
      %240 = vector.load %arg3[%c0_114, %c0_115] : memref<8x32xf32, #tpu.memory_space<vmem>>, vector<8x32xf32>
      %241 = tpu.concatenate %240, %240 in 0 : vector<8x32xf32>, vector<8x32xf32> -> vector<16x32xf32>
      %c0_116 = arith.constant 0 : index
      %c0_117 = arith.constant 0 : index
      %242 = vector.load %arg4[%c0_116, %c0_117] : memref<8x32xf32, #tpu.memory_space<vmem>>, vector<8x32xf32>
      %243 = tpu.concatenate %242, %242 in 0 : vector<8x32xf32>, vector<8x32xf32> -> vector<16x32xf32>
      %244 = arith.mulf %239, %241 : vector<16x32xf32>
      %245 = arith.addf %244, %243 : vector<16x32xf32>
      %c0_118 = arith.constant 0 : index
      %c0_119 = arith.constant 0 : index
      %246 = vector.load %arg24[%c0_118, %c0_119] : memref<16x32xf32, #tpu.memory_space<vmem>>, vector<16x32xf32>
      tpu.vector_store %arg24[%c0_118, %c0_119], %245 {strides = array<i32>} : memref<16x32xf32, #tpu.memory_space<vmem>>, vector<16x32xf32>,
    } else {
    }
    %c0 = arith.constant 0 : index
    %c0_1 = arith.constant 0 : index
    %3 = vector.load %arg24[%c0, %c0_1] : memref<16x32xf32, #tpu.memory_space<vmem>>, vector<16x32xf32>
    %c0_2 = arith.constant 0 : index
    %c0_3 = arith.constant 0 : index
    %c0_4 = arith.constant 0 : index
    %4 = vector.load %arg5[%c0_2, %c0_3, %c0_4] : memref<1x32x32xf32, #tpu.memory_space<vmem>>, vector<1x32x32xf32>
    %5 = vector.shape_cast %4 : vector<1x32x32xf32> to vector<32x32xf32>
    %cst = arith.constant dense<0.000000e+00> : vector<16x32xf32>
    %6 = tpu.matmul %3, %5, %cst {dimension_numbers = #tpu.dot_dimension_numbers<[1], [0], [0], [1], [0, 0, 1, 1], [], []>} : vector<16x32xf32>, vector<32x32xf32>, vector<16x32xf32> -> vector<16x32xf32>
    %c0_5 = arith.constant 0 : index
    %c0_6 = arith.constant 0 : index
    %c0_7 = arith.constant 0 : index
    %7 = vector.load %arg6[%c0_5, %c0_6, %c0_7] : memref<1x1x32xf32, #tpu.memory_space<vmem>>, vector<1x1x32xf32>
    %8 = vector.shape_cast %7 : vector<1x1x32xf32> to vector<1x32xf32>
    %9 = vector.broadcast %8 : vector<1x32xf32> to vector<16x32xf32>
    %10 = arith.addf %6, %9 : vector<16x32xf32>
    %c0_8 = arith.constant 0 : index
    %c0_9 = arith.constant 0 : index
    %c0_10 = arith.constant 0 : index
    %11 = vector.load %arg7[%c0_8, %c0_9, %c0_10] : memref<1x32x32xf32, #tpu.memory_space<vmem>>, vector<1x32x32xf32>
    %12 = vector.shape_cast %11 : vector<1x32x32xf32> to vector<32x32xf32>
    %cst_11 = arith.constant dense<0.000000e+00> : vector<16x32xf32>
    %13 = tpu.matmul %3, %12, %cst_11 {dimension_numbers = #tpu.dot_dimension_numbers<[1], [0], [0], [1], [0, 0, 1, 1], [], []>} : vector<16x32xf32>, vector<32x32xf32>, vector<16x32xf32> -> vector<16x32xf32>
    %c0_12 = arith.constant 0 : index
    %c0_13 = arith.constant 0 : index
    %c0_14 = arith.constant 0 : index
    %14 = vector.load %arg8[%c0_12, %c0_13, %c0_14] : memref<1x1x32xf32, #tpu.memory_space<vmem>>, vector<1x1x32xf32>
    %15 = vector.shape_cast %14 : vector<1x1x32xf32> to vector<1x32xf32>
    %16 = vector.broadcast %15 : vector<1x32xf32> to vector<16x32xf32>
    %17 = arith.addf %13, %16 : vector<16x32xf32>
    %c0_15 = arith.constant 0 : index
    %c0_16 = arith.constant 0 : index
    %c0_17 = arith.constant 0 : index
    %18 = vector.load %arg9[%c0_15, %c0_16, %c0_17] : memref<1x32x32xf32, #tpu.memory_space<vmem>>, vector<1x32x32xf32>
    %19 = vector.shape_cast %18 : vector<1x32x32xf32> to vector<32x32xf32>
    %cst_18 = arith.constant dense<0.000000e+00> : vector<16x32xf32>
    %20 = tpu.matmul %3, %19, %cst_18 {dimension_numbers = #tpu.dot_dimension_numbers<[1], [0], [0], [1], [0, 0, 1, 1], [], []>} : vector<16x32xf32>, vector<32x32xf32>, vector<16x32xf32> -> vector<16x32xf32>
    %c0_19 = arith.constant 0 : index
    %c0_20 = arith.constant 0 : index
    %c0_21 = arith.constant 0 : index
    %21 = vector.load %arg10[%c0_19, %c0_20, %c0_21] : memref<1x1x32xf32, #tpu.memory_space<vmem>>, vector<1x1x32xf32>
    %22 = vector.shape_cast %21 : vector<1x1x32xf32> to vector<1x32xf32>
    %23 = vector.broadcast %22 : vector<1x32xf32> to vector<16x32xf32>
    %24 = arith.addf %20, %23 : vector<16x32xf32>
    %25 = vector.extract_strided_slice %10 {offsets = [0, 0], sizes = [8, 8], strides = [1, 1]} : vector<16x32xf32> to vector<8x8xf32>
    %26 = vector.extract_strided_slice %17 {offsets = [0, 0], sizes = [8, 8], strides = [1, 1]} : vector<16x32xf32> to vector<8x8xf32>
    %27 = vector.extract_strided_slice %24 {offsets = [0, 0], sizes = [8, 8], strides = [1, 1]} : vector<16x32xf32> to vector<8x8xf32>
    %cst_22 = arith.constant dense<0.000000e+00> : vector<8x8xf32>
    %28 = tpu.matmul %25, %26, %cst_22 {dimension_numbers = #tpu.dot_dimension_numbers<[1], [1], [0], [0], [0, 0, 1, 0], [], []>} : vector<8x8xf32>, vector<8x8xf32>, vector<8x8xf32> -> vector<8x8xf32>
    %cst_23 = arith.constant 0.353553385 : f32
    %29 = vector.broadcast %cst_23 : f32 to vector<8x8xf32>
    %30 = arith.mulf %28, %29 : vector<8x8xf32>
    %cst_24 = arith.constant dense<0xFF800000> : vector<8xf32>
    %31 = vector.multi_reduction <maximumf>, %30, %cst_24 [1] : vector<8x8xf32> to vector<8xf32>
    %32 = vector.shape_cast %31 : vector<8xf32> to vector<8x1xf32>
    %33 = vector.broadcast %32 : vector<8x1xf32> to vector<8x8xf32>
    %34 = arith.subf %30, %33 : vector<8x8xf32>
    %35 = math.exp %34 : vector<8x8xf32>
    %cst_25 = arith.constant dense<0.000000e+00> : vector<8xf32>
    %36 = vector.multi_reduction <add>, %35, %cst_25 [1] : vector<8x8xf32> to vector<8xf32>
    %37 = vector.shape_cast %36 : vector<8xf32> to vector<8x1xf32>
    %38 = vector.broadcast %37 : vector<8x1xf32> to vector<8x8xf32>
    %39 = arith.divf %35, %38 : vector<8x8xf32>
    %cst_26 = arith.constant dense<0.000000e+00> : vector<8x8xf32>
    %40 = tpu.matmul %39, %27, %cst_26 {dimension_numbers = #tpu.dot_dimension_numbers<[1], [0], [0], [1], [0, 0, 1, 1], [], []>} : vector<8x8xf32>, vector<8x8xf32>, vector<8x8xf32> -> vector<8x8xf32>
    %41 = vector.extract_strided_slice %10 {offsets = [0, 8], sizes = [8, 8], strides = [1, 1]} : vector<16x32xf32> to vector<8x8xf32>
    %42 = vector.extract_strided_slice %17 {offsets = [0, 8], sizes = [8, 8], strides = [1, 1]} : vector<16x32xf32> to vector<8x8xf32>
    %43 = vector.extract_strided_slice %24 {offsets = [0, 8], sizes = [8, 8], strides = [1, 1]} : vector<16x32xf32> to vector<8x8xf32>
    %cst_27 = arith.constant dense<0.000000e+00> : vector<8x8xf32>
    %44 = tpu.matmul %41, %42, %cst_27 {dimension_numbers = #tpu.dot_dimension_numbers<[1], [1], [0], [0], [0, 0, 1, 0], [], []>} : vector<8x8xf32>, vector<8x8xf32>, vector<8x8xf32> -> vector<8x8xf32>
    %cst_28 = arith.constant 0.353553385 : f32
    %45 = vector.broadcast %cst_28 : f32 to vector<8x8xf32>
    %46 = arith.mulf %44, %45 : vector<8x8xf32>
    %cst_29 = arith.constant dense<0xFF800000> : vector<8xf32>
    %47 = vector.multi_reduction <maximumf>, %46, %cst_29 [1] : vector<8x8xf32> to vector<8xf32>
    %48 = vector.shape_cast %47 : vector<8xf32> to vector<8x1xf32>
    %49 = vector.broadcast %48 : vector<8x1xf32> to vector<8x8xf32>
    %50 = arith.subf %46, %49 : vector<8x8xf32>
    %51 = math.exp %50 : vector<8x8xf32>
    %cst_30 = arith.constant dense<0.000000e+00> : vector<8xf32>
    %52 = vector.multi_reduction <add>, %51, %cst_30 [1] : vector<8x8xf32> to vector<8xf32>
    %53 = vector.shape_cast %52 : vector<8xf32> to vector<8x1xf32>
    %54 = vector.broadcast %53 : vector<8x1xf32> to vector<8x8xf32>
    %55 = arith.divf %51, %54 : vector<8x8xf32>
    %cst_31 = arith.constant dense<0.000000e+00> : vector<8x8xf32>
    %56 = tpu.matmul %55, %43, %cst_31 {dimension_numbers = #tpu.dot_dimension_numbers<[1], [0], [0], [1], [0, 0, 1, 1], [], []>} : vector<8x8xf32>, vector<8x8xf32>, vector<8x8xf32> -> vector<8x8xf32>
    %57 = vector.extract_strided_slice %10 {offsets = [0, 16], sizes = [8, 8], strides = [1, 1]} : vector<16x32xf32> to vector<8x8xf32>
    %58 = vector.extract_strided_slice %17 {offsets = [0, 16], sizes = [8, 8], strides = [1, 1]} : vector<16x32xf32> to vector<8x8xf32>
    %59 = vector.extract_strided_slice %24 {offsets = [0, 16], sizes = [8, 8], strides = [1, 1]} : vector<16x32xf32> to vector<8x8xf32>
    %cst_32 = arith.constant dense<0.000000e+00> : vector<8x8xf32>
    %60 = tpu.matmul %57, %58, %cst_32 {dimension_numbers = #tpu.dot_dimension_numbers<[1], [1], [0], [0], [0, 0, 1, 0], [], []>} : vector<8x8xf32>, vector<8x8xf32>, vector<8x8xf32> -> vector<8x8xf32>
    %cst_33 = arith.constant 0.353553385 : f32
    %61 = vector.broadcast %cst_33 : f32 to vector<8x8xf32>
    %62 = arith.mulf %60, %61 : vector<8x8xf32>
    %cst_34 = arith.constant dense<0xFF800000> : vector<8xf32>
    %63 = vector.multi_reduction <maximumf>, %62, %cst_34 [1] : vector<8x8xf32> to vector<8xf32>
    %64 = vector.shape_cast %63 : vector<8xf32> to vector<8x1xf32>
    %65 = vector.broadcast %64 : vector<8x1xf32> to vector<8x8xf32>
    %66 = arith.subf %62, %65 : vector<8x8xf32>
    %67 = math.exp %66 : vector<8x8xf32>
    %cst_35 = arith.constant dense<0.000000e+00> : vector<8xf32>
    %68 = vector.multi_reduction <add>, %67, %cst_35 [1] : vector<8x8xf32> to vector<8xf32>
    %69 = vector.shape_cast %68 : vector<8xf32> to vector<8x1xf32>
    %70 = vector.broadcast %69 : vector<8x1xf32> to vector<8x8xf32>
    %71 = arith.divf %67, %70 : vector<8x8xf32>
    %cst_36 = arith.constant dense<0.000000e+00> : vector<8x8xf32>
    %72 = tpu.matmul %71, %59, %cst_36 {dimension_numbers = #tpu.dot_dimension_numbers<[1], [0], [0], [1], [0, 0, 1, 1], [], []>} : vector<8x8xf32>, vector<8x8xf32>, vector<8x8xf32> -> vector<8x8xf32>
    %73 = vector.extract_strided_slice %10 {offsets = [0, 24], sizes = [8, 8], strides = [1, 1]} : vector<16x32xf32> to vector<8x8xf32>
    %74 = vector.extract_strided_slice %17 {offsets = [0, 24], sizes = [8, 8], strides = [1, 1]} : vector<16x32xf32> to vector<8x8xf32>
    %75 = vector.extract_strided_slice %24 {offsets = [0, 24], sizes = [8, 8], strides = [1, 1]} : vector<16x32xf32> to vector<8x8xf32>
    %cst_37 = arith.constant dense<0.000000e+00> : vector<8x8xf32>
    %76 = tpu.matmul %73, %74, %cst_37 {dimension_numbers = #tpu.dot_dimension_numbers<[1], [1], [0], [0], [0, 0, 1, 0], [], []>} : vector<8x8xf32>, vector<8x8xf32>, vector<8x8xf32> -> vector<8x8xf32>
    %cst_38 = arith.constant 0.353553385 : f32
    %77 = vector.broadcast %cst_38 : f32 to vector<8x8xf32>
    %78 = arith.mulf %76, %77 : vector<8x8xf32>
    %cst_39 = arith.constant dense<0xFF800000> : vector<8xf32>
    %79 = vector.multi_reduction <maximumf>, %78, %cst_39 [1] : vector<8x8xf32> to vector<8xf32>
    %80 = vector.shape_cast %79 : vector<8xf32> to vector<8x1xf32>
    %81 = vector.broadcast %80 : vector<8x1xf32> to vector<8x8xf32>
    %82 = arith.subf %78, %81 : vector<8x8xf32>
    %83 = math.exp %82 : vector<8x8xf32>
    %cst_40 = arith.constant dense<0.000000e+00> : vector<8xf32>
    %84 = vector.multi_reduction <add>, %83, %cst_40 [1] : vector<8x8xf32> to vector<8xf32>
    %85 = vector.shape_cast %84 : vector<8xf32> to vector<8x1xf32>
    %86 = vector.broadcast %85 : vector<8x1xf32> to vector<8x8xf32>
    %87 = arith.divf %83, %86 : vector<8x8xf32>
    %cst_41 = arith.constant dense<0.000000e+00> : vector<8x8xf32>
    %88 = tpu.matmul %87, %75, %cst_41 {dimension_numbers = #tpu.dot_dimension_numbers<[1], [0], [0], [1], [0, 0, 1, 1], [], []>} : vector<8x8xf32>, vector<8x8xf32>, vector<8x8xf32> -> vector<8x8xf32>
    %89 = tpu.concatenate %40, %56, %72, %88 in 1 : vector<8x8xf32>, vector<8x8xf32>, vector<8x8xf32>, vector<8x8xf32> -> vector<8x32xf32>
    %90 = vector.extract_strided_slice %10 {offsets = [8, 0], sizes = [8, 8], strides = [1, 1]} : vector<16x32xf32> to vector<8x8xf32>
    %91 = vector.extract_strided_slice %17 {offsets = [8, 0], sizes = [8, 8], strides = [1, 1]} : vector<16x32xf32> to vector<8x8xf32>
    %92 = vector.extract_strided_slice %24 {offsets = [8, 0], sizes = [8, 8], strides = [1, 1]} : vector<16x32xf32> to vector<8x8xf32>
    %cst_42 = arith.constant dense<0.000000e+00> : vector<8x8xf32>
    %93 = tpu.matmul %90, %91, %cst_42 {dimension_numbers = #tpu.dot_dimension_numbers<[1], [1], [0], [0], [0, 0, 1, 0], [], []>} : vector<8x8xf32>, vector<8x8xf32>, vector<8x8xf32> -> vector<8x8xf32>
    %cst_43 = arith.constant 0.353553385 : f32
    %94 = vector.broadcast %cst_43 : f32 to vector<8x8xf32>
    %95 = arith.mulf %93, %94 : vector<8x8xf32>
    %cst_44 = arith.constant dense<0xFF800000> : vector<8xf32>
    %96 = vector.multi_reduction <maximumf>, %95, %cst_44 [1] : vector<8x8xf32> to vector<8xf32>
    %97 = vector.shape_cast %96 : vector<8xf32> to vector<8x1xf32>
    %98 = vector.broadcast %97 : vector<8x1xf32> to vector<8x8xf32>
    %99 = arith.subf %95, %98 : vector<8x8xf32>
    %100 = math.exp %99 : vector<8x8xf32>
    %cst_45 = arith.constant dense<0.000000e+00> : vector<8xf32>
    %101 = vector.multi_reduction <add>, %100, %cst_45 [1] : vector<8x8xf32> to vector<8xf32>
    %102 = vector.shape_cast %101 : vector<8xf32> to vector<8x1xf32>
    %103 = vector.broadcast %102 : vector<8x1xf32> to vector<8x8xf32>
    %104 = arith.divf %100, %103 : vector<8x8xf32>
    %cst_46 = arith.constant dense<0.000000e+00> : vector<8x8xf32>
    %105 = tpu.matmul %104, %92, %cst_46 {dimension_numbers = #tpu.dot_dimension_numbers<[1], [0], [0], [1], [0, 0, 1, 1], [], []>} : vector<8x8xf32>, vector<8x8xf32>, vector<8x8xf32> -> vector<8x8xf32>
    %106 = vector.extract_strided_slice %10 {offsets = [8, 8], sizes = [8, 8], strides = [1, 1]} : vector<16x32xf32> to vector<8x8xf32>
    %107 = vector.extract_strided_slice %17 {offsets = [8, 8], sizes = [8, 8], strides = [1, 1]} : vector<16x32xf32> to vector<8x8xf32>
    %108 = vector.extract_strided_slice %24 {offsets = [8, 8], sizes = [8, 8], strides = [1, 1]} : vector<16x32xf32> to vector<8x8xf32>
    %cst_47 = arith.constant dense<0.000000e+00> : vector<8x8xf32>
    %109 = tpu.matmul %106, %107, %cst_47 {dimension_numbers = #tpu.dot_dimension_numbers<[1], [1], [0], [0], [0, 0, 1, 0], [], []>} : vector<8x8xf32>, vector<8x8xf32>, vector<8x8xf32> -> vector<8x8xf32>
    %cst_48 = arith.constant 0.353553385 : f32
    %110 = vector.broadcast %cst_48 : f32 to vector<8x8xf32>
    %111 = arith.mulf %109, %110 : vector<8x8xf32>
    %cst_49 = arith.constant dense<0xFF800000> : vector<8xf32>
    %112 = vector.multi_reduction <maximumf>, %111, %cst_49 [1] : vector<8x8xf32> to vector<8xf32>
    %113 = vector.shape_cast %112 : vector<8xf32> to vector<8x1xf32>
    %114 = vector.broadcast %113 : vector<8x1xf32> to vector<8x8xf32>
    %115 = arith.subf %111, %114 : vector<8x8xf32>
    %116 = math.exp %115 : vector<8x8xf32>
    %cst_50 = arith.constant dense<0.000000e+00> : vector<8xf32>
    %117 = vector.multi_reduction <add>, %116, %cst_50 [1] : vector<8x8xf32> to vector<8xf32>
    %118 = vector.shape_cast %117 : vector<8xf32> to vector<8x1xf32>
    %119 = vector.broadcast %118 : vector<8x1xf32> to vector<8x8xf32>
    %120 = arith.divf %116, %119 : vector<8x8xf32>
    %cst_51 = arith.constant dense<0.000000e+00> : vector<8x8xf32>
    %121 = tpu.matmul %120, %108, %cst_51 {dimension_numbers = #tpu.dot_dimension_numbers<[1], [0], [0], [1], [0, 0, 1, 1], [], []>} : vector<8x8xf32>, vector<8x8xf32>, vector<8x8xf32> -> vector<8x8xf32>
    %122 = vector.extract_strided_slice %10 {offsets = [8, 16], sizes = [8, 8], strides = [1, 1]} : vector<16x32xf32> to vector<8x8xf32>
    %123 = vector.extract_strided_slice %17 {offsets = [8, 16], sizes = [8, 8], strides = [1, 1]} : vector<16x32xf32> to vector<8x8xf32>
    %124 = vector.extract_strided_slice %24 {offsets = [8, 16], sizes = [8, 8], strides = [1, 1]} : vector<16x32xf32> to vector<8x8xf32>
    %cst_52 = arith.constant dense<0.000000e+00> : vector<8x8xf32>
    %125 = tpu.matmul %122, %123, %cst_52 {dimension_numbers = #tpu.dot_dimension_numbers<[1], [1], [0], [0], [0, 0, 1, 0], [], []>} : vector<8x8xf32>, vector<8x8xf32>, vector<8x8xf32> -> vector<8x8xf32>
    %cst_53 = arith.constant 0.353553385 : f32
    %126 = vector.broadcast %cst_53 : f32 to vector<8x8xf32>
    %127 = arith.mulf %125, %126 : vector<8x8xf32>
    %cst_54 = arith.constant dense<0xFF800000> : vector<8xf32>
    %128 = vector.multi_reduction <maximumf>, %127, %cst_54 [1] : vector<8x8xf32> to vector<8xf32>
    %129 = vector.shape_cast %128 : vector<8xf32> to vector<8x1xf32>
    %130 = vector.broadcast %129 : vector<8x1xf32> to vector<8x8xf32>
    %131 = arith.subf %127, %130 : vector<8x8xf32>
    %132 = math.exp %131 : vector<8x8xf32>
    %cst_55 = arith.constant dense<0.000000e+00> : vector<8xf32>
    %133 = vector.multi_reduction <add>, %132, %cst_55 [1] : vector<8x8xf32> to vector<8xf32>
    %134 = vector.shape_cast %133 : vector<8xf32> to vector<8x1xf32>
    %135 = vector.broadcast %134 : vector<8x1xf32> to vector<8x8xf32>
    %136 = arith.divf %132, %135 : vector<8x8xf32>
    %cst_56 = arith.constant dense<0.000000e+00> : vector<8x8xf32>
    %137 = tpu.matmul %136, %124, %cst_56 {dimension_numbers = #tpu.dot_dimension_numbers<[1], [0], [0], [1], [0, 0, 1, 1], [], []>} : vector<8x8xf32>, vector<8x8xf32>, vector<8x8xf32> -> vector<8x8xf32>
    %138 = vector.extract_strided_slice %10 {offsets = [8, 24], sizes = [8, 8], strides = [1, 1]} : vector<16x32xf32> to vector<8x8xf32>
    %139 = vector.extract_strided_slice %17 {offsets = [8, 24], sizes = [8, 8], strides = [1, 1]} : vector<16x32xf32> to vector<8x8xf32>
    %140 = vector.extract_strided_slice %24 {offsets = [8, 24], sizes = [8, 8], strides = [1, 1]} : vector<16x32xf32> to vector<8x8xf32>
    %cst_57 = arith.constant dense<0.000000e+00> : vector<8x8xf32>
    %141 = tpu.matmul %138, %139, %cst_57 {dimension_numbers = #tpu.dot_dimension_numbers<[1], [1], [0], [0], [0, 0, 1, 0], [], []>} : vector<8x8xf32>, vector<8x8xf32>, vector<8x8xf32> -> vector<8x8xf32>
    %cst_58 = arith.constant 0.353553385 : f32
    %142 = vector.broadcast %cst_58 : f32 to vector<8x8xf32>
    %143 = arith.mulf %141, %142 : vector<8x8xf32>
    %cst_59 = arith.constant dense<0xFF800000> : vector<8xf32>
    %144 = vector.multi_reduction <maximumf>, %143, %cst_59 [1] : vector<8x8xf32> to vector<8xf32>
    %145 = vector.shape_cast %144 : vector<8xf32> to vector<8x1xf32>
    %146 = vector.broadcast %145 : vector<8x1xf32> to vector<8x8xf32>
    %147 = arith.subf %143, %146 : vector<8x8xf32>
    %148 = math.exp %147 : vector<8x8xf32>
    %cst_60 = arith.constant dense<0.000000e+00> : vector<8xf32>
    %149 = vector.multi_reduction <add>, %148, %cst_60 [1] : vector<8x8xf32> to vector<8xf32>
    %150 = vector.shape_cast %149 : vector<8xf32> to vector<8x1xf32>
    %151 = vector.broadcast %150 : vector<8x1xf32> to vector<8x8xf32>
    %152 = arith.divf %148, %151 : vector<8x8xf32>
    %cst_61 = arith.constant dense<0.000000e+00> : vector<8x8xf32>
    %153 = tpu.matmul %152, %140, %cst_61 {dimension_numbers = #tpu.dot_dimension_numbers<[1], [0], [0], [1], [0, 0, 1, 1], [], []>} : vector<8x8xf32>, vector<8x8xf32>, vector<8x8xf32> -> vector<8x8xf32>
    %154 = tpu.concatenate %105, %121, %137, %153 in 1 : vector<8x8xf32>, vector<8x8xf32>, vector<8x8xf32>, vector<8x8xf32> -> vector<8x32xf32>
    %155 = tpu.concatenate %89, %154 in 0 : vector<8x32xf32>, vector<8x32xf32> -> vector<16x32xf32>
    %c0_62 = arith.constant 0 : index
    %c0_63 = arith.constant 0 : index
    %c0_64 = arith.constant 0 : index
    %156 = vector.load %arg11[%c0_62, %c0_63, %c0_64] : memref<1x32x32xf32, #tpu.memory_space<vmem>>, vector<1x32x32xf32>
    %157 = vector.shape_cast %156 : vector<1x32x32xf32> to vector<32x32xf32>
    %cst_65 = arith.constant dense<0.000000e+00> : vector<16x32xf32>
    %158 = tpu.matmul %155, %157, %cst_65 {dimension_numbers = #tpu.dot_dimension_numbers<[1], [0], [0], [1], [0, 0, 1, 1], [], []>} : vector<16x32xf32>, vector<32x32xf32>, vector<16x32xf32> -> vector<16x32xf32>
    %c0_66 = arith.constant 0 : index
    %c0_67 = arith.constant 0 : index
    %c0_68 = arith.constant 0 : index
    %159 = vector.load %arg12[%c0_66, %c0_67, %c0_68] : memref<1x1x32xf32, #tpu.memory_space<vmem>>, vector<1x1x32xf32>
    %160 = vector.shape_cast %159 : vector<1x1x32xf32> to vector<1x32xf32>
    %161 = vector.broadcast %160 : vector<1x32xf32> to vector<16x32xf32>
    %162 = arith.addf %158, %161 : vector<16x32xf32>
    %163 = arith.addf %3, %162 : vector<16x32xf32>
    %cst_69 = arith.constant dense<0.000000e+00> : vector<16xf32>
    %164 = vector.multi_reduction <add>, %163, %cst_69 [1] : vector<16x32xf32> to vector<16xf32>
    %165 = vector.shape_cast %164 : vector<16xf32> to vector<16x1xf32>
    %cst_70 = arith.constant 3.200000e+01 : f32
    %166 = vector.broadcast %cst_70 : f32 to vector<16x1xf32>
    %167 = arith.divf %165, %166 : vector<16x1xf32>
    %168 = vector.broadcast %167 : vector<16x1xf32> to vector<16x32xf32>
    %169 = arith.subf %163, %168 : vector<16x32xf32>
    %170 = arith.mulf %169, %169 : vector<16x32xf32>
    %cst_71 = arith.constant dense<0.000000e+00> : vector<16xf32>
    %171 = vector.multi_reduction <add>, %170, %cst_71 [1] : vector<16x32xf32> to vector<16xf32>
    %172 = vector.shape_cast %171 : vector<16xf32> to vector<16x1xf32>
    %cst_72 = arith.constant 3.200000e+01 : f32
    %173 = vector.broadcast %cst_72 : f32 to vector<16x1xf32>
    %174 = arith.divf %172, %173 : vector<16x1xf32>
    %175 = vector.broadcast %167 : vector<16x1xf32> to vector<16x32xf32>
    %176 = arith.subf %163, %175 : vector<16x32xf32>
    %cst_73 = arith.constant 9.99999974E-6 : f32
    %177 = vector.broadcast %cst_73 : f32 to vector<16x1xf32>
    %178 = arith.addf %174, %177 : vector<16x1xf32>
    %179 = math.rsqrt %178 : vector<16x1xf32>
    %180 = vector.broadcast %179 : vector<16x1xf32> to vector<16x32xf32>
    %181 = arith.mulf %176, %180 : vector<16x32xf32>
    %c0_74 = arith.constant 0 : index
    %c0_75 = arith.constant 0 : index
    %c0_76 = arith.constant 0 : index
    %182 = vector.load %arg13[%c0_74, %c0_75, %c0_76] : memref<1x1x32xf32, #tpu.memory_space<vmem>>, vector<1x1x32xf32>
    %183 = vector.shape_cast %182 : vector<1x1x32xf32> to vector<1x32xf32>
    %184 = vector.broadcast %183 : vector<1x32xf32> to vector<16x32xf32>
    %185 = arith.mulf %181, %184 : vector<16x32xf32>
    %c0_77 = arith.constant 0 : index
    %c0_78 = arith.constant 0 : index
    %c0_79 = arith.constant 0 : index
    %186 = vector.load %arg14[%c0_77, %c0_78, %c0_79] : memref<1x1x32xf32, #tpu.memory_space<vmem>>, vector<1x1x32xf32>
    %187 = vector.shape_cast %186 : vector<1x1x32xf32> to vector<1x32xf32>
    %188 = vector.broadcast %187 : vector<1x32xf32> to vector<16x32xf32>
    %189 = arith.addf %185, %188 : vector<16x32xf32>
    %c0_80 = arith.constant 0 : index
    %c0_81 = arith.constant 0 : index
    %c0_82 = arith.constant 0 : index
    %190 = vector.load %arg15[%c0_80, %c0_81, %c0_82] : memref<1x32x2048xf32, #tpu.memory_space<vmem>>, vector<1x32x2048xf32>
    %191 = vector.shape_cast %190 : vector<1x32x2048xf32> to vector<32x2048xf32>
    %cst_83 = arith.constant dense<0.000000e+00> : vector<16x2048xf32>
    %192 = tpu.matmul %189, %191, %cst_83 {dimension_numbers = #tpu.dot_dimension_numbers<[1], [0], [0], [1], [0, 0, 1, 1], [], []>} : vector<16x32xf32>, vector<32x2048xf32>, vector<16x2048xf32> -> vector<16x2048xf32>
    %c0_84 = arith.constant 0 : index
    %c0_85 = arith.constant 0 : index
    %c0_86 = arith.constant 0 : index
    %193 = vector.load %arg16[%c0_84, %c0_85, %c0_86] : memref<1x1x2048xf32, #tpu.memory_space<vmem>>, vector<1x1x2048xf32>
    %194 = vector.shape_cast %193 : vector<1x1x2048xf32> to vector<1x2048xf32>
    %195 = vector.broadcast %194 : vector<1x2048xf32> to vector<16x2048xf32>
    %196 = arith.addf %192, %195 : vector<16x2048xf32>
    %cst_87 = arith.constant 0.000000e+00 : f32
    %197 = vector.broadcast %cst_87 : f32 to vector<16x2048xf32>
    %198 = arith.maximumf %196, %197 : vector<16x2048xf32>
    %c0_88 = arith.constant 0 : index
    %c0_89 = arith.constant 0 : index
    %c0_90 = arith.constant 0 : index
    %199 = vector.load %arg17[%c0_88, %c0_89, %c0_90] : memref<1x2048x32xf32, #tpu.memory_space<vmem>>, vector<1x2048x32xf32>
    %200 = vector.shape_cast %199 : vector<1x2048x32xf32> to vector<2048x32xf32>
    %cst_91 = arith.constant dense<0.000000e+00> : vector<16x32xf32>
    %201 = tpu.matmul %198, %200, %cst_91 {dimension_numbers = #tpu.dot_dimension_numbers<[1], [0], [0], [1], [0, 0, 1, 1], [], []>} : vector<16x2048xf32>, vector<2048x32xf32>, vector<16x32xf32> -> vector<16x32xf32>
    %c0_92 = arith.constant 0 : index
    %c0_93 = arith.constant 0 : index
    %c0_94 = arith.constant 0 : index
    %202 = vector.load %arg18[%c0_92, %c0_93, %c0_94] : memref<1x1x32xf32, #tpu.memory_space<vmem>>, vector<1x1x32xf32>
    %203 = vector.shape_cast %202 : vector<1x1x32xf32> to vector<1x32xf32>
    %204 = vector.broadcast %203 : vector<1x32xf32> to vector<16x32xf32>
    %205 = arith.addf %201, %204 : vector<16x32xf32>
    %206 = arith.addf %189, %205 : vector<16x32xf32>
    %cst_95 = arith.constant dense<0.000000e+00> : vector<16xf32>
    %207 = vector.multi_reduction <add>, %206, %cst_95 [1] : vector<16x32xf32> to vector<16xf32>
    %208 = vector.shape_cast %207 : vector<16xf32> to vector<16x1xf32>
    %cst_96 = arith.constant 3.200000e+01 : f32
    %209 = vector.broadcast %cst_96 : f32 to vector<16x1xf32>
    %210 = arith.divf %208, %209 : vector<16x1xf32>
    %211 = vector.broadcast %210 : vector<16x1xf32> to vector<16x32xf32>
    %212 = arith.subf %206, %211 : vector<16x32xf32>
    %213 = arith.mulf %212, %212 : vector<16x32xf32>
    %cst_97 = arith.constant dense<0.000000e+00> : vector<16xf32>
    %214 = vector.multi_reduction <add>, %213, %cst_97 [1] : vector<16x32xf32> to vector<16xf32>
    %215 = vector.shape_cast %214 : vector<16xf32> to vector<16x1xf32>
    %cst_98 = arith.constant 3.200000e+01 : f32
    %216 = vector.broadcast %cst_98 : f32 to vector<16x1xf32>
    %217 = arith.divf %215, %216 : vector<16x1xf32>
    %218 = vector.broadcast %210 : vector<16x1xf32> to vector<16x32xf32>
    %219 = arith.subf %206, %218 : vector<16x32xf32>
    %cst_99 = arith.constant 9.99999974E-6 : f32
    %220 = vector.broadcast %cst_99 : f32 to vector<16x1xf32>
    %221 = arith.addf %217, %220 : vector<16x1xf32>
    %222 = math.rsqrt %221 : vector<16x1xf32>
    %223 = vector.broadcast %222 : vector<16x1xf32> to vector<16x32xf32>
    %224 = arith.mulf %219, %223 : vector<16x32xf32>
    %c0_100 = arith.constant 0 : index
    %c0_101 = arith.constant 0 : index
    %c0_102 = arith.constant 0 : index
    %225 = vector.load %arg19[%c0_100, %c0_101, %c0_102] : memref<1x1x32xf32, #tpu.memory_space<vmem>>, vector<1x1x32xf32>
    %226 = vector.shape_cast %225 : vector<1x1x32xf32> to vector<1x32xf32>
    %227 = vector.broadcast %226 : vector<1x32xf32> to vector<16x32xf32>
    %228 = arith.mulf %224, %227 : vector<16x32xf32>
    %c0_103 = arith.constant 0 : index
    %c0_104 = arith.constant 0 : index
    %c0_105 = arith.constant 0 : index
    %229 = vector.load %arg20[%c0_103, %c0_104, %c0_105] : memref<1x1x32xf32, #tpu.memory_space<vmem>>, vector<1x1x32xf32>
    %230 = vector.shape_cast %229 : vector<1x1x32xf32> to vector<1x32xf32>
    %231 = vector.broadcast %230 : vector<1x32xf32> to vector<16x32xf32>
    %232 = arith.addf %228, %231 : vector<16x32xf32>
    %c0_106 = arith.constant 0 : index
    %c0_107 = arith.constant 0 : index
    %233 = vector.load %arg24[%c0_106, %c0_107] : memref<16x32xf32, #tpu.memory_space<vmem>>, vector<16x32xf32>
    tpu.vector_store %arg24[%c0_106, %c0_107], %232 {strides = array<i32>} : memref<16x32xf32, #tpu.memory_space<vmem>>, vector<16x32xf32>,
    %c1_i32 = arith.constant 1 : i32
    %234 = arith.cmpi eq, %arg0, %c1_i32 : i32
    %235 = arith.extui %234 : i1 to i32
    %c0_i32_108 = arith.constant 0 : i32
    %236 = arith.cmpi ne, %235, %c0_i32_108 : i32
    scf.if %236 {
      %237 = vector.extract_strided_slice %232 {offsets = [7, 0], sizes = [1, 32], strides = [1, 1]} : vector<16x32xf32> to vector<1x32xf32>
      %238 = vector.extract_strided_slice %232 {offsets = [15, 0], sizes = [1, 32], strides = [1, 1]} : vector<16x32xf32> to vector<1x32xf32>
      %239 = tpu.concatenate %237, %238 in 0 : vector<1x32xf32>, vector<1x32xf32> -> vector<2x32xf32>
      %c0_109 = arith.constant 0 : index
      %c0_110 = arith.constant 0 : index
      %240 = vector.load %arg21[%c0_109, %c0_110] : memref<32x3xf32, #tpu.memory_space<vmem>>, vector<32x3xf32>
      %cst_111 = arith.constant dense<0.000000e+00> : vector<2x3xf32>
      %241 = tpu.matmul %239, %240, %cst_111 {dimension_numbers = #tpu.dot_dimension_numbers<[1], [0], [0], [1], [0, 0, 1, 1], [], []>} : vector<2x32xf32>, vector<32x3xf32>, vector<2x3xf32> -> vector<2x3xf32>
      %c0_112 = arith.constant 0 : index
      %c0_113 = arith.constant 0 : index
      %242 = vector.load %arg22[%c0_112, %c0_113] : memref<1x3xf32, #tpu.memory_space<vmem>>, vector<1x3xf32>
      %243 = vector.broadcast %242 : vector<1x3xf32> to vector<2x3xf32>
      %244 = arith.addf %241, %243 : vector<2x3xf32>
      %cst_114 = arith.constant 2.000000e+01 : f32
      %245 = vector.broadcast %cst_114 : f32 to vector<2x3xf32>
      %246 = arith.minimumf %244, %245 : vector<2x3xf32>
      %cst_115 = arith.constant 2.000000e+01 : f32
      %247 = vector.broadcast %cst_115 : f32 to vector<2x3xf32>
      %248 = arith.cmpf ogt, %244, %247 : vector<2x3xf32>
      %249 = math.exp %246 : vector<2x3xf32>
      %cst_116 = arith.constant 1.000000e+00 : f32
      %250 = vector.broadcast %cst_116 : f32 to vector<2x3xf32>
      %251 = arith.addf %250, %249 : vector<2x3xf32>
      %252 = math.log %251 : vector<2x3xf32>
      %253 = arith.select %248, %244, %252 : vector<2x3xi1>, vector<2x3xf32>
      %c0_117 = arith.constant 0 : index
      %c0_118 = arith.constant 0 : index
      %254 = vector.load %arg23[%c0_117, %c0_118] : memref<2x3xf32, #tpu.memory_space<vmem>>, vector<2x3xf32>
      tpu.vector_store %arg23[%c0_117, %c0_118], %253 {strides = array<i32>} : memref<2x3xf32, #tpu.memory_space<vmem>>, vector<2x3xf32>,
    } else {
    }
    return
  }
  func.func @transform_0(%arg0: i32) -> (i32, i32) {
    %c0_i32 = arith.constant 0 : i32
    %c0_i32_0 = arith.constant 0 : i32
    %c0_i32_1 = arith.constant 0 : i32
    return %c0_i32, %c0_i32_0 : i32, i32
  }
  func.func @transform_1(%arg0: i32) -> (i32, i32) {
    %c0_i32 = arith.constant 0 : i32
    %c0_i32_0 = arith.constant 0 : i32
    %c0_i32_1 = arith.constant 0 : i32
    return %c0_i32, %c0_i32_0 : i32, i32
  }
  func.func @transform_2(%arg0: i32) -> (i32, i32) {
    %c0_i32 = arith.constant 0 : i32
    %c0_i32_0 = arith.constant 0 : i32
    %c0_i32_1 = arith.constant 0 : i32
    return %c0_i32, %c0_i32_0 : i32, i32
  }
  func.func @transform_3(%arg0: i32) -> (i32, i32) {
    %c0_i32 = arith.constant 0 : i32
    %c0_i32_0 = arith.constant 0 : i32
    %c0_i32_1 = arith.constant 0 : i32
    return %c0_i32, %c0_i32_0 : i32, i32
  }
  func.func @transform_4(%arg0: i32) -> (i32, i32, i32) {
    %c0_i32 = arith.constant 0 : i32
    %c0_i32_0 = arith.constant 0 : i32
    %c0_i32_1 = arith.constant 0 : i32
    return %arg0, %c0_i32, %c0_i32_0 : i32, i32, i32
  }
  func.func @transform_5(%arg0: i32) -> (i32, i32, i32) {
    %c0_i32 = arith.constant 0 : i32
    %c0_i32_0 = arith.constant 0 : i32
    %c0_i32_1 = arith.constant 0 : i32
    return %arg0, %c0_i32, %c0_i32_0 : i32, i32, i32
  }
  func.func @transform_6(%arg0: i32) -> (i32, i32, i32) {
    %c0_i32 = arith.constant 0 : i32
    %c0_i32_0 = arith.constant 0 : i32
    %c0_i32_1 = arith.constant 0 : i32
    return %arg0, %c0_i32, %c0_i32_0 : i32, i32, i32
  }
  func.func @transform_7(%arg0: i32) -> (i32, i32, i32) {
    %c0_i32 = arith.constant 0 : i32
    %c0_i32_0 = arith.constant 0 : i32
    %c0_i32_1 = arith.constant 0 : i32
    return %arg0, %c0_i32, %c0_i32_0 : i32, i32, i32
  }
  func.func @transform_8(%arg0: i32) -> (i32, i32, i32) {
    %c0_i32 = arith.constant 0 : i32
    %c0_i32_0 = arith.constant 0 : i32
    %c0_i32_1 = arith.constant 0 : i32
    return %arg0, %c0_i32, %c0_i32_0 : i32, i32, i32
  }
  func.func @transform_9(%arg0: i32) -> (i32, i32, i32) {
    %c0_i32 = arith.constant 0 : i32
    %c0_i32_0 = arith.constant 0 : i32
    %c0_i32_1 = arith.constant 0 : i32
    return %arg0, %c0_i32, %c0_i32_0 : i32, i32, i32
  }
  func.func @transform_10(%arg0: i32) -> (i32, i32, i32) {
    %c0_i32 = arith.constant 0 : i32
    %c0_i32_0 = arith.constant 0 : i32
    %c0_i32_1 = arith.constant 0 : i32
    return %arg0, %c0_i32, %c0_i32_0 : i32, i32, i32
  }
  func.func @transform_11(%arg0: i32) -> (i32, i32, i32) {
    %c0_i32 = arith.constant 0 : i32
    %c0_i32_0 = arith.constant 0 : i32
    %c0_i32_1 = arith.constant 0 : i32
    return %arg0, %c0_i32, %c0_i32_0 : i32, i32, i32
  }
  func.func @transform_12(%arg0: i32) -> (i32, i32, i32) {
    %c0_i32 = arith.constant 0 : i32
    %c0_i32_0 = arith.constant 0 : i32
    %c0_i32_1 = arith.constant 0 : i32
    return %arg0, %c0_i32, %c0_i32_0 : i32, i32, i32
  }
  func.func @transform_13(%arg0: i32) -> (i32, i32, i32) {
    %c0_i32 = arith.constant 0 : i32
    %c0_i32_0 = arith.constant 0 : i32
    %c0_i32_1 = arith.constant 0 : i32
    return %arg0, %c0_i32, %c0_i32_0 : i32, i32, i32
  }
  func.func @transform_14(%arg0: i32) -> (i32, i32, i32) {
    %c0_i32 = arith.constant 0 : i32
    %c0_i32_0 = arith.constant 0 : i32
    %c0_i32_1 = arith.constant 0 : i32
    return %arg0, %c0_i32, %c0_i32_0 : i32, i32, i32
  }
  func.func @transform_15(%arg0: i32) -> (i32, i32, i32) {
    %c0_i32 = arith.constant 0 : i32
    %c0_i32_0 = arith.constant 0 : i32
    %c0_i32_1 = arith.constant 0 : i32
    return %arg0, %c0_i32, %c0_i32_0 : i32, i32, i32
  }
  func.func @transform_16(%arg0: i32) -> (i32, i32, i32) {
    %c0_i32 = arith.constant 0 : i32
    %c0_i32_0 = arith.constant 0 : i32
    %c0_i32_1 = arith.constant 0 : i32
    return %arg0, %c0_i32, %c0_i32_0 : i32, i32, i32
  }
  func.func @transform_17(%arg0: i32) -> (i32, i32, i32) {
    %c0_i32 = arith.constant 0 : i32
    %c0_i32_0 = arith.constant 0 : i32
    %c0_i32_1 = arith.constant 0 : i32
    return %arg0, %c0_i32, %c0_i32_0 : i32, i32, i32
  }
  func.func @transform_18(%arg0: i32) -> (i32, i32, i32) {
    %c0_i32 = arith.constant 0 : i32
    %c0_i32_0 = arith.constant 0 : i32
    %c0_i32_1 = arith.constant 0 : i32
    return %arg0, %c0_i32, %c0_i32_0 : i32, i32, i32
  }
  func.func @transform_19(%arg0: i32) -> (i32, i32, i32) {
    %c0_i32 = arith.constant 0 : i32
    %c0_i32_0 = arith.constant 0 : i32
    %c0_i32_1 = arith.constant 0 : i32
    return %arg0, %c0_i32, %c0_i32_0 : i32, i32, i32
  }
  func.func @transform_20(%arg0: i32) -> (i32, i32) {
    %c0_i32 = arith.constant 0 : i32
    %c0_i32_0 = arith.constant 0 : i32
    %c0_i32_1 = arith.constant 0 : i32
    return %c0_i32, %c0_i32_0 : i32, i32
  }
  func.func @transform_21(%arg0: i32) -> (i32, i32) {
    %c0_i32 = arith.constant 0 : i32
    %c0_i32_0 = arith.constant 0 : i32
    %c0_i32_1 = arith.constant 0 : i32
    return %c0_i32, %c0_i32_0 : i32, i32
  }
  func.func @transform_22(%arg0: i32) -> (i32, i32) {
    %c0_i32 = arith.constant 0 : i32
    %c0_i32_0 = arith.constant 0 : i32
    %c0_i32_1 = arith.constant 0 : i32
    return %c0_i32, %c0_i32_0 : i32, i32
  }
}

</mosaic_0001>

<llo_original>
// kernel: forward.1
$region0: #{forward.1}
  #allocation0 [shape = 'u32[]', space=smem, size = 0x4, offset = 0x4, fixed_abs, tag = 'smem constant byte address 0x4 - core index']
  #allocation1 [shape = 'u32[144,128]{1,0:T(1,128)}', space=vmem, size = 0x12000, scoped, tag = 'internal scratch']
  #allocation2 [shape = 'f32[16,32]{1,0:T(8,128)}', space=vmem, size = 0x2000, scoped, tag = 'scratch operand']
  %s0 = inlined_call_operand.vmem [shape: f32[16,4], index: 0, kind: input, shape index: {}]
  %s1 = inlined_call_operand.vmem [shape: f32[4,32], index: 1, kind: input, shape index: {}]
  %s2 = inlined_call_operand.vmem [shape: f32[8,32], index: 2, kind: input, shape index: {}]
  %s3 = inlined_call_operand.vmem [shape: f32[8,32], index: 3, kind: input, shape index: {}]
  %s4 = inlined_call_operand.vmem [shape: f32[2,32,32], index: 4, kind: input, shape index: {}]
  %s5 = inlined_call_operand.vmem [shape: f32[2,1,32], index: 5, kind: input, shape index: {}]
  %s6 = inlined_call_operand.vmem [shape: f32[2,32,32], index: 6, kind: input, shape index: {}]
  %s7 = inlined_call_operand.vmem [shape: f32[2,1,32], index: 7, kind: input, shape index: {}]
  %s8 = inlined_call_operand.vmem [shape: f32[2,32,32], index: 8, kind: input, shape index: {}]
  %s9 = inlined_call_operand.vmem [shape: f32[2,1,32], index: 9, kind: input, shape index: {}]
  %s10 = inlined_call_operand.vmem [shape: f32[2,32,32], index: 10, kind: input, shape index: {}]
  %s11 = inlined_call_operand.vmem [shape: f32[2,1,32], index: 11, kind: input, shape index: {}]
  %s12 = inlined_call_operand.vmem [shape: f32[2,1,32], index: 12, kind: input, shape index: {}]
  %s13 = inlined_call_operand.vmem [shape: f32[2,1,32], index: 13, kind: input, shape index: {}]
  %s14 = inlined_call_operand.vmem [shape: f32[2,32,2048], index: 14, kind: input, shape index: {}]
  %s15 = inlined_call_operand.vmem [shape: f32[2,1,2048], index: 15, kind: input, shape index: {}]
  %s16 = inlined_call_operand.vmem [shape: f32[2,2048,32], index: 16, kind: input, shape index: {}]
  %s17 = inlined_call_operand.vmem [shape: f32[2,1,32], index: 17, kind: input, shape index: {}]
  %s18 = inlined_call_operand.vmem [shape: f32[2,1,32], index: 18, kind: input, shape index: {}]
  %s19 = inlined_call_operand.vmem [shape: f32[2,1,32], index: 19, kind: input, shape index: {}]
  %s20 = inlined_call_operand.vmem [shape: f32[32,3], index: 20, kind: input, shape index: {}]
  %s21 = inlined_call_operand.vmem [shape: f32[1,3], index: 21, kind: input, shape index: {}]
  %s22 = inlined_call_operand.hbm [shape: f32[2,3], index: 22, kind: output, shape index: {}]
  %s23 = sld [smem:[#allocation0]]
  $region129: #{forward.1} parent=0
    _
  %s25 = ssub.s32 1, %s23
  %s26 = scalar_select 0, %s25, %s23
  $region1: #{forward.1} parent=0
    #allocation3 [shape = 'u8[1024]{0}', space=vmem, size = 0x400, scoped, tag = 'output window, operand 0, single buffered']
    #allocation4 [shape = 's32[2]{0}', space=sflag, size = 0x8, scoped, tag = 'scoped memory for forward.1']
    %27 = vsyncpa [#allocation4], 0
    loop: start=0, step=1, limit=4
    $region2: #{forward.1} parent=1 // loop_pre_header
      _
    $region3: #{forward.1} parent=1 // loop_header
      %s29 = sphi 0, %s33
      %p30 = scmp.ge.s32.totalorder %s29, 4
      %s37 = sphi 0, %s37
      %s39 = sphi 0, %s37
      %s40 = sphi 0, %s39
      %s54 = sphi 0, %s40
      %s58 = sphi 0, %s58
      %s60 = sphi 0, %s58
      %s61 = sphi 0, %s60
      %s75 = sphi 0, %s61
      %s79 = sphi 0, %s79
      %s81 = sphi 0, %s79
      %s82 = sphi 0, %s81
      %s96 = sphi 0, %s82
      %s100 = sphi 0, %s100
      %s102 = sphi 0, %s100
      %s103 = sphi 0, %s102
      %s117 = sphi 0, %s103
      %s123 = sphi 0, %s125
      %s126 = sphi 0, %s123
      %s127 = sphi 0, %s126
      %s143 = sphi 0, %s127
      %s149 = sphi 0, %s151
      %s152 = sphi 0, %s149
      %s153 = sphi 0, %s152
      %s169 = sphi 0, %s153
      %s175 = sphi 0, %s177
      %s178 = sphi 0, %s175
      %s179 = sphi 0, %s178
      %s195 = sphi 0, %s179
      %s201 = sphi 0, %s203
      %s204 = sphi 0, %s201
      %s205 = sphi 0, %s204
      %s221 = sphi 0, %s205
      %s227 = sphi 0, %s229
      %s230 = sphi 0, %s227
      %s231 = sphi 0, %s230
      %s247 = sphi 0, %s231
      %s253 = sphi 0, %s255
      %s256 = sphi 0, %s253
      %s257 = sphi 0, %s256
      %s273 = sphi 0, %s257
      %s279 = sphi 0, %s281
      %s282 = sphi 0, %s279
      %s283 = sphi 0, %s282
      %s299 = sphi 0, %s283
      %s305 = sphi 0, %s307
      %s308 = sphi 0, %s305
      %s309 = sphi 0, %s308
      %s325 = sphi 0, %s309
      %s331 = sphi 0, %s333
      %s334 = sphi 0, %s331
      %s335 = sphi 0, %s334
      %s351 = sphi 0, %s335
      %s357 = sphi 0, %s359
      %s360 = sphi 0, %s357
      %s361 = sphi 0, %s360
      %s377 = sphi 0, %s361
      %s383 = sphi 0, %s385
      %s386 = sphi 0, %s383
      %s387 = sphi 0, %s386
      %s403 = sphi 0, %s387
      %s409 = sphi 0, %s411
      %s412 = sphi 0, %s409
      %s413 = sphi 0, %s412
      %s429 = sphi 0, %s413
      %s435 = sphi 0, %s437
      %s438 = sphi 0, %s435
      %s439 = sphi 0, %s438
      %s455 = sphi 0, %s439
      %s461 = sphi 0, %s463
      %s464 = sphi 0, %s461
      %s465 = sphi 0, %s464
      %s481 = sphi 0, %s465
      %s487 = sphi 0, %s489
      %s490 = sphi 0, %s487
      %s491 = sphi 0, %s490
      %s507 = sphi 0, %s491
      %s513 = sphi 0, %s515
      %s516 = sphi 0, %s513
      %s517 = sphi 0, %s516
      %s533 = sphi 0, %s517
      %s537 = sphi 0, %s537
      %s539 = sphi 0, %s537
      %s540 = sphi 0, %s539
      %s554 = sphi 0, %s540
      %s558 = sphi 0, %s558
      %s560 = sphi 0, %s558
      %s561 = sphi 0, %s560
      %s575 = sphi 0, %s561
      %s579 = sphi 0, %s579
      %s581 = sphi 0, %s579
      %s582 = sphi 0, %s581
      %s596 = sphi 0, %s582
    $region4: #{forward.1} parent=1 // loop_header_branch
      %32 = sbr.rel (%p30) target = $region8
    $region5: #{forward.1} parent=1 // loop_body
      %s34 = ssub.s32 %s29, 1
      %s35 = ssub.s32 %s29, 2
      %s36 = sadd.s32 %s29, 1
      %s38 = sadd.s32 %s37, 1
      %p41 = scmp.eq.s32.totalorder %s29, 1
      %p42 = scmp.ne.s32.totalorder %s37, %s39
      %p43 = scmp.eq.s32.totalorder %s29, 0
      %p44 = por %p42, %p43
      %p45 = scmp.ne.s32.totalorder %s37, %s39
      %p46 = scmp.eq.s32.totalorder %s34, 1
      %p47 = por %p45, %p46
      %p48 = scmp.ne.s32.totalorder %s39, %s40
      %p49 = scmp.eq.s32.totalorder %s34, 0
      %p50 = por %p48, %p49
      %p51 = scmp.ne.s32.totalorder %s39, %s40
      %p52 = scmp.eq.s32.totalorder %s35, 1
      %p53 = por %p51, %p52
      %p55 = scmp.ne.s32.totalorder %s40, %s54
      %p56 = scmp.eq.s32.totalorder %s35, 0
      %p57 = por %p55, %p56
      %s59 = sadd.s32 %s58, 1
      %p62 = scmp.eq.s32.totalorder %s29, 1
      %p63 = scmp.ne.s32.totalorder %s58, %s60
      %p64 = scmp.eq.s32.totalorder %s29, 0
      %p65 = por %p63, %p64
      %p66 = scmp.ne.s32.totalorder %s58, %s60
      %p67 = scmp.eq.s32.totalorder %s34, 1
      %p68 = por %p66, %p67
      %p69 = scmp.ne.s32.totalorder %s60, %s61
      %p70 = scmp.eq.s32.totalorder %s34, 0
      %p71 = por %p69, %p70
      %p72 = scmp.ne.s32.totalorder %s60, %s61
      %p73 = scmp.eq.s32.totalorder %s35, 1
      %p74 = por %p72, %p73
      %p76 = scmp.ne.s32.totalorder %s61, %s75
      %p77 = scmp.eq.s32.totalorder %s35, 0
      %p78 = por %p76, %p77
      %s80 = sadd.s32 %s79, 1
      %p83 = scmp.eq.s32.totalorder %s29, 1
      %p84 = scmp.ne.s32.totalorder %s79, %s81
      %p85 = scmp.eq.s32.totalorder %s29, 0
      %p86 = por %p84, %p85
      %p87 = scmp.ne.s32.totalorder %s79, %s81
      %p88 = scmp.eq.s32.totalorder %s34, 1
      %p89 = por %p87, %p88
      %p90 = scmp.ne.s32.totalorder %s81, %s82
      %p91 = scmp.eq.s32.totalorder %s34, 0
      %p92 = por %p90, %p91
      %p93 = scmp.ne.s32.totalorder %s81, %s82
      %p94 = scmp.eq.s32.totalorder %s35, 1
      %p95 = por %p93, %p94
      %p97 = scmp.ne.s32.totalorder %s82, %s96
      %p98 = scmp.eq.s32.totalorder %s35, 0
      %p99 = por %p97, %p98
      %s101 = sadd.s32 %s100, 1
      %p104 = scmp.eq.s32.totalorder %s29, 1
      %p105 = scmp.ne.s32.totalorder %s100, %s102
      %p106 = scmp.eq.s32.totalorder %s29, 0
      %p107 = por %p105, %p106
      %p108 = scmp.ne.s32.totalorder %s100, %s102
      %p109 = scmp.eq.s32.totalorder %s34, 1
      %p110 = por %p108, %p109
      %p111 = scmp.ne.s32.totalorder %s102, %s103
      %p112 = scmp.eq.s32.totalorder %s34, 0
      %p113 = por %p111, %p112
      %p114 = scmp.ne.s32.totalorder %s102, %s103
      %p115 = scmp.eq.s32.totalorder %s35, 1
      %p116 = por %p114, %p115
      %p118 = scmp.ne.s32.totalorder %s103, %s117
      %p119 = scmp.eq.s32.totalorder %s35, 0
      %p120 = por %p118, %p119
      %s121 = ssub.s32 %s29, %s36
      %p122 = scmp.eq.s32.totalorder %s121, 0
      %s124 = sadd.s32 %s123, 1
      %s125 = scalar_select %p122, %s123, %s124
      %p128 = pneg %p122
      %p129 = scmp.eq.s32.totalorder %s29, 1
      %p130 = por %p128, %p129
      %p131 = scmp.ne.s32.totalorder %s123, %s126
      %p132 = scmp.eq.s32.totalorder %s29, 0
      %p133 = por %p131, %p132
      %p134 = scmp.ne.s32.totalorder %s123, %s126
      %p135 = scmp.eq.s32.totalorder %s34, 1
      %p136 = por %p134, %p135
      %p137 = scmp.ne.s32.totalorder %s126, %s127
      %p138 = scmp.eq.s32.totalorder %s34, 0
      %p139 = por %p137, %p138
      %p140 = scmp.ne.s32.totalorder %s126, %s127
      %p141 = scmp.eq.s32.totalorder %s35, 1
      %p142 = por %p140, %p141
      %p144 = scmp.ne.s32.totalorder %s127, %s143
      %p145 = scmp.eq.s32.totalorder %s35, 0
      %p146 = por %p144, %p145
      %s147 = ssub.s32 %s29, %s36
      %p148 = scmp.eq.s32.totalorder %s147, 0
      %s150 = sadd.s32 %s149, 1
      %s151 = scalar_select %p148, %s149, %s150
      %p154 = pneg %p148
      %p155 = scmp.eq.s32.totalorder %s29, 1
      %p156 = por %p154, %p155
      %p157 = scmp.ne.s32.totalorder %s149, %s152
      %p158 = scmp.eq.s32.totalorder %s29, 0
      %p159 = por %p157, %p158
      %p160 = scmp.ne.s32.totalorder %s149, %s152
      %p161 = scmp.eq.s32.totalorder %s34, 1
      %p162 = por %p160, %p161
      %p163 = scmp.ne.s32.totalorder %s152, %s153
      %p164 = scmp.eq.s32.totalorder %s34, 0
      %p165 = por %p163, %p164
      %p166 = scmp.ne.s32.totalorder %s152, %s153
      %p167 = scmp.eq.s32.totalorder %s35, 1
      %p168 = por %p166, %p167
      %p170 = scmp.ne.s32.totalorder %s153, %s169
      %p171 = scmp.eq.s32.totalorder %s35, 0
      %p172 = por %p170, %p171
      %s173 = ssub.s32 %s29, %s36
      %p174 = scmp.eq.s32.totalorder %s173, 0
      %s176 = sadd.s32 %s175, 1
      %s177 = scalar_select %p174, %s175, %s176
      %p180 = pneg %p174
      %p181 = scmp.eq.s32.totalorder %s29, 1
      %p182 = por %p180, %p181
      %p183 = scmp.ne.s32.totalorder %s175, %s178
      %p184 = scmp.eq.s32.totalorder %s29, 0
      %p185 = por %p183, %p184
      %p186 = scmp.ne.s32.totalorder %s175, %s178
      %p187 = scmp.eq.s32.totalorder %s34, 1
      %p188 = por %p186, %p187
      %p189 = scmp.ne.s32.totalorder %s178, %s179
      %p190 = scmp.eq.s32.totalorder %s34, 0
      %p191 = por %p189, %p190
      %p192 = scmp.ne.s32.totalorder %s178, %s179
      %p193 = scmp.eq.s32.totalorder %s35, 1
      %p194 = por %p192, %p193
      %p196 = scmp.ne.s32.totalorder %s179, %s195
      %p197 = scmp.eq.s32.totalorder %s35, 0
      %p198 = por %p196, %p197
      %s199 = ssub.s32 %s29, %s36
      %p200 = scmp.eq.s32.totalorder %s199, 0
      %s202 = sadd.s32 %s201, 1
      %s203 = scalar_select %p200, %s201, %s202
      %p206 = pneg %p200
      %p207 = scmp.eq.s32.totalorder %s29, 1
      %p208 = por %p206, %p207
      %p209 = scmp.ne.s32.totalorder %s201, %s204
      %p210 = scmp.eq.s32.totalorder %s29, 0
      %p211 = por %p209, %p210
      %p212 = scmp.ne.s32.totalorder %s201, %s204
      %p213 = scmp.eq.s32.totalorder %s34, 1
      %p214 = por %p212, %p213
      %p215 = scmp.ne.s32.totalorder %s204, %s205
      %p216 = scmp.eq.s32.totalorder %s34, 0
      %p217 = por %p215, %p216
      %p218 = scmp.ne.s32.totalorder %s204, %s205
      %p219 = scmp.eq.s32.totalorder %s35, 1
      %p220 = por %p218, %p219
      %p222 = scmp.ne.s32.totalorder %s205, %s221
      %p223 = scmp.eq.s32.totalorder %s35, 0
      %p224 = por %p222, %p223
      %s225 = ssub.s32 %s29, %s36
      %p226 = scmp.eq.s32.totalorder %s225, 0
      %s228 = sadd.s32 %s227, 1
      %s229 = scalar_select %p226, %s227, %s228
      %p232 = pneg %p226
      %p233 = scmp.eq.s32.totalorder %s29, 1
      %p234 = por %p232, %p233
      %p235 = scmp.ne.s32.totalorder %s227, %s230
      %p236 = scmp.eq.s32.totalorder %s29, 0
      %p237 = por %p235, %p236
      %p238 = scmp.ne.s32.totalorder %s227, %s230
      %p239 = scmp.eq.s32.totalorder %s34, 1
      %p240 = por %p238, %p239
      %p241 = scmp.ne.s32.totalorder %s230, %s231
      %p242 = scmp.eq.s32.totalorder %s34, 0
      %p243 = por %p241, %p242
      %p244 = scmp.ne.s32.totalorder %s230, %s231
      %p245 = scmp.eq.s32.totalorder %s35, 1
      %p246 = por %p244, %p245
      %p248 = scmp.ne.s32.totalorder %s231, %s247
      %p249 = scmp.eq.s32.totalorder %s35, 0
      %p250 = por %p248, %p249
      %s251 = ssub.s32 %s29, %s36
      %p252 = scmp.eq.s32.totalorder %s251, 0
      %s254 = sadd.s32 %s253, 1
      %s255 = scalar_select %p252, %s253, %s254
      %p258 = pneg %p252
      %p259 = scmp.eq.s32.totalorder %s29, 1
      %p260 = por %p258, %p259
      %p261 = scmp.ne.s32.totalorder %s253, %s256
      %p262 = scmp.eq.s32.totalorder %s29, 0
      %p263 = por %p261, %p262
      %p264 = scmp.ne.s32.totalorder %s253, %s256
      %p265 = scmp.eq.s32.totalorder %s34, 1
      %p266 = por %p264, %p265
      %p267 = scmp.ne.s32.totalorder %s256, %s257
      %p268 = scmp.eq.s32.totalorder %s34, 0
      %p269 = por %p267, %p268
      %p270 = scmp.ne.s32.totalorder %s256, %s257
      %p271 = scmp.eq.s32.totalorder %s35, 1
      %p272 = por %p270, %p271
      %p274 = scmp.ne.s32.totalorder %s257, %s273
      %p275 = scmp.eq.s32.totalorder %s35, 0
      %p276 = por %p274, %p275
      %s277 = ssub.s32 %s29, %s36
      %p278 = scmp.eq.s32.totalorder %s277, 0
      %s280 = sadd.s32 %s279, 1
      %s281 = scalar_select %p278, %s279, %s280
      %p284 = pneg %p278
      %p285 = scmp.eq.s32.totalorder %s29, 1
      %p286 = por %p284, %p285
      %p287 = scmp.ne.s32.totalorder %s279, %s282
      %p288 = scmp.eq.s32.totalorder %s29, 0
      %p289 = por %p287, %p288
      %p290 = scmp.ne.s32.totalorder %s279, %s282
      %p291 = scmp.eq.s32.totalorder %s34, 1
      %p292 = por %p290, %p291
      %p293 = scmp.ne.s32.totalorder %s282, %s283
      %p294 = scmp.eq.s32.totalorder %s34, 0
      %p295 = por %p293, %p294
      %p296 = scmp.ne.s32.totalorder %s282, %s283
      %p297 = scmp.eq.s32.totalorder %s35, 1
      %p298 = por %p296, %p297
      %p300 = scmp.ne.s32.totalorder %s283, %s299
      %p301 = scmp.eq.s32.totalorder %s35, 0
      %p302 = por %p300, %p301
      %s303 = ssub.s32 %s29, %s36
      %p304 = scmp.eq.s32.totalorder %s303, 0
      %s306 = sadd.s32 %s305, 1
      %s307 = scalar_select %p304, %s305, %s306
      %p310 = pneg %p304
      %p311 = scmp.eq.s32.totalorder %s29, 1
      %p312 = por %p310, %p311
      %p313 = scmp.ne.s32.totalorder %s305, %s308
      %p314 = scmp.eq.s32.totalorder %s29, 0
      %p315 = por %p313, %p314
      %p316 = scmp.ne.s32.totalorder %s305, %s308
      %p317 = scmp.eq.s32.totalorder %s34, 1
      %p318 = por %p316, %p317
      %p319 = scmp.ne.s32.totalorder %s308, %s309
      %p320 = scmp.eq.s32.totalorder %s34, 0
      %p321 = por %p319, %p320
      %p322 = scmp.ne.s32.totalorder %s308, %s309
      %p323 = scmp.eq.s32.totalorder %s35, 1
      %p324 = por %p322, %p323
      %p326 = scmp.ne.s32.totalorder %s309, %s325
      %p327 = scmp.eq.s32.totalorder %s35, 0
      %p328 = por %p326, %p327
      %s329 = ssub.s32 %s29, %s36
      %p330 = scmp.eq.s32.totalorder %s329, 0
      %s332 = sadd.s32 %s331, 1
      %s333 = scalar_select %p330, %s331, %s332
      %p336 = pneg %p330
      %p337 = scmp.eq.s32.totalorder %s29, 1
      %p338 = por %p336, %p337
      %p339 = scmp.ne.s32.totalorder %s331, %s334
      %p340 = scmp.eq.s32.totalorder %s29, 0
      %p341 = por %p339, %p340
      %p342 = scmp.ne.s32.totalorder %s331, %s334
      %p343 = scmp.eq.s32.totalorder %s34, 1
      %p344 = por %p342, %p343
      %p345 = scmp.ne.s32.totalorder %s334, %s335
      %p346 = scmp.eq.s32.totalorder %s34, 0
      %p347 = por %p345, %p346
      %p348 = scmp.ne.s32.totalorder %s334, %s335
      %p349 = scmp.eq.s32.totalorder %s35, 1
      %p350 = por %p348, %p349
      %p352 = scmp.ne.s32.totalorder %s335, %s351
      %p353 = scmp.eq.s32.totalorder %s35, 0
      %p354 = por %p352, %p353
      %s355 = ssub.s32 %s29, %s36
      %p356 = scmp.eq.s32.totalorder %s355, 0
      %s358 = sadd.s32 %s357, 1
      %s359 = scalar_select %p356, %s357, %s358
      %p362 = pneg %p356
      %p363 = scmp.eq.s32.totalorder %s29, 1
      %p364 = por %p362, %p363
      %p365 = scmp.ne.s32.totalorder %s357, %s360
      %p366 = scmp.eq.s32.totalorder %s29, 0
      %p367 = por %p365, %p366
      %p368 = scmp.ne.s32.totalorder %s357, %s360
      %p369 = scmp.eq.s32.totalorder %s34, 1
      %p370 = por %p368, %p369
      %p371 = scmp.ne.s32.totalorder %s360, %s361
      %p372 = scmp.eq.s32.totalorder %s34, 0
      %p373 = por %p371, %p372
      %p374 = scmp.ne.s32.totalorder %s360, %s361
      %p375 = scmp.eq.s32.totalorder %s35, 1
      %p376 = por %p374, %p375
      %p378 = scmp.ne.s32.totalorder %s361, %s377
      %p379 = scmp.eq.s32.totalorder %s35, 0
      %p380 = por %p378, %p379
      %s381 = ssub.s32 %s29, %s36
      %p382 = scmp.eq.s32.totalorder %s381, 0
      %s384 = sadd.s32 %s383, 1
      %s385 = scalar_select %p382, %s383, %s384
      %p388 = pneg %p382
      %p389 = scmp.eq.s32.totalorder %s29, 1
      %p390 = por %p388, %p389
      %p391 = scmp.ne.s32.totalorder %s383, %s386
      %p392 = scmp.eq.s32.totalorder %s29, 0
      %p393 = por %p391, %p392
      %p394 = scmp.ne.s32.totalorder %s383, %s386
      %p395 = scmp.eq.s32.totalorder %s34, 1
      %p396 = por %p394, %p395
      %p397 = scmp.ne.s32.totalorder %s386, %s387
      %p398 = scmp.eq.s32.totalorder %s34, 0
      %p399 = por %p397, %p398
      %p400 = scmp.ne.s32.totalorder %s386, %s387
      %p401 = scmp.eq.s32.totalorder %s35, 1
      %p402 = por %p400, %p401
      %p404 = scmp.ne.s32.totalorder %s387, %s403
      %p405 = scmp.eq.s32.totalorder %s35, 0
      %p406 = por %p404, %p405
      %s407 = ssub.s32 %s29, %s36
      %p408 = scmp.eq.s32.totalorder %s407, 0
      %s410 = sadd.s32 %s409, 1
      %s411 = scalar_select %p408, %s409, %s410
      %p414 = pneg %p408
      %p415 = scmp.eq.s32.totalorder %s29, 1
      %p416 = por %p414, %p415
      %p417 = scmp.ne.s32.totalorder %s409, %s412
      %p418 = scmp.eq.s32.totalorder %s29, 0
      %p419 = por %p417, %p418
      %p420 = scmp.ne.s32.totalorder %s409, %s412
      %p421 = scmp.eq.s32.totalorder %s34, 1
      %p422 = por %p420, %p421
      %p423 = scmp.ne.s32.totalorder %s412, %s413
      %p424 = scmp.eq.s32.totalorder %s34, 0
      %p425 = por %p423, %p424
      %p426 = scmp.ne.s32.totalorder %s412, %s413
      %p427 = scmp.eq.s32.totalorder %s35, 1
      %p428 = por %p426, %p427
      %p430 = scmp.ne.s32.totalorder %s413, %s429
      %p431 = scmp.eq.s32.totalorder %s35, 0
      %p432 = por %p430, %p431
      %s433 = ssub.s32 %s29, %s36
      %p434 = scmp.eq.s32.totalorder %s433, 0
      %s436 = sadd.s32 %s435, 1
      %s437 = scalar_select %p434, %s435, %s436
      %p440 = pneg %p434
      %p441 = scmp.eq.s32.totalorder %s29, 1
      %p442 = por %p440, %p441
      %p443 = scmp.ne.s32.totalorder %s435, %s438
      %p444 = scmp.eq.s32.totalorder %s29, 0
      %p445 = por %p443, %p444
      %p446 = scmp.ne.s32.totalorder %s435, %s438
      %p447 = scmp.eq.s32.totalorder %s34, 1
      %p448 = por %p446, %p447
      %p449 = scmp.ne.s32.totalorder %s438, %s439
      %p450 = scmp.eq.s32.totalorder %s34, 0
      %p451 = por %p449, %p450
      %p452 = scmp.ne.s32.totalorder %s438, %s439
      %p453 = scmp.eq.s32.totalorder %s35, 1
      %p454 = por %p452, %p453
      %p456 = scmp.ne.s32.totalorder %s439, %s455
      %p457 = scmp.eq.s32.totalorder %s35, 0
      %p458 = por %p456, %p457
      %s459 = ssub.s32 %s29, %s36
      %p460 = scmp.eq.s32.totalorder %s459, 0
      %s462 = sadd.s32 %s461, 1
      %s463 = scalar_select %p460, %s461, %s462
      %p466 = pneg %p460
      %p467 = scmp.eq.s32.totalorder %s29, 1
      %p468 = por %p466, %p467
      %p469 = scmp.ne.s32.totalorder %s461, %s464
      %p470 = scmp.eq.s32.totalorder %s29, 0
      %p471 = por %p469, %p470
      %p472 = scmp.ne.s32.totalorder %s461, %s464
      %p473 = scmp.eq.s32.totalorder %s34, 1
      %p474 = por %p472, %p473
      %p475 = scmp.ne.s32.totalorder %s464, %s465
      %p476 = scmp.eq.s32.totalorder %s34, 0
      %p477 = por %p475, %p476
      %p478 = scmp.ne.s32.totalorder %s464, %s465
      %p479 = scmp.eq.s32.totalorder %s35, 1
      %p480 = por %p478, %p479
      %p482 = scmp.ne.s32.totalorder %s465, %s481
      %p483 = scmp.eq.s32.totalorder %s35, 0
      %p484 = por %p482, %p483
      %s485 = ssub.s32 %s29, %s36
      %p486 = scmp.eq.s32.totalorder %s485, 0
      %s488 = sadd.s32 %s487, 1
      %s489 = scalar_select %p486, %s487, %s488
      %p492 = pneg %p486
      %p493 = scmp.eq.s32.totalorder %s29, 1
      %p494 = por %p492, %p493
      %p495 = scmp.ne.s32.totalorder %s487, %s490
      %p496 = scmp.eq.s32.totalorder %s29, 0
      %p497 = por %p495, %p496
      %p498 = scmp.ne.s32.totalorder %s487, %s490
      %p499 = scmp.eq.s32.totalorder %s34, 1
      %p500 = por %p498, %p499
      %p501 = scmp.ne.s32.totalorder %s490, %s491
      %p502 = scmp.eq.s32.totalorder %s34, 0
      %p503 = por %p501, %p502
      %p504 = scmp.ne.s32.totalorder %s490, %s491
      %p505 = scmp.eq.s32.totalorder %s35, 1
      %p506 = por %p504, %p505
      %p508 = scmp.ne.s32.totalorder %s491, %s507
      %p509 = scmp.eq.s32.totalorder %s35, 0
      %p510 = por %p508, %p509
      %s511 = ssub.s32 %s29, %s36
      %p512 = scmp.eq.s32.totalorder %s511, 0
      %s514 = sadd.s32 %s513, 1
      %s515 = scalar_select %p512, %s513, %s514
      %p518 = pneg %p512
      %p519 = scmp.eq.s32.totalorder %s29, 1
      %p520 = por %p518, %p519
      %p521 = scmp.ne.s32.totalorder %s513, %s516
      %p522 = scmp.eq.s32.totalorder %s29, 0
      %p523 = por %p521, %p522
      %p524 = scmp.ne.s32.totalorder %s513, %s516
      %p525 = scmp.eq.s32.totalorder %s34, 1
      %p526 = por %p524, %p525
      %p527 = scmp.ne.s32.totalorder %s516, %s517
      %p528 = scmp.eq.s32.totalorder %s34, 0
      %p529 = por %p527, %p528
      %p530 = scmp.ne.s32.totalorder %s516, %s517
      %p531 = scmp.eq.s32.totalorder %s35, 1
      %p532 = por %p530, %p531
      %p534 = scmp.ne.s32.totalorder %s517, %s533
      %p535 = scmp.eq.s32.totalorder %s35, 0
      %p536 = por %p534, %p535
      %s538 = sadd.s32 %s537, 1
      %p541 = scmp.eq.s32.totalorder %s29, 1
      %p542 = scmp.ne.s32.totalorder %s537, %s539
      %p543 = scmp.eq.s32.totalorder %s29, 0
      %p544 = por %p542, %p543
      %p545 = scmp.ne.s32.totalorder %s537, %s539
      %p546 = scmp.eq.s32.totalorder %s34, 1
      %p547 = por %p545, %p546
      %p548 = scmp.ne.s32.totalorder %s539, %s540
      %p549 = scmp.eq.s32.totalorder %s34, 0
      %p550 = por %p548, %p549
      %p551 = scmp.ne.s32.totalorder %s539, %s540
      %p552 = scmp.eq.s32.totalorder %s35, 1
      %p553 = por %p551, %p552
      %p555 = scmp.ne.s32.totalorder %s540, %s554
      %p556 = scmp.eq.s32.totalorder %s35, 0
      %p557 = por %p555, %p556
      %s559 = sadd.s32 %s558, 1
      %p562 = scmp.eq.s32.totalorder %s29, 1
      %p563 = scmp.ne.s32.totalorder %s558, %s560
      %p564 = scmp.eq.s32.totalorder %s29, 0
      %p565 = por %p563, %p564
      %p566 = scmp.ne.s32.totalorder %s558, %s560
      %p567 = scmp.eq.s32.totalorder %s34, 1
      %p568 = por %p566, %p567
      %p569 = scmp.ne.s32.totalorder %s560, %s561
      %p570 = scmp.eq.s32.totalorder %s34, 0
      %p571 = por %p569, %p570
      %p572 = scmp.ne.s32.totalorder %s560, %s561
      %p573 = scmp.eq.s32.totalorder %s35, 1
      %p574 = por %p572, %p573
      %p576 = scmp.ne.s32.totalorder %s561, %s575
      %p577 = scmp.eq.s32.totalorder %s35, 0
      %p578 = por %p576, %p577
      %s580 = sadd.s32 %s579, 1
      %p583 = scmp.eq.s32.totalorder %s29, 1
      %p584 = scmp.ne.s32.totalorder %s579, %s581
      %p585 = scmp.eq.s32.totalorder %s29, 0
      %p586 = por %p584, %p585
      %p587 = scmp.ne.s32.totalorder %s579, %s581
      %p588 = scmp.eq.s32.totalorder %s34, 1
      %p589 = por %p587, %p588
      %p590 = scmp.ne.s32.totalorder %s581, %s582
      %p591 = scmp.eq.s32.totalorder %s34, 0
      %p592 = por %p590, %p591
      %p593 = scmp.ne.s32.totalorder %s581, %s582
      %p594 = scmp.eq.s32.totalorder %s35, 1
      %p595 = por %p593, %p594
      %p597 = scmp.ne.s32.totalorder %s582, %s596
      %p598 = scmp.eq.s32.totalorder %s35, 0
      %p599 = por %p597, %p598
      %p600 = scmp.le.s32.totalorder 1, %s29
      %p601 = scmp.lt.s32.totalorder %s29, 3
      %p602 = pnand %p600, %p601
      %p603 = pneg %p602
      // Predicated region
      $region9: #{forward.1} parent=5 // pred_check
        _
      $region10: #{forward.1} parent=5 // pred_check_branch
        %605 = sbr.rel (%p602) target = $region12
      $region11: #{forward.1} parent=5 // pred_region
        %s606 = ssub.s32 %s29, 1
        // Predicated region
        $region13: #{forward.1} parent=11 // pred_check
          %p607 = pneg %p50
        $region14: #{forward.1} parent=11 // pred_check_branch
          %609 = sbr.rel (%p607) target = $region16
        $region15: #{forward.1} parent=11 // pred_region
          _
        $region16: #{forward.1} parent=11 // pred_fallthru
          _
        // Predicated region
        $region17: #{forward.1} parent=11 // pred_check
          %p610 = pneg %p71
        $region18: #{forward.1} parent=11 // pred_check_branch
          %612 = sbr.rel (%p610) target = $region20
        $region19: #{forward.1} parent=11 // pred_region
          _
        $region20: #{forward.1} parent=11 // pred_fallthru
          _
        // Predicated region
        $region21: #{forward.1} parent=11 // pred_check
          %p613 = pneg %p92
        $region22: #{forward.1} parent=11 // pred_check_branch
          %615 = sbr.rel (%p613) target = $region24
        $region23: #{forward.1} parent=11 // pred_region
          _
        $region24: #{forward.1} parent=11 // pred_fallthru
          _
        // Predicated region
        $region25: #{forward.1} parent=11 // pred_check
          %p616 = pneg %p113
        $region26: #{forward.1} parent=11 // pred_check_branch
          %618 = sbr.rel (%p616) target = $region28
        $region27: #{forward.1} parent=11 // pred_region
          _
        $region28: #{forward.1} parent=11 // pred_fallthru
          _
        // Predicated region
        $region29: #{forward.1} parent=11 // pred_check
          %p619 = pneg %p550
        $region30: #{forward.1} parent=11 // pred_check_branch
          %621 = sbr.rel (%p619) target = $region32
        $region31: #{forward.1} parent=11 // pred_region
          _
        $region32: #{forward.1} parent=11 // pred_fallthru
          _
        // Predicated region
        $region33: #{forward.1} parent=11 // pred_check
          %p622 = pneg %p571
        $region34: #{forward.1} parent=11 // pred_check_branch
          %624 = sbr.rel (%p622) target = $region36
        $region35: #{forward.1} parent=11 // pred_region
          _
        $region36: #{forward.1} parent=11 // pred_fallthru
          _
      $region12: #{forward.1} parent=5 // pred_fallthru
        _
      %p625 = scmp.lt.s32.totalorder %s29, 2
      // Predicated region
      $region37: #{forward.1} parent=5 // pred_check
        %p626 = pneg %p625
      $region38: #{forward.1} parent=5 // pred_check_branch
        %628 = sbr.rel (%p626) target = $region40
      $region39: #{forward.1} parent=5 // pred_region
        // Predicated region
        $region41: #{forward.1} parent=39 // pred_check
          %p629 = pneg %p133
        $region42: #{forward.1} parent=39 // pred_check_branch
          %631 = sbr.rel (%p629) target = $region44
        $region43: #{forward.1} parent=39 // pred_region
          %p632 = scmp.lt.s32.totalorder %s29, 1
          %s633 = scalar_select %p632, %s29, 1
          %s634 = smul.addr %s633, 4
          %s635 = smul.addr %s634, 8
          %s636 = scalar_lea.vmem %s4, %s635
        $region44: #{forward.1} parent=39 // pred_fallthru
          _
        // Predicated region
        $region45: #{forward.1} parent=39 // pred_check
          %p637 = pneg %p159
        $region46: #{forward.1} parent=39 // pred_check_branch
          %639 = sbr.rel (%p637) target = $region48
        $region47: #{forward.1} parent=39 // pred_region
          %p640 = scmp.lt.s32.totalorder %s29, 1
          %s641 = scalar_select %p640, %s29, 1
          %s642 = scalar_lea.vmem %s5, %s641
        $region48: #{forward.1} parent=39 // pred_fallthru
          _
        // Predicated region
        $region49: #{forward.1} parent=39 // pred_check
          %p643 = pneg %p185
        $region50: #{forward.1} parent=39 // pred_check_branch
          %645 = sbr.rel (%p643) target = $region52
        $region51: #{forward.1} parent=39 // pred_region
          %p646 = scmp.lt.s32.totalorder %s29, 1
          %s647 = scalar_select %p646, %s29, 1
          %s648 = smul.addr %s647, 4
          %s649 = smul.addr %s648, 8
          %s650 = scalar_lea.vmem %s6, %s649
        $region52: #{forward.1} parent=39 // pred_fallthru
          _
        // Predicated region
        $region53: #{forward.1} parent=39 // pred_check
          %p651 = pneg %p211
        $region54: #{forward.1} parent=39 // pred_check_branch
          %653 = sbr.rel (%p651) target = $region56
        $region55: #{forward.1} parent=39 // pred_region
          %p654 = scmp.lt.s32.totalorder %s29, 1
          %s655 = scalar_select %p654, %s29, 1
          %s656 = scalar_lea.vmem %s7, %s655
        $region56: #{forward.1} parent=39 // pred_fallthru
          _
        // Predicated region
        $region57: #{forward.1} parent=39 // pred_check
          %p657 = pneg %p237
        $region58: #{forward.1} parent=39 // pred_check_branch
          %659 = sbr.rel (%p657) target = $region60
        $region59: #{forward.1} parent=39 // pred_region
          %p660 = scmp.lt.s32.totalorder %s29, 1
          %s661 = scalar_select %p660, %s29, 1
          %s662 = smul.addr %s661, 4
          %s663 = smul.addr %s662, 8
          %s664 = scalar_lea.vmem %s8, %s663
        $region60: #{forward.1} parent=39 // pred_fallthru
          _
        // Predicated region
        $region61: #{forward.1} parent=39 // pred_check
          %p665 = pneg %p263
        $region62: #{forward.1} parent=39 // pred_check_branch
          %667 = sbr.rel (%p665) target = $region64
        $region63: #{forward.1} parent=39 // pred_region
          %p668 = scmp.lt.s32.totalorder %s29, 1
          %s669 = scalar_select %p668, %s29, 1
          %s670 = scalar_lea.vmem %s9, %s669
        $region64: #{forward.1} parent=39 // pred_fallthru
          _
        // Predicated region
        $region65: #{forward.1} parent=39 // pred_check
          %p671 = pneg %p289
        $region66: #{forward.1} parent=39 // pred_check_branch
          %673 = sbr.rel (%p671) target = $region68
        $region67: #{forward.1} parent=39 // pred_region
          %p674 = scmp.lt.s32.totalorder %s29, 1
          %s675 = scalar_select %p674, %s29, 1
          %s676 = smul.addr %s675, 4
          %s677 = smul.addr %s676, 8
          %s678 = scalar_lea.vmem %s10, %s677
        $region68: #{forward.1} parent=39 // pred_fallthru
          _
        // Predicated region
        $region69: #{forward.1} parent=39 // pred_check
          %p679 = pneg %p315
        $region70: #{forward.1} parent=39 // pred_check_branch
          %681 = sbr.rel (%p679) target = $region72
        $region71: #{forward.1} parent=39 // pred_region
          %p682 = scmp.lt.s32.totalorder %s29, 1
          %s683 = scalar_select %p682, %s29, 1
          %s684 = scalar_lea.vmem %s11, %s683
        $region72: #{forward.1} parent=39 // pred_fallthru
          _
        // Predicated region
        $region73: #{forward.1} parent=39 // pred_check
          %p685 = pneg %p341
        $region74: #{forward.1} parent=39 // pred_check_branch
          %687 = sbr.rel (%p685) target = $region76
        $region75: #{forward.1} parent=39 // pred_region
          %p688 = scmp.lt.s32.totalorder %s29, 1
          %s689 = scalar_select %p688, %s29, 1
          %s690 = scalar_lea.vmem %s12, %s689
        $region76: #{forward.1} parent=39 // pred_fallthru
          _
        // Predicated region
        $region77: #{forward.1} parent=39 // pred_check
          %p691 = pneg %p367
        $region78: #{forward.1} parent=39 // pred_check_branch
          %693 = sbr.rel (%p691) target = $region80
        $region79: #{forward.1} parent=39 // pred_region
          %p694 = scmp.lt.s32.totalorder %s29, 1
          %s695 = scalar_select %p694, %s29, 1
          %s696 = scalar_lea.vmem %s13, %s695
        $region80: #{forward.1} parent=39 // pred_fallthru
          _
        // Predicated region
        $region81: #{forward.1} parent=39 // pred_check
          %p697 = pneg %p393
        $region82: #{forward.1} parent=39 // pred_check_branch
          %699 = sbr.rel (%p697) target = $region84
        $region83: #{forward.1} parent=39 // pred_region
          %p700 = scmp.lt.s32.totalorder %s29, 1
          %s701 = scalar_select %p700, %s29, 1
          %s702 = smul.addr %s701, 64
          %s703 = smul.addr %s702, 8
          %s704 = scalar_lea.vmem %s14, %s703
        $region84: #{forward.1} parent=39 // pred_fallthru
          _
        // Predicated region
        $region85: #{forward.1} parent=39 // pred_check
          %p705 = pneg %p419
        $region86: #{forward.1} parent=39 // pred_check_branch
          %707 = sbr.rel (%p705) target = $region88
        $region87: #{forward.1} parent=39 // pred_region
          %p708 = scmp.lt.s32.totalorder %s29, 1
          %s709 = scalar_select %p708, %s29, 1
          %s710 = smul.addr %s709, 16
          %s711 = scalar_lea.vmem %s15, %s710
        $region88: #{forward.1} parent=39 // pred_fallthru
          _
        // Predicated region
        $region89: #{forward.1} parent=39 // pred_check
          %p712 = pneg %p445
        $region90: #{forward.1} parent=39 // pred_check_branch
          %714 = sbr.rel (%p712) target = $region92
        $region91: #{forward.1} parent=39 // pred_region
          %p715 = scmp.lt.s32.totalorder %s29, 1
          %s716 = scalar_select %p715, %s29, 1
          %s717 = smul.addr %s716, 256
          %s718 = smul.addr %s717, 8
          %s719 = scalar_lea.vmem %s16, %s718
        $region92: #{forward.1} parent=39 // pred_fallthru
          _
        // Predicated region
        $region93: #{forward.1} parent=39 // pred_check
          %p720 = pneg %p471
        $region94: #{forward.1} parent=39 // pred_check_branch
          %722 = sbr.rel (%p720) target = $region96
        $region95: #{forward.1} parent=39 // pred_region
          %p723 = scmp.lt.s32.totalorder %s29, 1
          %s724 = scalar_select %p723, %s29, 1
          %s725 = scalar_lea.vmem %s17, %s724
        $region96: #{forward.1} parent=39 // pred_fallthru
          _
        // Predicated region
        $region97: #{forward.1} parent=39 // pred_check
          %p726 = pneg %p497
        $region98: #{forward.1} parent=39 // pred_check_branch
          %728 = sbr.rel (%p726) target = $region100
        $region99: #{forward.1} parent=39 // pred_region
          %p729 = scmp.lt.s32.totalorder %s29, 1
          %s730 = scalar_select %p729, %s29, 1
          %s731 = scalar_lea.vmem %s18, %s730
        $region100: #{forward.1} parent=39 // pred_fallthru
          _
        // Predicated region
        $region101: #{forward.1} parent=39 // pred_check
          %p732 = pneg %p523
        $region102: #{forward.1} parent=39 // pred_check_branch
          %734 = sbr.rel (%p732) target = $region104
        $region103: #{forward.1} parent=39 // pred_region
          %p735 = scmp.lt.s32.totalorder %s29, 1
          %s736 = scalar_select %p735, %s29, 1
          %s737 = scalar_lea.vmem %s19, %s736
        $region104: #{forward.1} parent=39 // pred_fallthru
          _
      $region40: #{forward.1} parent=5 // pred_fallthru
        _
      %p738 = scmp.le.s32.totalorder 1, %s29
      %p739 = scmp.lt.s32.totalorder %s29, 3
      %p740 = pnand %p738, %p739
      %p741 = pneg %p740
      // Predicated region
      $region105: #{forward.1} parent=5 // pred_check
        _
      $region106: #{forward.1} parent=5 // pred_check_branch
        %743 = sbr.rel (%p740) target = $region108
      $region107: #{forward.1} parent=5 // pred_region
        %s744 = ssub.s32 %s29, 1
        %p745 = pneg %p50
        %p746 = pneg %p47
        %p747 = pneg %p71
        %p748 = pneg %p68
        %p749 = pneg %p92
        %p750 = pneg %p89
        %p751 = pneg %p113
        %p752 = pneg %p110
        %p753 = scmp.lt.s32.totalorder %s34, 1
        %s754 = scalar_select %p753, %s34, 1
        %s755 = smul.addr %s754, 4
        %s756 = smul.addr %s755, 8
        %s757 = scalar_lea.vmem %s4, %s756
        %p758 = pneg %p139
        %p759 = pneg %p136
        %p760 = scmp.lt.s32.totalorder %s34, 1
        %s761 = scalar_select %p760, %s34, 1
        %s762 = scalar_lea.vmem %s5, %s761
        %p763 = pneg %p165
        %p764 = pneg %p162
        %p765 = scmp.lt.s32.totalorder %s34, 1
        %s766 = scalar_select %p765, %s34, 1
        %s767 = smul.addr %s766, 4
        %s768 = smul.addr %s767, 8
        %s769 = scalar_lea.vmem %s6, %s768
        %p770 = pneg %p191
        %p771 = pneg %p188
        %p772 = scmp.lt.s32.totalorder %s34, 1
        %s773 = scalar_select %p772, %s34, 1
        %s774 = scalar_lea.vmem %s7, %s773
        %p775 = pneg %p217
        %p776 = pneg %p214
        %p777 = scmp.lt.s32.totalorder %s34, 1
        %s778 = scalar_select %p777, %s34, 1
        %s779 = smul.addr %s778, 4
        %s780 = smul.addr %s779, 8
        %s781 = scalar_lea.vmem %s8, %s780
        %p782 = pneg %p243
        %p783 = pneg %p240
        %p784 = scmp.lt.s32.totalorder %s34, 1
        %s785 = scalar_select %p784, %s34, 1
        %s786 = scalar_lea.vmem %s9, %s785
        %p787 = pneg %p269
        %p788 = pneg %p266
        %p789 = scmp.lt.s32.totalorder %s34, 1
        %s790 = scalar_select %p789, %s34, 1
        %s791 = smul.addr %s790, 4
        %s792 = smul.addr %s791, 8
        %s793 = scalar_lea.vmem %s10, %s792
        %p794 = pneg %p295
        %p795 = pneg %p292
        %p796 = scmp.lt.s32.totalorder %s34, 1
        %s797 = scalar_select %p796, %s34, 1
        %s798 = scalar_lea.vmem %s11, %s797
        %p799 = pneg %p321
        %p800 = pneg %p318
        %p801 = scmp.lt.s32.totalorder %s34, 1
        %s802 = scalar_select %p801, %s34, 1
        %s803 = scalar_lea.vmem %s12, %s802
        %p804 = pneg %p347
        %p805 = pneg %p344
        %p806 = scmp.lt.s32.totalorder %s34, 1
        %s807 = scalar_select %p806, %s34, 1
        %s808 = scalar_lea.vmem %s13, %s807
        %p809 = pneg %p373
        %p810 = pneg %p370
        %p811 = scmp.lt.s32.totalorder %s34, 1
        %s812 = scalar_select %p811, %s34, 1
        %s813 = smul.addr %s812, 64
        %s814 = smul.addr %s813, 8
        %s815 = scalar_lea.vmem %s14, %s814
        %p816 = pneg %p399
        %p817 = pneg %p396
        %p818 = scmp.lt.s32.totalorder %s34, 1
        %s819 = scalar_select %p818, %s34, 1
        %s820 = smul.addr %s819, 16
        %s821 = scalar_lea.vmem %s15, %s820
        %p822 = pneg %p425
        %p823 = pneg %p422
        %p824 = scmp.lt.s32.totalorder %s34, 1
        %s825 = scalar_select %p824, %s34, 1
        %s826 = smul.addr %s825, 256
        %s827 = smul.addr %s826, 8
        %s828 = scalar_lea.vmem %s16, %s827
        %p829 = pneg %p451
        %p830 = pneg %p448
        %p831 = scmp.lt.s32.totalorder %s34, 1
        %s832 = scalar_select %p831, %s34, 1
        %s833 = scalar_lea.vmem %s17, %s832
        %p834 = pneg %p477
        %p835 = pneg %p474
        %p836 = scmp.lt.s32.totalorder %s34, 1
        %s837 = scalar_select %p836, %s34, 1
        %s838 = scalar_lea.vmem %s18, %s837
        %p839 = pneg %p503
        %p840 = pneg %p500
        %p841 = scmp.lt.s32.totalorder %s34, 1
        %s842 = scalar_select %p841, %s34, 1
        %s843 = scalar_lea.vmem %s19, %s842
        %p844 = pneg %p529
        %p845 = pneg %p526
        %p846 = pneg %p550
        %p847 = pneg %p547
        %p848 = pneg %p571
        %p849 = pneg %p568
        %p850 = pneg %p592
        %p851 = pneg %p589
        %p852 = scmp.lt.s32.totalorder %s34, 1
        %s853 = scalar_select %p852, %s34, 1
        %s854 = smul.addr %s853, 4
        %s855 = smul.addr %s854, 8
        %s856 = scalar_lea.vmem %s4, %s855
        %p857 = scmp.lt.s32.totalorder %s34, 1
        %s858 = scalar_select %p857, %s34, 1
        %s859 = scalar_lea.vmem %s5, %s858
        %p860 = scmp.lt.s32.totalorder %s34, 1
        %s861 = scalar_select %p860, %s34, 1
        %s862 = smul.addr %s861, 4
        %s863 = smul.addr %s862, 8
        %s864 = scalar_lea.vmem %s6, %s863
        %p865 = scmp.lt.s32.totalorder %s34, 1
        %s866 = scalar_select %p865, %s34, 1
        %s867 = scalar_lea.vmem %s7, %s866
        %p868 = scmp.lt.s32.totalorder %s34, 1
        %s869 = scalar_select %p868, %s34, 1
        %s870 = smul.addr %s869, 4
        %s871 = smul.addr %s870, 8
        %s872 = scalar_lea.vmem %s8, %s871
        %p873 = scmp.lt.s32.totalorder %s34, 1
        %s874 = scalar_select %p873, %s34, 1
        %s875 = scalar_lea.vmem %s9, %s874
        %p876 = scmp.lt.s32.totalorder %s34, 1
        %s877 = scalar_select %p876, %s34, 1
        %s878 = smul.addr %s877, 4
        %s879 = smul.addr %s878, 8
        %s880 = scalar_lea.vmem %s10, %s879
        %p881 = scmp.lt.s32.totalorder %s34, 1
        %s882 = scalar_select %p881, %s34, 1
        %s883 = scalar_lea.vmem %s11, %s882
        %p884 = scmp.lt.s32.totalorder %s34, 1
        %s885 = scalar_select %p884, %s34, 1
        %s886 = scalar_lea.vmem %s12, %s885
        %p887 = scmp.lt.s32.totalorder %s34, 1
        %s888 = scalar_select %p887, %s34, 1
        %s889 = scalar_lea.vmem %s13, %s888
        %p890 = scmp.lt.s32.totalorder %s34, 1
        %s891 = scalar_select %p890, %s34, 1
        %s892 = smul.addr %s891, 64
        %s893 = smul.addr %s892, 8
        %s894 = scalar_lea.vmem %s14, %s893
        %p895 = scmp.lt.s32.totalorder %s34, 1
        %s896 = scalar_select %p895, %s34, 1
        %s897 = smul.addr %s896, 16
        %s898 = scalar_lea.vmem %s15, %s897
        %p899 = scmp.lt.s32.totalorder %s34, 1
        %s900 = scalar_select %p899, %s34, 1
        %s901 = smul.addr %s900, 256
        %s902 = smul.addr %s901, 8
        %s903 = scalar_lea.vmem %s16, %s902
        %p904 = scmp.lt.s32.totalorder %s34, 1
        %s905 = scalar_select %p904, %s34, 1
        %s906 = scalar_lea.vmem %s17, %s905
        %p907 = scmp.lt.s32.totalorder %s34, 1
        %s908 = scalar_select %p907, %s34, 1
        %s909 = scalar_lea.vmem %s18, %s908
        %p910 = scmp.lt.s32.totalorder %s34, 1
        %s911 = scalar_select %p910, %s34, 1
        %s912 = scalar_lea.vmem %s19, %s911
        %p913 = scmp.eq.s32.totalorder %s34, 0
        // Predicated region
        $region109: #{forward.1} parent=107 // pred_check
          %p914 = pneg %p913
        $region110: #{forward.1} parent=107 // pred_check_branch
          %916 = sbr.rel (%p914) target = $region112
        $region111: #{forward.1} parent=107 // pred_region
          %v917 = vld [vmem:[%s0] sm:$0xff]
          %v918 = vld [vmem:[%s0 + $0x8] sm:$0xff]
          %v919 = vld [vmem:[%s1] sm:$0xf]
          %vm920 = vcmask 31744
          %v922 = vsel %vm920, %v917, 0
          %v925 = vsel %vm920, %v918, 0
          %vm927 = vcmask 1043456
          %v929 = vsel %vm927, %v919, 0
          %931 = vmatprep.subr.mxu0 0.0
          %932 = vmatpush1.msra.mxu0 %v929
          %933 = vmatprep.subr.mxu0 0.0
          %934 = vmatpush1.msra.mxu0 0.0
          %935 = vmatprep.subr.mxu0 0.0
          %936 = vmatpush1.msra.mxu0 0.0
          %937 = vmatprep.subr.mxu0 0.0
          %938 = vmatpush1.msra.mxu0 0.0
          %939 = vmatprep.subr.mxu0 0.0
          %940 = vmatpush1.msra.mxu0 0.0
          %941 = vmatprep.subr.mxu0 0.0
          %942 = vmatpush1.msra.mxu0 0.0
          %943 = vmatprep.subr.mxu0 0.0
          %944 = vmatpush1.msra.mxu0 0.0
          %945 = vmatprep.subr.mxu0 0.0
          %946 = vmatpush1.msra.mxu0 0.0
          %947 = vmatprep.subr.mxu0 0.0
          %948 = vmatpush1.msra.mxu0 0.0
          %949 = vmatprep.subr.mxu0 0.0
          %950 = vmatpush1.msra.mxu0 0.0
          %951 = vmatprep.subr.mxu0 0.0
          %952 = vmatpush1.msra.mxu0 0.0
          %953 = vmatprep.subr.mxu0 0.0
          %954 = vmatpush1.msra.mxu0 0.0
          %955 = vmatprep.subr.mxu0 0.0
          %956 = vmatpush1.msra.mxu0 0.0
          %957 = vmatprep.subr.mxu0 0.0
          %958 = vmatpush1.msra.mxu0 0.0
          %959 = vmatprep.subr.mxu0 0.0
          %960 = vmatpush1.msra.mxu0 0.0
          %961 = vmatprep.subr.mxu0 0.0
          %962 = vmatpush1.msra.mxu0 0.0
          %963 = vmatprep.subr.mxu0 0.0
          %964 = vmatpush1.msra.mxu0 0.0
          %965 = vmatprep.subr.mxu0 0.0
          %966 = vmatpush1.msra.mxu0 0.0
          %967 = vmatprep.subr.mxu0 0.0
          %968 = vmatpush1.msra.mxu0 0.0
          %969 = vmatprep.subr.mxu0 0.0
          %970 = vmatpush1.msra.mxu0 0.0
          %971 = vmatprep.subr.mxu0 0.0
          %972 = vmatpush1.msra.mxu0 0.0
          %973 = vmatprep.subr.mxu0 0.0
          %974 = vmatpush1.msra.mxu0 0.0
          %975 = vmatprep.subr.mxu0 0.0
          %976 = vmatpush1.msra.mxu0 0.0
          %977 = vmatprep.subr.mxu0 0.0
          %978 = vmatpush1.msra.mxu0 0.0
          %979 = vmatprep.subr.mxu0 0.0
          %980 = vmatpush1.msra.mxu0 0.0
          %981 = vmatprep.subr.mxu0 0.0
          %982 = vmatpush1.msra.mxu0 0.0
          %983 = vmatprep.subr.mxu0 0.0
          %984 = vmatpush1.msra.mxu0 0.0
          %985 = vmatprep.subr.mxu0 0.0
          %986 = vmatpush1.msra.mxu0 0.0
          %987 = vmatprep.subr.mxu0 0.0
          %988 = vmatpush1.msra.mxu0 0.0
          %989 = vmatprep.subr.mxu0 0.0
          %990 = vmatpush1.msra.mxu0 0.0
          %991 = vmatprep.subr.mxu0 0.0
          %992 = vmatpush1.msra.mxu0 0.0
          %993 = vmatprep.subr.mxu0 0.0
          %994 = vmatpush1.msra.mxu0 0.0
          %995 = vmatprep.mubr.f32.mxu0 0.0
          %996 = vmatmul.mubr.f32.gmra.mrb[0].mxu0 %v922
          %v997 = vpop.f32.mrb[0].mxu0
          %v998 = vadd.f32 0.0, %v997
          %v999 = vpop.f32.mrb[0].mxu0
          %1000 = vmatprep.mubr.f32.mxu0 0.0
          %1001 = vmatmul.mubr.f32.gmra.mrb[0].mxu0 %v925
          %v1002 = vpop.f32.mrb[0].mxu0
          %v1003 = vadd.f32 0.0, %v1002
          %v1004 = vpop.f32.mrb[0].mxu0
          %1005 = vdwg.mxu0
          %v1006 = vld [vmem:[%s2] sm:$0xff]
          %v1007 = vld [vmem:[%s3] sm:$0xff]
          %v1008 = vmul.f32 %v998, %v1006
          %v1009 = vmul.f32 %v1003, %v1006
          %v1010 = vadd.f32 %v1008, %v1007
          %v1011 = vadd.f32 %v1009, %v1007
          %vm1012 = vcmask 261120
          %1013 = vst.msk [vmem:[#allocation2] sm:$0xff] %vm1012, %v1010
          %1014 = vst.msk [vmem:[#allocation2 + $0x8] sm:$0xff] %vm1012, %v1011
        $region112: #{forward.1} parent=107 // pred_fallthru
          _
        %v1015 = vld [vmem:[#allocation2] sm:$0xff]
        %v1016 = vld [vmem:[#allocation2 + $0x8] sm:$0xff]
        %v1017 = vld [vmem:[%s856] sm:$0xff]
        %v1018 = vld [vmem:[%s856 + $0x8] sm:$0xff]
        %v1019 = vld [vmem:[%s856 + $0x10] sm:$0xff]
        %v1020 = vld [vmem:[%s856 + $0x18] sm:$0xff]
        %v1021 = vld [vmem:[%s859] sm:$0x1]
        %v1023 = vlaneseq
        %v1024 = vshrl.u32 %v1023, 7
        %v1025 = vsub.s32 0, %v1024
        %v1026 = vrot.slane %v1021, %v1025
        %vm1028 = vcmask 261120
        %v1030 = vsel %vm1028, %v1015, 0
        %v1033 = vsel %vm1028, %v1016, 0
        %1035 = vmatprep.subr.mxu0 0.0
        %1036 = vmatpush1.msra.mxu0 %v1017
        %1037 = vmatprep.subr.mxu0 0.0
        %1038 = vmatpush1.msra.mxu0 %v1018
        %1039 = vmatprep.subr.mxu0 0.0
        %1040 = vmatpush1.msra.mxu0 %v1019
        %1041 = vmatprep.subr.mxu0 0.0
        %1042 = vmatpush1.msra.mxu0 %v1020
        %1043 = vmatprep.subr.mxu0 0.0
        %1044 = vmatpush1.msra.mxu0 0.0
        %1045 = vmatprep.subr.mxu0 0.0
        %1046 = vmatpush1.msra.mxu0 0.0
        %1047 = vmatprep.subr.mxu0 0.0
        %1048 = vmatpush1.msra.mxu0 0.0
        %1049 = vmatprep.subr.mxu0 0.0
        %1050 = vmatpush1.msra.mxu0 0.0
        %1051 = vmatprep.subr.mxu0 0.0
        %1052 = vmatpush1.msra.mxu0 0.0
        %1053 = vmatprep.subr.mxu0 0.0
        %1054 = vmatpush1.msra.mxu0 0.0
        %1055 = vmatprep.subr.mxu0 0.0
        %1056 = vmatpush1.msra.mxu0 0.0
        %1057 = vmatprep.subr.mxu0 0.0
        %1058 = vmatpush1.msra.mxu0 0.0
        %1059 = vmatprep.subr.mxu0 0.0
        %1060 = vmatpush1.msra.mxu0 0.0
        %1061 = vmatprep.subr.mxu0 0.0
        %1062 = vmatpush1.msra.mxu0 0.0
        %1063 = vmatprep.subr.mxu0 0.0
        %1064 = vmatpush1.msra.mxu0 0.0
        %1065 = vmatprep.subr.mxu0 0.0
        %1066 = vmatpush1.msra.mxu0 0.0
        %1067 = vmatprep.subr.mxu0 0.0
        %1068 = vmatpush1.msra.mxu0 0.0
        %1069 = vmatprep.subr.mxu0 0.0
        %1070 = vmatpush1.msra.mxu0 0.0
        %1071 = vmatprep.subr.mxu0 0.0
        %1072 = vmatpush1.msra.mxu0 0.0
        %1073 = vmatprep.subr.mxu0 0.0
        %1074 = vmatpush1.msra.mxu0 0.0
        %1075 = vmatprep.subr.mxu0 0.0
        %1076 = vmatpush1.msra.mxu0 0.0
        %1077 = vmatprep.subr.mxu0 0.0
        %1078 = vmatpush1.msra.mxu0 0.0
        %1079 = vmatprep.subr.mxu0 0.0
        %1080 = vmatpush1.msra.mxu0 0.0
        %1081 = vmatprep.subr.mxu0 0.0
        %1082 = vmatpush1.msra.mxu0 0.0
        %1083 = vmatprep.subr.mxu0 0.0
        %1084 = vmatpush1.msra.mxu0 0.0
        %1085 = vmatprep.subr.mxu0 0.0
        %1086 = vmatpush1.msra.mxu0 0.0
        %1087 = vmatprep.subr.mxu0 0.0
        %1088 = vmatpush1.msra.mxu0 0.0
        %1089 = vmatprep.subr.mxu0 0.0
        %1090 = vmatpush1.msra.mxu0 0.0
        %1091 = vmatprep.subr.mxu0 0.0
        %1092 = vmatpush1.msra.mxu0 0.0
        %1093 = vmatprep.subr.mxu0 0.0
        %1094 = vmatpush1.msra.mxu0 0.0
        %1095 = vmatprep.subr.mxu0 0.0
        %1096 = vmatpush1.msra.mxu0 0.0
        %1097 = vmatprep.subr.mxu0 0.0
        %1098 = vmatpush1.msra.mxu0 0.0
        %1099 = vmatprep.mubr.f32.mxu0 0.0
        %1100 = vmatmul.mubr.f32.gmra.mrb[0].mxu0 %v1030
        %v1101 = vpop.f32.mrb[0].mxu0
        %v1102 = vadd.f32 %v1026, %v1101
        %v1103 = vpop.f32.mrb[0].mxu0
        %1104 = vmatprep.mubr.f32.mxu0 0.0
        %1105 = vmatmul.mubr.f32.gmra.mrb[0].mxu0 %v1033
        %v1106 = vpop.f32.mrb[0].mxu0
        %v1107 = vadd.f32 %v1026, %v1106
        %v1108 = vpop.f32.mrb[0].mxu0
        %1109 = vdwg.mxu0
        %v1110 = vld [vmem:[%s864] sm:$0xff]
        %v1111 = vld [vmem:[%s864 + $0x8] sm:$0xff]
        %v1112 = vld [vmem:[%s864 + $0x10] sm:$0xff]
        %v1113 = vld [vmem:[%s864 + $0x18] sm:$0xff]
        %v1114 = vld [vmem:[%s867] sm:$0x1]
        %v1116 = vlaneseq
        %v1117 = vshrl.u32 %v1116, 7
        %v1118 = vsub.s32 0, %v1117
        %v1119 = vrot.slane %v1114, %v1118
        %1121 = vmatprep.subr.mxu0 0.0
        %1122 = vmatpush1.msra.mxu0 %v1110
        %1123 = vmatprep.subr.mxu0 0.0
        %1124 = vmatpush1.msra.mxu0 %v1111
        %1125 = vmatprep.subr.mxu0 0.0
        %1126 = vmatpush1.msra.mxu0 %v1112
        %1127 = vmatprep.subr.mxu0 0.0
        %1128 = vmatpush1.msra.mxu0 %v1113
        %1129 = vmatprep.subr.mxu0 0.0
        %1130 = vmatpush1.msra.mxu0 0.0
        %1131 = vmatprep.subr.mxu0 0.0
        %1132 = vmatpush1.msra.mxu0 0.0
        %1133 = vmatprep.subr.mxu0 0.0
        %1134 = vmatpush1.msra.mxu0 0.0
        %1135 = vmatprep.subr.mxu0 0.0
        %1136 = vmatpush1.msra.mxu0 0.0
        %1137 = vmatprep.subr.mxu0 0.0
        %1138 = vmatpush1.msra.mxu0 0.0
        %1139 = vmatprep.subr.mxu0 0.0
        %1140 = vmatpush1.msra.mxu0 0.0
        %1141 = vmatprep.subr.mxu0 0.0
        %1142 = vmatpush1.msra.mxu0 0.0
        %1143 = vmatprep.subr.mxu0 0.0
        %1144 = vmatpush1.msra.mxu0 0.0
        %1145 = vmatprep.subr.mxu0 0.0
        %1146 = vmatpush1.msra.mxu0 0.0
        %1147 = vmatprep.subr.mxu0 0.0
        %1148 = vmatpush1.msra.mxu0 0.0
        %1149 = vmatprep.subr.mxu0 0.0
        %1150 = vmatpush1.msra.mxu0 0.0
        %1151 = vmatprep.subr.mxu0 0.0
        %1152 = vmatpush1.msra.mxu0 0.0
        %1153 = vmatprep.subr.mxu0 0.0
        %1154 = vmatpush1.msra.mxu0 0.0
        %1155 = vmatprep.subr.mxu0 0.0
        %1156 = vmatpush1.msra.mxu0 0.0
        %1157 = vmatprep.subr.mxu0 0.0
        %1158 = vmatpush1.msra.mxu0 0.0
        %1159 = vmatprep.subr.mxu0 0.0
        %1160 = vmatpush1.msra.mxu0 0.0
        %1161 = vmatprep.subr.mxu0 0.0
        %1162 = vmatpush1.msra.mxu0 0.0
        %1163 = vmatprep.subr.mxu0 0.0
        %1164 = vmatpush1.msra.mxu0 0.0
        %1165 = vmatprep.subr.mxu0 0.0
        %1166 = vmatpush1.msra.mxu0 0.0
        %1167 = vmatprep.subr.mxu0 0.0
        %1168 = vmatpush1.msra.mxu0 0.0
        %1169 = vmatprep.subr.mxu0 0.0
        %1170 = vmatpush1.msra.mxu0 0.0
        %1171 = vmatprep.subr.mxu0 0.0
        %1172 = vmatpush1.msra.mxu0 0.0
        %1173 = vmatprep.subr.mxu0 0.0
        %1174 = vmatpush1.msra.mxu0 0.0
        %1175 = vmatprep.subr.mxu0 0.0
        %1176 = vmatpush1.msra.mxu0 0.0
        %1177 = vmatprep.subr.mxu0 0.0
        %1178 = vmatpush1.msra.mxu0 0.0
        %1179 = vmatprep.subr.mxu0 0.0
        %1180 = vmatpush1.msra.mxu0 0.0
        %1181 = vmatprep.subr.mxu0 0.0
        %1182 = vmatpush1.msra.mxu0 0.0
        %1183 = vmatprep.subr.mxu0 0.0
        %1184 = vmatpush1.msra.mxu0 0.0
        %1185 = vmatprep.mubr.f32.mxu0 0.0
        %1186 = vmatmul.mubr.f32.gmra.mrb[0].mxu0 %v1030
        %v1187 = vpop.f32.mrb[0].mxu0
        %v1188 = vadd.f32 %v1119, %v1187
        %v1189 = vpop.f32.mrb[0].mxu0
        %1190 = vmatprep.mubr.f32.mxu0 0.0
        %1191 = vmatmul.mubr.f32.gmra.mrb[0].mxu0 %v1033
        %v1192 = vpop.f32.mrb[0].mxu0
        %v1193 = vadd.f32 %v1119, %v1192
        %v1194 = vpop.f32.mrb[0].mxu0
        %1195 = vdwg.mxu0
        %v1196 = vld [vmem:[%s872] sm:$0xff]
        %v1197 = vld [vmem:[%s872 + $0x8] sm:$0xff]
        %v1198 = vld [vmem:[%s872 + $0x10] sm:$0xff]
        %v1199 = vld [vmem:[%s872 + $0x18] sm:$0xff]
        %v1200 = vld [vmem:[%s875] sm:$0x1]
        %v1202 = vlaneseq
        %v1203 = vshrl.u32 %v1202, 7
        %v1204 = vsub.s32 0, %v1203
        %v1205 = vrot.slane %v1200, %v1204
        %1207 = vmatprep.subr.mxu0 0.0
        %1208 = vmatpush1.msra.mxu0 %v1196
        %1209 = vmatprep.subr.mxu0 0.0
        %1210 = vmatpush1.msra.mxu0 %v1197
        %1211 = vmatprep.subr.mxu0 0.0
        %1212 = vmatpush1.msra.mxu0 %v1198
        %1213 = vmatprep.subr.mxu0 0.0
        %1214 = vmatpush1.msra.mxu0 %v1199
        %1215 = vmatprep.subr.mxu0 0.0
        %1216 = vmatpush1.msra.mxu0 0.0
        %1217 = vmatprep.subr.mxu0 0.0
        %1218 = vmatpush1.msra.mxu0 0.0
        %1219 = vmatprep.subr.mxu0 0.0
        %1220 = vmatpush1.msra.mxu0 0.0
        %1221 = vmatprep.subr.mxu0 0.0
        %1222 = vmatpush1.msra.mxu0 0.0
        %1223 = vmatprep.subr.mxu0 0.0
        %1224 = vmatpush1.msra.mxu0 0.0
        %1225 = vmatprep.subr.mxu0 0.0
        %1226 = vmatpush1.msra.mxu0 0.0
        %1227 = vmatprep.subr.mxu0 0.0
        %1228 = vmatpush1.msra.mxu0 0.0
        %1229 = vmatprep.subr.mxu0 0.0
        %1230 = vmatpush1.msra.mxu0 0.0
        %1231 = vmatprep.subr.mxu0 0.0
        %1232 = vmatpush1.msra.mxu0 0.0
        %1233 = vmatprep.subr.mxu0 0.0
        %1234 = vmatpush1.msra.mxu0 0.0
        %1235 = vmatprep.subr.mxu0 0.0
        %1236 = vmatpush1.msra.mxu0 0.0
        %1237 = vmatprep.subr.mxu0 0.0
        %1238 = vmatpush1.msra.mxu0 0.0
        %1239 = vmatprep.subr.mxu0 0.0
        %1240 = vmatpush1.msra.mxu0 0.0
        %1241 = vmatprep.subr.mxu0 0.0
        %1242 = vmatpush1.msra.mxu0 0.0
        %1243 = vmatprep.subr.mxu0 0.0
        %1244 = vmatpush1.msra.mxu0 0.0
        %1245 = vmatprep.subr.mxu0 0.0
        %1246 = vmatpush1.msra.mxu0 0.0
        %1247 = vmatprep.subr.mxu0 0.0
        %1248 = vmatpush1.msra.mxu0 0.0
        %1249 = vmatprep.subr.mxu0 0.0
        %1250 = vmatpush1.msra.mxu0 0.0
        %1251 = vmatprep.subr.mxu0 0.0
        %1252 = vmatpush1.msra.mxu0 0.0
        %1253 = vmatprep.subr.mxu0 0.0
        %1254 = vmatpush1.msra.mxu0 0.0
        %1255 = vmatprep.subr.mxu0 0.0
        %1256 = vmatpush1.msra.mxu0 0.0
        %1257 = vmatprep.subr.mxu0 0.0
        %1258 = vmatpush1.msra.mxu0 0.0
        %1259 = vmatprep.subr.mxu0 0.0
        %1260 = vmatpush1.msra.mxu0 0.0
        %1261 = vmatprep.subr.mxu0 0.0
        %1262 = vmatpush1.msra.mxu0 0.0
        %1263 = vmatprep.subr.mxu0 0.0
        %1264 = vmatpush1.msra.mxu0 0.0
        %1265 = vmatprep.subr.mxu0 0.0
        %1266 = vmatpush1.msra.mxu0 0.0
        %1267 = vmatprep.subr.mxu0 0.0
        %1268 = vmatpush1.msra.mxu0 0.0
        %1269 = vmatprep.subr.mxu0 0.0
        %1270 = vmatpush1.msra.mxu0 0.0
        %1271 = vmatprep.mubr.f32.mxu0 0.0
        %1272 = vmatmul.mubr.f32.gmra.mrb[0].mxu0 %v1030
        %v1273 = vpop.f32.mrb[0].mxu0
        %v1274 = vadd.f32 %v1205, %v1273
        %v1275 = vpop.f32.mrb[0].mxu0
        %1276 = vmatprep.mubr.f32.mxu0 0.0
        %1277 = vmatmul.mubr.f32.gmra.mrb[0].mxu0 %v1033
        %v1278 = vpop.f32.mrb[0].mxu0
        %v1279 = vadd.f32 %v1205, %v1278
        %v1280 = vpop.f32.mrb[0].mxu0
        %1281 = vdwg.mxu0
        %vm1282 = vcmask 64512
        %v1284 = vsel %vm1282, %v1102, 0
        %v1287 = vsel %vm1282, %v1188, 0
        %1289 = vmatprep.subr.mxu0 0.0
        %1290 = vmatpush1.xpose.msra.mxu0 %v1287
        %1291 = vmatprep.subr.mxu0 0.0
        %1292 = vmatpush1.xpose.msra.mxu0 0.0
        %1293 = vmatprep.subr.mxu0 0.0
        %1294 = vmatpush1.xpose.msra.mxu0 0.0
        %1295 = vmatprep.subr.mxu0 0.0
        %1296 = vmatpush1.xpose.msra.mxu0 0.0
        %1297 = vmatprep.subr.mxu0 0.0
        %1298 = vmatpush1.xpose.msra.mxu0 0.0
        %1299 = vmatprep.subr.mxu0 0.0
        %1300 = vmatpush1.xpose.msra.mxu0 0.0
        %1301 = vmatprep.subr.mxu0 0.0
        %1302 = vmatpush1.xpose.msra.mxu0 0.0
        %1303 = vmatprep.subr.mxu0 0.0
        %1304 = vmatpush1.xpose.msra.mxu0 0.0
        %1305 = vmatprep.subr.mxu0 0.0
        %1306 = vmatpush1.xpose.msra.mxu0 0.0
        %1307 = vmatprep.subr.mxu0 0.0
        %1308 = vmatpush1.xpose.msra.mxu0 0.0
        %1309 = vmatprep.subr.mxu0 0.0
        %1310 = vmatpush1.xpose.msra.mxu0 0.0
        %1311 = vmatprep.subr.mxu0 0.0
        %1312 = vmatpush1.xpose.msra.mxu0 0.0
        %1313 = vmatprep.subr.mxu0 0.0
        %1314 = vmatpush1.xpose.msra.mxu0 0.0
        %1315 = vmatprep.subr.mxu0 0.0
        %1316 = vmatpush1.xpose.msra.mxu0 0.0
        %1317 = vmatprep.subr.mxu0 0.0
        %1318 = vmatpush1.xpose.msra.mxu0 0.0
        %1319 = vmatprep.subr.mxu0 0.0
        %1320 = vmatpush1.xpose.msra.mxu0 0.0
        %1321 = vmatprep.subr.mxu0 0.0
        %1322 = vmatpush1.xpose.msra.mxu0 0.0
        %1323 = vmatprep.subr.mxu0 0.0
        %1324 = vmatpush1.xpose.msra.mxu0 0.0
        %1325 = vmatprep.subr.mxu0 0.0
        %1326 = vmatpush1.xpose.msra.mxu0 0.0
        %1327 = vmatprep.subr.mxu0 0.0
        %1328 = vmatpush1.xpose.msra.mxu0 0.0
        %1329 = vmatprep.subr.mxu0 0.0
        %1330 = vmatpush1.xpose.msra.mxu0 0.0
        %1331 = vmatprep.subr.mxu0 0.0
        %1332 = vmatpush1.xpose.msra.mxu0 0.0
        %1333 = vmatprep.subr.mxu0 0.0
        %1334 = vmatpush1.xpose.msra.mxu0 0.0
        %1335 = vmatprep.subr.mxu0 0.0
        %1336 = vmatpush1.xpose.msra.mxu0 0.0
        %1337 = vmatprep.subr.mxu0 0.0
        %1338 = vmatpush1.xpose.msra.mxu0 0.0
        %1339 = vmatprep.subr.mxu0 0.0
        %1340 = vmatpush1.xpose.msra.mxu0 0.0
        %1341 = vmatprep.subr.mxu0 0.0
        %1342 = vmatpush1.xpose.msra.mxu0 0.0
        %1343 = vmatprep.subr.mxu0 0.0
        %1344 = vmatpush1.xpose.msra.mxu0 0.0
        %1345 = vmatprep.subr.mxu0 0.0
        %1346 = vmatpush1.xpose.msra.mxu0 0.0
        %1347 = vmatprep.subr.mxu0 0.0
        %1348 = vmatpush1.xpose.msra.mxu0 0.0
        %1349 = vmatprep.subr.mxu0 0.0
        %1350 = vmatpush1.xpose.msra.mxu0 0.0
        %1351 = vmatprep.subr.mxu0 0.0
        %1352 = vmatpush1.xpose.msra.mxu0 0.0
        %1353 = vmatprep.mubr.f32.mxu0 0.0
        %1354 = vmatmul.mubr.f32.gmra.mrb[0].mxu0 %v1284
        %v1355 = vpop.f32.mrb[0].mxu0
        %v1356 = vadd.f32 0.0, %v1355
        %v1357 = vpop.f32.mrb[0].mxu0
        %1358 = vdwg.mxu0
        %v1359 = vmul.f32 %v1356, 0.35355338
        %v1360 = vsel %vm1282, %v1359, -inf
        %1361 = vmax.xlane.f32.xlu0 %v1360
        %v1362 = vpop.xlane.xlu0 %1361
        %v1363 = vsub.f32 %v1359, %v1362
        %v1364 = vmul.f32 %v1363, 1.442695
        %v1365 = vpow.pop %v1364
        %v1366 = vsel %vm1282, %v1365, 0.0
        %1367 = vadd.xlane.f32.xlu0 %v1366
        %v1368 = vpop.xlane.xlu0 %1367
        %v1369 = vrcp.pop %v1368
        %v1370 = vmul.f32 %v1365, %v1369
        %v1372 = vsel %vm1282, %v1370, 0
        %1374 = vmatprep.subr.mxu0 0.0
        %1375 = vmatpush1.msra.mxu0 %v1274
        %1376 = vmatprep.subr.mxu0 0.0
        %1377 = vmatpush1.msra.mxu0 0.0
        %1378 = vmatprep.subr.mxu0 0.0
        %1379 = vmatpush1.msra.mxu0 0.0
        %1380 = vmatprep.subr.mxu0 0.0
        %1381 = vmatpush1.msra.mxu0 0.0
        %1382 = vmatprep.subr.mxu0 0.0
        %1383 = vmatpush1.msra.mxu0 0.0
        %1384 = vmatprep.subr.mxu0 0.0
        %1385 = vmatpush1.msra.mxu0 0.0
        %1386 = vmatprep.subr.mxu0 0.0
        %1387 = vmatpush1.msra.mxu0 0.0
        %1388 = vmatprep.subr.mxu0 0.0
        %1389 = vmatpush1.msra.mxu0 0.0
        %1390 = vmatprep.subr.mxu0 0.0
        %1391 = vmatpush1.msra.mxu0 0.0
        %1392 = vmatprep.subr.mxu0 0.0
        %1393 = vmatpush1.msra.mxu0 0.0
        %1394 = vmatprep.subr.mxu0 0.0
        %1395 = vmatpush1.msra.mxu0 0.0
        %1396 = vmatprep.subr.mxu0 0.0
        %1397 = vmatpush1.msra.mxu0 0.0
        %1398 = vmatprep.subr.mxu0 0.0
        %1399 = vmatpush1.msra.mxu0 0.0
        %1400 = vmatprep.subr.mxu0 0.0
        %1401 = vmatpush1.msra.mxu0 0.0
        %1402 = vmatprep.subr.mxu0 0.0
        %1403 = vmatpush1.msra.mxu0 0.0
        %1404 = vmatprep.subr.mxu0 0.0
        %1405 = vmatpush1.msra.mxu0 0.0
        %1406 = vmatprep.subr.mxu0 0.0
        %1407 = vmatpush1.msra.mxu0 0.0
        %1408 = vmatprep.subr.mxu0 0.0
        %1409 = vmatpush1.msra.mxu0 0.0
        %1410 = vmatprep.subr.mxu0 0.0
        %1411 = vmatpush1.msra.mxu0 0.0
        %1412 = vmatprep.subr.mxu0 0.0
        %1413 = vmatpush1.msra.mxu0 0.0
        %1414 = vmatprep.subr.mxu0 0.0
        %1415 = vmatpush1.msra.mxu0 0.0
        %1416 = vmatprep.subr.mxu0 0.0
        %1417 = vmatpush1.msra.mxu0 0.0
        %1418 = vmatprep.subr.mxu0 0.0
        %1419 = vmatpush1.msra.mxu0 0.0
        %1420 = vmatprep.subr.mxu0 0.0
        %1421 = vmatpush1.msra.mxu0 0.0
        %1422 = vmatprep.subr.mxu0 0.0
        %1423 = vmatpush1.msra.mxu0 0.0
        %1424 = vmatprep.subr.mxu0 0.0
        %1425 = vmatpush1.msra.mxu0 0.0
        %1426 = vmatprep.subr.mxu0 0.0
        %1427 = vmatpush1.msra.mxu0 0.0
        %1428 = vmatprep.subr.mxu0 0.0
        %1429 = vmatpush1.msra.mxu0 0.0
        %1430 = vmatprep.subr.mxu0 0.0
        %1431 = vmatpush1.msra.mxu0 0.0
        %1432 = vmatprep.subr.mxu0 0.0
        %1433 = vmatpush1.msra.mxu0 0.0
        %1434 = vmatprep.subr.mxu0 0.0
        %1435 = vmatpush1.msra.mxu0 0.0
        %1436 = vmatprep.subr.mxu0 0.0
        %1437 = vmatpush1.msra.mxu0 0.0
        %1438 = vmatprep.mubr.f32.mxu0 0.0
        %1439 = vmatmul.mubr.f32.gmra.mrb[0].mxu0 %v1372
        %v1440 = vpop.f32.mrb[0].mxu0
        %v1441 = vadd.f32 0.0, %v1440
        %v1442 = vpop.f32.mrb[0].mxu0
        %1443 = vdwg.mxu0
        %1444 = vrot.lane.b32.xlu0 %v1102, 120
        %v1445 = vpop.permute.xlu0 %1444
        %1446 = vrot.lane.b32.xlu0 %v1188, 120
        %v1447 = vpop.permute.xlu0 %1446
        %v1448 = vsel %vm1282, %v1445, 0
        %v1450 = vsel %vm1282, %v1447, 0
        %1452 = vmatprep.subr.mxu0 0.0
        %1453 = vmatpush1.xpose.msra.mxu0 %v1450
        %1454 = vmatprep.subr.mxu0 0.0
        %1455 = vmatpush1.xpose.msra.mxu0 0.0
        %1456 = vmatprep.subr.mxu0 0.0
        %1457 = vmatpush1.xpose.msra.mxu0 0.0
        %1458 = vmatprep.subr.mxu0 0.0
        %1459 = vmatpush1.xpose.msra.mxu0 0.0
        %1460 = vmatprep.subr.mxu0 0.0
        %1461 = vmatpush1.xpose.msra.mxu0 0.0
        %1462 = vmatprep.subr.mxu0 0.0
        %1463 = vmatpush1.xpose.msra.mxu0 0.0
        %1464 = vmatprep.subr.mxu0 0.0
        %1465 = vmatpush1.xpose.msra.mxu0 0.0
        %1466 = vmatprep.subr.mxu0 0.0
        %1467 = vmatpush1.xpose.msra.mxu0 0.0
        %1468 = vmatprep.subr.mxu0 0.0
        %1469 = vmatpush1.xpose.msra.mxu0 0.0
        %1470 = vmatprep.subr.mxu0 0.0
        %1471 = vmatpush1.xpose.msra.mxu0 0.0
        %1472 = vmatprep.subr.mxu0 0.0
        %1473 = vmatpush1.xpose.msra.mxu0 0.0
        %1474 = vmatprep.subr.mxu0 0.0
        %1475 = vmatpush1.xpose.msra.mxu0 0.0
        %1476 = vmatprep.subr.mxu0 0.0
        %1477 = vmatpush1.xpose.msra.mxu0 0.0
        %1478 = vmatprep.subr.mxu0 0.0
        %1479 = vmatpush1.xpose.msra.mxu0 0.0
        %1480 = vmatprep.subr.mxu0 0.0
        %1481 = vmatpush1.xpose.msra.mxu0 0.0
        %1482 = vmatprep.subr.mxu0 0.0
        %1483 = vmatpush1.xpose.msra.mxu0 0.0
        %1484 = vmatprep.subr.mxu0 0.0
        %1485 = vmatpush1.xpose.msra.mxu0 0.0
        %1486 = vmatprep.subr.mxu0 0.0
        %1487 = vmatpush1.xpose.msra.mxu0 0.0
        %1488 = vmatprep.subr.mxu0 0.0
        %1489 = vmatpush1.xpose.msra.mxu0 0.0
        %1490 = vmatprep.subr.mxu0 0.0
        %1491 = vmatpush1.xpose.msra.mxu0 0.0
        %1492 = vmatprep.subr.mxu0 0.0
        %1493 = vmatpush1.xpose.msra.mxu0 0.0
        %1494 = vmatprep.subr.mxu0 0.0
        %1495 = vmatpush1.xpose.msra.mxu0 0.0
        %1496 = vmatprep.subr.mxu0 0.0
        %1497 = vmatpush1.xpose.msra.mxu0 0.0
        %1498 = vmatprep.subr.mxu0 0.0
        %1499 = vmatpush1.xpose.msra.mxu0 0.0
        %1500 = vmatprep.subr.mxu0 0.0
        %1501 = vmatpush1.xpose.msra.mxu0 0.0
        %1502 = vmatprep.subr.mxu0 0.0
        %1503 = vmatpush1.xpose.msra.mxu0 0.0
        %1504 = vmatprep.subr.mxu0 0.0
        %1505 = vmatpush1.xpose.msra.mxu0 0.0
        %1506 = vmatprep.subr.mxu0 0.0
        %1507 = vmatpush1.xpose.msra.mxu0 0.0
        %1508 = vmatprep.subr.mxu0 0.0
        %1509 = vmatpush1.xpose.msra.mxu0 0.0
        %1510 = vmatprep.subr.mxu0 0.0
        %1511 = vmatpush1.xpose.msra.mxu0 0.0
        %1512 = vmatprep.subr.mxu0 0.0
        %1513 = vmatpush1.xpose.msra.mxu0 0.0
        %1514 = vmatprep.subr.mxu0 0.0
        %1515 = vmatpush1.xpose.msra.mxu0 0.0
        %1516 = vmatprep.mubr.f32.mxu0 0.0
        %1517 = vmatmul.mubr.f32.gmra.mrb[0].mxu0 %v1448
        %v1518 = vpop.f32.mrb[0].mxu0
        %v1519 = vadd.f32 0.0, %v1518
        %v1520 = vpop.f32.mrb[0].mxu0
        %1521 = vdwg.mxu0
        %v1522 = vmul.f32 %v1519, 0.35355338
        %v1523 = vsel %vm1282, %v1522, -inf
        %1524 = vmax.xlane.f32.xlu0 %v1523
        %v1525 = vpop.xlane.xlu0 %1524
        %v1526 = vsub.f32 %v1522, %v1525
        %v1527 = vmul.f32 %v1526, 1.442695
        %v1528 = vpow.pop %v1527
        %v1529 = vsel %vm1282, %v1528, 0.0
        %1530 = vadd.xlane.f32.xlu0 %v1529
        %v1531 = vpop.xlane.xlu0 %1530
        %v1532 = vrcp.pop %v1531
        %v1533 = vmul.f32 %v1528, %v1532
        %1535 = vrot.lane.b32.xlu0 %v1274, 120
        %v1536 = vpop.permute.xlu0 %1535
        %v1539 = vsel %vm1282, %v1533, 0
        %1541 = vmatprep.subr.mxu0 0.0
        %1542 = vmatpush1.msra.mxu0 %v1536
        %1543 = vmatprep.subr.mxu0 0.0
        %1544 = vmatpush1.msra.mxu0 0.0
        %1545 = vmatprep.subr.mxu0 0.0
        %1546 = vmatpush1.msra.mxu0 0.0
        %1547 = vmatprep.subr.mxu0 0.0
        %1548 = vmatpush1.msra.mxu0 0.0
        %1549 = vmatprep.subr.mxu0 0.0
        %1550 = vmatpush1.msra.mxu0 0.0
        %1551 = vmatprep.subr.mxu0 0.0
        %1552 = vmatpush1.msra.mxu0 0.0
        %1553 = vmatprep.subr.mxu0 0.0
        %1554 = vmatpush1.msra.mxu0 0.0
        %1555 = vmatprep.subr.mxu0 0.0
        %1556 = vmatpush1.msra.mxu0 0.0
        %1557 = vmatprep.subr.mxu0 0.0
        %1558 = vmatpush1.msra.mxu0 0.0
        %1559 = vmatprep.subr.mxu0 0.0
        %1560 = vmatpush1.msra.mxu0 0.0
        %1561 = vmatprep.subr.mxu0 0.0
        %1562 = vmatpush1.msra.mxu0 0.0
        %1563 = vmatprep.subr.mxu0 0.0
        %1564 = vmatpush1.msra.mxu0 0.0
        %1565 = vmatprep.subr.mxu0 0.0
        %1566 = vmatpush1.msra.mxu0 0.0
        %1567 = vmatprep.subr.mxu0 0.0
        %1568 = vmatpush1.msra.mxu0 0.0
        %1569 = vmatprep.subr.mxu0 0.0
        %1570 = vmatpush1.msra.mxu0 0.0
        %1571 = vmatprep.subr.mxu0 0.0
        %1572 = vmatpush1.msra.mxu0 0.0
        %1573 = vmatprep.subr.mxu0 0.0
        %1574 = vmatpush1.msra.mxu0 0.0
        %1575 = vmatprep.subr.mxu0 0.0
        %1576 = vmatpush1.msra.mxu0 0.0
        %1577 = vmatprep.subr.mxu0 0.0
        %1578 = vmatpush1.msra.mxu0 0.0
        %1579 = vmatprep.subr.mxu0 0.0
        %1580 = vmatpush1.msra.mxu0 0.0
        %1581 = vmatprep.subr.mxu0 0.0
        %1582 = vmatpush1.msra.mxu0 0.0
        %1583 = vmatprep.subr.mxu0 0.0
        %1584 = vmatpush1.msra.mxu0 0.0
        %1585 = vmatprep.subr.mxu0 0.0
        %1586 = vmatpush1.msra.mxu0 0.0
        %1587 = vmatprep.subr.mxu0 0.0
        %1588 = vmatpush1.msra.mxu0 0.0
        %1589 = vmatprep.subr.mxu0 0.0
        %1590 = vmatpush1.msra.mxu0 0.0
        %1591 = vmatprep.subr.mxu0 0.0
        %1592 = vmatpush1.msra.mxu0 0.0
        %1593 = vmatprep.subr.mxu0 0.0
        %1594 = vmatpush1.msra.mxu0 0.0
        %1595 = vmatprep.subr.mxu0 0.0
        %1596 = vmatpush1.msra.mxu0 0.0
        %1597 = vmatprep.subr.mxu0 0.0
        %1598 = vmatpush1.msra.mxu0 0.0
        %1599 = vmatprep.subr.mxu0 0.0
        %1600 = vmatpush1.msra.mxu0 0.0
        %1601 = vmatprep.subr.mxu0 0.0
        %1602 = vmatpush1.msra.mxu0 0.0
        %1603 = vmatprep.subr.mxu0 0.0
        %1604 = vmatpush1.msra.mxu0 0.0
        %1605 = vmatprep.mubr.f32.mxu0 0.0
        %1606 = vmatmul.mubr.f32.gmra.mrb[0].mxu0 %v1539
        %v1607 = vpop.f32.mrb[0].mxu0
        %v1608 = vadd.f32 0.0, %v1607
        %v1609 = vpop.f32.mrb[0].mxu0
        %1610 = vdwg.mxu0
        %1611 = vrot.lane.b32.xlu0 %v1102, 112
        %v1612 = vpop.permute.xlu0 %1611
        %1613 = vrot.lane.b32.xlu0 %v1188, 112
        %v1614 = vpop.permute.xlu0 %1613
        %v1615 = vsel %vm1282, %v1612, 0
        %v1617 = vsel %vm1282, %v1614, 0
        %1619 = vmatprep.subr.mxu0 0.0
        %1620 = vmatpush1.xpose.msra.mxu0 %v1617
        %1621 = vmatprep.subr.mxu0 0.0
        %1622 = vmatpush1.xpose.msra.mxu0 0.0
        %1623 = vmatprep.subr.mxu0 0.0
        %1624 = vmatpush1.xpose.msra.mxu0 0.0
        %1625 = vmatprep.subr.mxu0 0.0
        %1626 = vmatpush1.xpose.msra.mxu0 0.0
        %1627 = vmatprep.subr.mxu0 0.0
        %1628 = vmatpush1.xpose.msra.mxu0 0.0
        %1629 = vmatprep.subr.mxu0 0.0
        %1630 = vmatpush1.xpose.msra.mxu0 0.0
        %1631 = vmatprep.subr.mxu0 0.0
        %1632 = vmatpush1.xpose.msra.mxu0 0.0
        %1633 = vmatprep.subr.mxu0 0.0
        %1634 = vmatpush1.xpose.msra.mxu0 0.0
        %1635 = vmatprep.subr.mxu0 0.0
        %1636 = vmatpush1.xpose.msra.mxu0 0.0
        %1637 = vmatprep.subr.mxu0 0.0
        %1638 = vmatpush1.xpose.msra.mxu0 0.0
        %1639 = vmatprep.subr.mxu0 0.0
        %1640 = vmatpush1.xpose.msra.mxu0 0.0
        %1641 = vmatprep.subr.mxu0 0.0
        %1642 = vmatpush1.xpose.msra.mxu0 0.0
        %1643 = vmatprep.subr.mxu0 0.0
        %1644 = vmatpush1.xpose.msra.mxu0 0.0
        %1645 = vmatprep.subr.mxu0 0.0
        %1646 = vmatpush1.xpose.msra.mxu0 0.0
        %1647 = vmatprep.subr.mxu0 0.0
        %1648 = vmatpush1.xpose.msra.mxu0 0.0
        %1649 = vmatprep.subr.mxu0 0.0
        %1650 = vmatpush1.xpose.msra.mxu0 0.0
        %1651 = vmatprep.subr.mxu0 0.0
        %1652 = vmatpush1.xpose.msra.mxu0 0.0
        %1653 = vmatprep.subr.mxu0 0.0
        %1654 = vmatpush1.xpose.msra.mxu0 0.0
        %1655 = vmatprep.subr.mxu0 0.0
        %1656 = vmatpush1.xpose.msra.mxu0 0.0
        %1657 = vmatprep.subr.mxu0 0.0
        %1658 = vmatpush1.xpose.msra.mxu0 0.0
        %1659 = vmatprep.subr.mxu0 0.0
        %1660 = vmatpush1.xpose.msra.mxu0 0.0
        %1661 = vmatprep.subr.mxu0 0.0
        %1662 = vmatpush1.xpose.msra.mxu0 0.0
        %1663 = vmatprep.subr.mxu0 0.0
        %1664 = vmatpush1.xpose.msra.mxu0 0.0
        %1665 = vmatprep.subr.mxu0 0.0
        %1666 = vmatpush1.xpose.msra.mxu0 0.0
        %1667 = vmatprep.subr.mxu0 0.0
        %1668 = vmatpush1.xpose.msra.mxu0 0.0
        %1669 = vmatprep.subr.mxu0 0.0
        %1670 = vmatpush1.xpose.msra.mxu0 0.0
        %1671 = vmatprep.subr.mxu0 0.0
        %1672 = vmatpush1.xpose.msra.mxu0 0.0
        %1673 = vmatprep.subr.mxu0 0.0
        %1674 = vmatpush1.xpose.msra.mxu0 0.0
        %1675 = vmatprep.subr.mxu0 0.0
        %1676 = vmatpush1.xpose.msra.mxu0 0.0
        %1677 = vmatprep.subr.mxu0 0.0
        %1678 = vmatpush1.xpose.msra.mxu0 0.0
        %1679 = vmatprep.subr.mxu0 0.0
        %1680 = vmatpush1.xpose.msra.mxu0 0.0
        %1681 = vmatprep.subr.mxu0 0.0
        %1682 = vmatpush1.xpose.msra.mxu0 0.0
        %1683 = vmatprep.mubr.f32.mxu0 0.0
        %1684 = vmatmul.mubr.f32.gmra.mrb[0].mxu0 %v1615
        %v1685 = vpop.f32.mrb[0].mxu0
        %v1686 = vadd.f32 0.0, %v1685
        %v1687 = vpop.f32.mrb[0].mxu0
        %1688 = vdwg.mxu0
        %v1689 = vmul.f32 %v1686, 0.35355338
        %v1690 = vsel %vm1282, %v1689, -inf
        %1691 = vmax.xlane.f32.xlu0 %v1690
        %v1692 = vpop.xlane.xlu0 %1691
        %v1693 = vsub.f32 %v1689, %v1692
        %v1694 = vmul.f32 %v1693, 1.442695
        %v1695 = vpow.pop %v1694
        %v1696 = vsel %vm1282, %v1695, 0.0
        %1697 = vadd.xlane.f32.xlu0 %v1696
        %v1698 = vpop.xlane.xlu0 %1697
        %v1699 = vrcp.pop %v1698
        %v1700 = vmul.f32 %v1695, %v1699
        %1701 = vrot.lane.b32.xlu0 %v1274, 112
        %v1702 = vpop.permute.xlu0 %1701
        %v1705 = vsel %vm1282, %v1700, 0
        %1707 = vmatprep.subr.mxu0 0.0
        %1708 = vmatpush1.msra.mxu0 %v1702
        %1709 = vmatprep.subr.mxu0 0.0
        %1710 = vmatpush1.msra.mxu0 0.0
        %1711 = vmatprep.subr.mxu0 0.0
        %1712 = vmatpush1.msra.mxu0 0.0
        %1713 = vmatprep.subr.mxu0 0.0
        %1714 = vmatpush1.msra.mxu0 0.0
        %1715 = vmatprep.subr.mxu0 0.0
        %1716 = vmatpush1.msra.mxu0 0.0
        %1717 = vmatprep.subr.mxu0 0.0
        %1718 = vmatpush1.msra.mxu0 0.0
        %1719 = vmatprep.subr.mxu0 0.0
        %1720 = vmatpush1.msra.mxu0 0.0
        %1721 = vmatprep.subr.mxu0 0.0
        %1722 = vmatpush1.msra.mxu0 0.0
        %1723 = vmatprep.subr.mxu0 0.0
        %1724 = vmatpush1.msra.mxu0 0.0
        %1725 = vmatprep.subr.mxu0 0.0
        %1726 = vmatpush1.msra.mxu0 0.0
        %1727 = vmatprep.subr.mxu0 0.0
        %1728 = vmatpush1.msra.mxu0 0.0
        %1729 = vmatprep.subr.mxu0 0.0
        %1730 = vmatpush1.msra.mxu0 0.0
        %1731 = vmatprep.subr.mxu0 0.0
        %1732 = vmatpush1.msra.mxu0 0.0
        %1733 = vmatprep.subr.mxu0 0.0
        %1734 = vmatpush1.msra.mxu0 0.0
        %1735 = vmatprep.subr.mxu0 0.0
        %1736 = vmatpush1.msra.mxu0 0.0
        %1737 = vmatprep.subr.mxu0 0.0
        %1738 = vmatpush1.msra.mxu0 0.0
        %1739 = vmatprep.subr.mxu0 0.0
        %1740 = vmatpush1.msra.mxu0 0.0
        %1741 = vmatprep.subr.mxu0 0.0
        %1742 = vmatpush1.msra.mxu0 0.0
        %1743 = vmatprep.subr.mxu0 0.0
        %1744 = vmatpush1.msra.mxu0 0.0
        %1745 = vmatprep.subr.mxu0 0.0
        %1746 = vmatpush1.msra.mxu0 0.0
        %1747 = vmatprep.subr.mxu0 0.0
        %1748 = vmatpush1.msra.mxu0 0.0
        %1749 = vmatprep.subr.mxu0 0.0
        %1750 = vmatpush1.msra.mxu0 0.0
        %1751 = vmatprep.subr.mxu0 0.0
        %1752 = vmatpush1.msra.mxu0 0.0
        %1753 = vmatprep.subr.mxu0 0.0
        %1754 = vmatpush1.msra.mxu0 0.0
        %1755 = vmatprep.subr.mxu0 0.0
        %1756 = vmatpush1.msra.mxu0 0.0
        %1757 = vmatprep.subr.mxu0 0.0
        %1758 = vmatpush1.msra.mxu0 0.0
        %1759 = vmatprep.subr.mxu0 0.0
        %1760 = vmatpush1.msra.mxu0 0.0
        %1761 = vmatprep.subr.mxu0 0.0
        %1762 = vmatpush1.msra.mxu0 0.0
        %1763 = vmatprep.subr.mxu0 0.0
        %1764 = vmatpush1.msra.mxu0 0.0
        %1765 = vmatprep.subr.mxu0 0.0
        %1766 = vmatpush1.msra.mxu0 0.0
        %1767 = vmatprep.subr.mxu0 0.0
        %1768 = vmatpush1.msra.mxu0 0.0
        %1769 = vmatprep.subr.mxu0 0.0
        %1770 = vmatpush1.msra.mxu0 0.0
        %1771 = vmatprep.mubr.f32.mxu0 0.0
        %1772 = vmatmul.mubr.f32.gmra.mrb[0].mxu0 %v1705
        %v1773 = vpop.f32.mrb[0].mxu0
        %v1774 = vadd.f32 0.0, %v1773
        %v1775 = vpop.f32.mrb[0].mxu0
        %1776 = vdwg.mxu0
        %1777 = vrot.lane.b32.xlu0 %v1102, 104
        %v1778 = vpop.permute.xlu0 %1777
        %1779 = vrot.lane.b32.xlu0 %v1188, 104
        %v1780 = vpop.permute.xlu0 %1779
        %v1781 = vsel %vm1282, %v1778, 0
        %v1783 = vsel %vm1282, %v1780, 0
        %1785 = vmatprep.subr.mxu0 0.0
        %1786 = vmatpush1.xpose.msra.mxu0 %v1783
        %1787 = vmatprep.subr.mxu0 0.0
        %1788 = vmatpush1.xpose.msra.mxu0 0.0
        %1789 = vmatprep.subr.mxu0 0.0
        %1790 = vmatpush1.xpose.msra.mxu0 0.0
        %1791 = vmatprep.subr.mxu0 0.0
        %1792 = vmatpush1.xpose.msra.mxu0 0.0
        %1793 = vmatprep.subr.mxu0 0.0
        %1794 = vmatpush1.xpose.msra.mxu0 0.0
        %1795 = vmatprep.subr.mxu0 0.0
        %1796 = vmatpush1.xpose.msra.mxu0 0.0
        %1797 = vmatprep.subr.mxu0 0.0
        %1798 = vmatpush1.xpose.msra.mxu0 0.0
        %1799 = vmatprep.subr.mxu0 0.0
        %1800 = vmatpush1.xpose.msra.mxu0 0.0
        %1801 = vmatprep.subr.mxu0 0.0
        %1802 = vmatpush1.xpose.msra.mxu0 0.0
        %1803 = vmatprep.subr.mxu0 0.0
        %1804 = vmatpush1.xpose.msra.mxu0 0.0
        %1805 = vmatprep.subr.mxu0 0.0
        %1806 = vmatpush1.xpose.msra.mxu0 0.0
        %1807 = vmatprep.subr.mxu0 0.0
        %1808 = vmatpush1.xpose.msra.mxu0 0.0
        %1809 = vmatprep.subr.mxu0 0.0
        %1810 = vmatpush1.xpose.msra.mxu0 0.0
        %1811 = vmatprep.subr.mxu0 0.0
        %1812 = vmatpush1.xpose.msra.mxu0 0.0
        %1813 = vmatprep.subr.mxu0 0.0
        %1814 = vmatpush1.xpose.msra.mxu0 0.0
        %1815 = vmatprep.subr.mxu0 0.0
        %1816 = vmatpush1.xpose.msra.mxu0 0.0
        %1817 = vmatprep.subr.mxu0 0.0
        %1818 = vmatpush1.xpose.msra.mxu0 0.0
        %1819 = vmatprep.subr.mxu0 0.0
        %1820 = vmatpush1.xpose.msra.mxu0 0.0
        %1821 = vmatprep.subr.mxu0 0.0
        %1822 = vmatpush1.xpose.msra.mxu0 0.0
        %1823 = vmatprep.subr.mxu0 0.0
        %1824 = vmatpush1.xpose.msra.mxu0 0.0
        %1825 = vmatprep.subr.mxu0 0.0
        %1826 = vmatpush1.xpose.msra.mxu0 0.0
        %1827 = vmatprep.subr.mxu0 0.0
        %1828 = vmatpush1.xpose.msra.mxu0 0.0
        %1829 = vmatprep.subr.mxu0 0.0
        %1830 = vmatpush1.xpose.msra.mxu0 0.0
        %1831 = vmatprep.subr.mxu0 0.0
        %1832 = vmatpush1.xpose.msra.mxu0 0.0
        %1833 = vmatprep.subr.mxu0 0.0
        %1834 = vmatpush1.xpose.msra.mxu0 0.0
        %1835 = vmatprep.subr.mxu0 0.0
        %1836 = vmatpush1.xpose.msra.mxu0 0.0
        %1837 = vmatprep.subr.mxu0 0.0
        %1838 = vmatpush1.xpose.msra.mxu0 0.0
        %1839 = vmatprep.subr.mxu0 0.0
        %1840 = vmatpush1.xpose.msra.mxu0 0.0
        %1841 = vmatprep.subr.mxu0 0.0
        %1842 = vmatpush1.xpose.msra.mxu0 0.0
        %1843 = vmatprep.subr.mxu0 0.0
        %1844 = vmatpush1.xpose.msra.mxu0 0.0
        %1845 = vmatprep.subr.mxu0 0.0
        %1846 = vmatpush1.xpose.msra.mxu0 0.0
        %1847 = vmatprep.subr.mxu0 0.0
        %1848 = vmatpush1.xpose.msra.mxu0 0.0
        %1849 = vmatprep.mubr.f32.mxu0 0.0
        %1850 = vmatmul.mubr.f32.gmra.mrb[0].mxu0 %v1781
        %v1851 = vpop.f32.mrb[0].mxu0
        %v1852 = vadd.f32 0.0, %v1851
        %v1853 = vpop.f32.mrb[0].mxu0
        %1854 = vdwg.mxu0
        %v1855 = vmul.f32 %v1852, 0.35355338
        %v1856 = vsel %vm1282, %v1855, -inf
        %1857 = vmax.xlane.f32.xlu0 %v1856
        %v1858 = vpop.xlane.xlu0 %1857
        %v1859 = vsub.f32 %v1855, %v1858
        %v1860 = vmul.f32 %v1859, 1.442695
        %v1861 = vpow.pop %v1860
        %v1862 = vsel %vm1282, %v1861, 0.0
        %1863 = vadd.xlane.f32.xlu0 %v1862
        %v1864 = vpop.xlane.xlu0 %1863
        %v1865 = vrcp.pop %v1864
        %v1866 = vmul.f32 %v1861, %v1865
        %1867 = vrot.lane.b32.xlu0 %v1274, 104
        %v1868 = vpop.permute.xlu0 %1867
        %v1871 = vsel %vm1282, %v1866, 0
        %1873 = vmatprep.subr.mxu0 0.0
        %1874 = vmatpush1.msra.mxu0 %v1868
        %1875 = vmatprep.subr.mxu0 0.0
        %1876 = vmatpush1.msra.mxu0 0.0
        %1877 = vmatprep.subr.mxu0 0.0
        %1878 = vmatpush1.msra.mxu0 0.0
        %1879 = vmatprep.subr.mxu0 0.0
        %1880 = vmatpush1.msra.mxu0 0.0
        %1881 = vmatprep.subr.mxu0 0.0
        %1882 = vmatpush1.msra.mxu0 0.0
        %1883 = vmatprep.subr.mxu0 0.0
        %1884 = vmatpush1.msra.mxu0 0.0
        %1885 = vmatprep.subr.mxu0 0.0
        %1886 = vmatpush1.msra.mxu0 0.0
        %1887 = vmatprep.subr.mxu0 0.0
        %1888 = vmatpush1.msra.mxu0 0.0
        %1889 = vmatprep.subr.mxu0 0.0
        %1890 = vmatpush1.msra.mxu0 0.0
        %1891 = vmatprep.subr.mxu0 0.0
        %1892 = vmatpush1.msra.mxu0 0.0
        %1893 = vmatprep.subr.mxu0 0.0
        %1894 = vmatpush1.msra.mxu0 0.0
        %1895 = vmatprep.subr.mxu0 0.0
        %1896 = vmatpush1.msra.mxu0 0.0
        %1897 = vmatprep.subr.mxu0 0.0
        %1898 = vmatpush1.msra.mxu0 0.0
        %1899 = vmatprep.subr.mxu0 0.0
        %1900 = vmatpush1.msra.mxu0 0.0
        %1901 = vmatprep.subr.mxu0 0.0
        %1902 = vmatpush1.msra.mxu0 0.0
        %1903 = vmatprep.subr.mxu0 0.0
        %1904 = vmatpush1.msra.mxu0 0.0
        %1905 = vmatprep.subr.mxu0 0.0
        %1906 = vmatpush1.msra.mxu0 0.0
        %1907 = vmatprep.subr.mxu0 0.0
        %1908 = vmatpush1.msra.mxu0 0.0
        %1909 = vmatprep.subr.mxu0 0.0
        %1910 = vmatpush1.msra.mxu0 0.0
        %1911 = vmatprep.subr.mxu0 0.0
        %1912 = vmatpush1.msra.mxu0 0.0
        %1913 = vmatprep.subr.mxu0 0.0
        %1914 = vmatpush1.msra.mxu0 0.0
        %1915 = vmatprep.subr.mxu0 0.0
        %1916 = vmatpush1.msra.mxu0 0.0
        %1917 = vmatprep.subr.mxu0 0.0
        %1918 = vmatpush1.msra.mxu0 0.0
        %1919 = vmatprep.subr.mxu0 0.0
        %1920 = vmatpush1.msra.mxu0 0.0
        %1921 = vmatprep.subr.mxu0 0.0
        %1922 = vmatpush1.msra.mxu0 0.0
        %1923 = vmatprep.subr.mxu0 0.0
        %1924 = vmatpush1.msra.mxu0 0.0
        %1925 = vmatprep.subr.mxu0 0.0
        %1926 = vmatpush1.msra.mxu0 0.0
        %1927 = vmatprep.subr.mxu0 0.0
        %1928 = vmatpush1.msra.mxu0 0.0
        %1929 = vmatprep.subr.mxu0 0.0
        %1930 = vmatpush1.msra.mxu0 0.0
        %1931 = vmatprep.subr.mxu0 0.0
        %1932 = vmatpush1.msra.mxu0 0.0
        %1933 = vmatprep.subr.mxu0 0.0
        %1934 = vmatpush1.msra.mxu0 0.0
        %1935 = vmatprep.subr.mxu0 0.0
        %1936 = vmatpush1.msra.mxu0 0.0
        %1937 = vmatprep.mubr.f32.mxu0 0.0
        %1938 = vmatmul.mubr.f32.gmra.mrb[0].mxu0 %v1871
        %v1939 = vpop.f32.mrb[0].mxu0
        %v1940 = vadd.f32 0.0, %v1939
        %v1941 = vpop.f32.mrb[0].mxu0
        %1942 = vdwg.mxu0
        %1944 = vrot.lane.b32.xlu0 %v1608, 8
        %v1945 = vpop.permute.xlu0 %1944
        %1948 = vrot.lane.b32.xlu0 %v1774, 16
        %v1949 = vpop.permute.xlu0 %1948
        %1952 = vrot.lane.b32.xlu0 %v1940, 24
        %v1953 = vpop.permute.xlu0 %1952
        %v1955 = vsel %vm1282, %v1441, %v1945
        %vm1956 = vcmask 130048
        %v1957 = vsel %vm1956, %v1955, %v1949
        %vm1958 = vcmask 195584
        %v1959 = vsel %vm1958, %v1957, %v1953
        %v1961 = vsel %vm1282, %v1107, 0
        %v1964 = vsel %vm1282, %v1193, 0
        %1966 = vmatprep.subr.mxu0 0.0
        %1967 = vmatpush1.xpose.msra.mxu0 %v1964
        %1968 = vmatprep.subr.mxu0 0.0
        %1969 = vmatpush1.xpose.msra.mxu0 0.0
        %1970 = vmatprep.subr.mxu0 0.0
        %1971 = vmatpush1.xpose.msra.mxu0 0.0
        %1972 = vmatprep.subr.mxu0 0.0
        %1973 = vmatpush1.xpose.msra.mxu0 0.0
        %1974 = vmatprep.subr.mxu0 0.0
        %1975 = vmatpush1.xpose.msra.mxu0 0.0
        %1976 = vmatprep.subr.mxu0 0.0
        %1977 = vmatpush1.xpose.msra.mxu0 0.0
        %1978 = vmatprep.subr.mxu0 0.0
        %1979 = vmatpush1.xpose.msra.mxu0 0.0
        %1980 = vmatprep.subr.mxu0 0.0
        %1981 = vmatpush1.xpose.msra.mxu0 0.0
        %1982 = vmatprep.subr.mxu0 0.0
        %1983 = vmatpush1.xpose.msra.mxu0 0.0
        %1984 = vmatprep.subr.mxu0 0.0
        %1985 = vmatpush1.xpose.msra.mxu0 0.0
        %1986 = vmatprep.subr.mxu0 0.0
        %1987 = vmatpush1.xpose.msra.mxu0 0.0
        %1988 = vmatprep.subr.mxu0 0.0
        %1989 = vmatpush1.xpose.msra.mxu0 0.0
        %1990 = vmatprep.subr.mxu0 0.0
        %1991 = vmatpush1.xpose.msra.mxu0 0.0
        %1992 = vmatprep.subr.mxu0 0.0
        %1993 = vmatpush1.xpose.msra.mxu0 0.0
        %1994 = vmatprep.subr.mxu0 0.0
        %1995 = vmatpush1.xpose.msra.mxu0 0.0
        %1996 = vmatprep.subr.mxu0 0.0
        %1997 = vmatpush1.xpose.msra.mxu0 0.0
        %1998 = vmatprep.subr.mxu0 0.0
        %1999 = vmatpush1.xpose.msra.mxu0 0.0
        %2000 = vmatprep.subr.mxu0 0.0
        %2001 = vmatpush1.xpose.msra.mxu0 0.0
        %2002 = vmatprep.subr.mxu0 0.0
        %2003 = vmatpush1.xpose.msra.mxu0 0.0
        %2004 = vmatprep.subr.mxu0 0.0
        %2005 = vmatpush1.xpose.msra.mxu0 0.0
        %2006 = vmatprep.subr.mxu0 0.0
        %2007 = vmatpush1.xpose.msra.mxu0 0.0
        %2008 = vmatprep.subr.mxu0 0.0
        %2009 = vmatpush1.xpose.msra.mxu0 0.0
        %2010 = vmatprep.subr.mxu0 0.0
        %2011 = vmatpush1.xpose.msra.mxu0 0.0
        %2012 = vmatprep.subr.mxu0 0.0
        %2013 = vmatpush1.xpose.msra.mxu0 0.0
        %2014 = vmatprep.subr.mxu0 0.0
        %2015 = vmatpush1.xpose.msra.mxu0 0.0
        %2016 = vmatprep.subr.mxu0 0.0
        %2017 = vmatpush1.xpose.msra.mxu0 0.0
        %2018 = vmatprep.subr.mxu0 0.0
        %2019 = vmatpush1.xpose.msra.mxu0 0.0
        %2020 = vmatprep.subr.mxu0 0.0
        %2021 = vmatpush1.xpose.msra.mxu0 0.0
        %2022 = vmatprep.subr.mxu0 0.0
        %2023 = vmatpush1.xpose.msra.mxu0 0.0
        %2024 = vmatprep.subr.mxu0 0.0
        %2025 = vmatpush1.xpose.msra.mxu0 0.0
        %2026 = vmatprep.subr.mxu0 0.0
        %2027 = vmatpush1.xpose.msra.mxu0 0.0
        %2028 = vmatprep.subr.mxu0 0.0
        %2029 = vmatpush1.xpose.msra.mxu0 0.0
        %2030 = vmatprep.mubr.f32.mxu0 0.0
        %2031 = vmatmul.mubr.f32.gmra.mrb[0].mxu0 %v1961
        %v2032 = vpop.f32.mrb[0].mxu0
        %v2033 = vadd.f32 0.0, %v2032
        %v2034 = vpop.f32.mrb[0].mxu0
        %2035 = vdwg.mxu0
        %v2036 = vmul.f32 %v2033, 0.35355338
        %v2037 = vsel %vm1282, %v2036, -inf
        %2038 = vmax.xlane.f32.xlu0 %v2037
        %v2039 = vpop.xlane.xlu0 %2038
        %v2040 = vsub.f32 %v2036, %v2039
        %v2041 = vmul.f32 %v2040, 1.442695
        %v2042 = vpow.pop %v2041
        %v2043 = vsel %vm1282, %v2042, 0.0
        %2044 = vadd.xlane.f32.xlu0 %v2043
        %v2045 = vpop.xlane.xlu0 %2044
        %v2046 = vrcp.pop %v2045
        %v2047 = vmul.f32 %v2042, %v2046
        %v2049 = vsel %vm1282, %v2047, 0
        %2051 = vmatprep.subr.mxu0 0.0
        %2052 = vmatpush1.msra.mxu0 %v1279
        %2053 = vmatprep.subr.mxu0 0.0
        %2054 = vmatpush1.msra.mxu0 0.0
        %2055 = vmatprep.subr.mxu0 0.0
        %2056 = vmatpush1.msra.mxu0 0.0
        %2057 = vmatprep.subr.mxu0 0.0
        %2058 = vmatpush1.msra.mxu0 0.0
        %2059 = vmatprep.subr.mxu0 0.0
        %2060 = vmatpush1.msra.mxu0 0.0
        %2061 = vmatprep.subr.mxu0 0.0
        %2062 = vmatpush1.msra.mxu0 0.0
        %2063 = vmatprep.subr.mxu0 0.0
        %2064 = vmatpush1.msra.mxu0 0.0
        %2065 = vmatprep.subr.mxu0 0.0
        %2066 = vmatpush1.msra.mxu0 0.0
        %2067 = vmatprep.subr.mxu0 0.0
        %2068 = vmatpush1.msra.mxu0 0.0
        %2069 = vmatprep.subr.mxu0 0.0
        %2070 = vmatpush1.msra.mxu0 0.0
        %2071 = vmatprep.subr.mxu0 0.0
        %2072 = vmatpush1.msra.mxu0 0.0
        %2073 = vmatprep.subr.mxu0 0.0
        %2074 = vmatpush1.msra.mxu0 0.0
        %2075 = vmatprep.subr.mxu0 0.0
        %2076 = vmatpush1.msra.mxu0 0.0
        %2077 = vmatprep.subr.mxu0 0.0
        %2078 = vmatpush1.msra.mxu0 0.0
        %2079 = vmatprep.subr.mxu0 0.0
        %2080 = vmatpush1.msra.mxu0 0.0
        %2081 = vmatprep.subr.mxu0 0.0
        %2082 = vmatpush1.msra.mxu0 0.0
        %2083 = vmatprep.subr.mxu0 0.0
        %2084 = vmatpush1.msra.mxu0 0.0
        %2085 = vmatprep.subr.mxu0 0.0
        %2086 = vmatpush1.msra.mxu0 0.0
        %2087 = vmatprep.subr.mxu0 0.0
        %2088 = vmatpush1.msra.mxu0 0.0
        %2089 = vmatprep.subr.mxu0 0.0
        %2090 = vmatpush1.msra.mxu0 0.0
        %2091 = vmatprep.subr.mxu0 0.0
        %2092 = vmatpush1.msra.mxu0 0.0
        %2093 = vmatprep.subr.mxu0 0.0
        %2094 = vmatpush1.msra.mxu0 0.0
        %2095 = vmatprep.subr.mxu0 0.0
        %2096 = vmatpush1.msra.mxu0 0.0
        %2097 = vmatprep.subr.mxu0 0.0
        %2098 = vmatpush1.msra.mxu0 0.0
        %2099 = vmatprep.subr.mxu0 0.0
        %2100 = vmatpush1.msra.mxu0 0.0
        %2101 = vmatprep.subr.mxu0 0.0
        %2102 = vmatpush1.msra.mxu0 0.0
        %2103 = vmatprep.subr.mxu0 0.0
        %2104 = vmatpush1.msra.mxu0 0.0
        %2105 = vmatprep.subr.mxu0 0.0
        %2106 = vmatpush1.msra.mxu0 0.0
        %2107 = vmatprep.subr.mxu0 0.0
        %2108 = vmatpush1.msra.mxu0 0.0
        %2109 = vmatprep.subr.mxu0 0.0
        %2110 = vmatpush1.msra.mxu0 0.0
        %2111 = vmatprep.subr.mxu0 0.0
        %2112 = vmatpush1.msra.mxu0 0.0
        %2113 = vmatprep.subr.mxu0 0.0
        %2114 = vmatpush1.msra.mxu0 0.0
        %2115 = vmatprep.mubr.f32.mxu0 0.0
        %2116 = vmatmul.mubr.f32.gmra.mrb[0].mxu0 %v2049
        %v2117 = vpop.f32.mrb[0].mxu0
        %v2118 = vadd.f32 0.0, %v2117
        %v2119 = vpop.f32.mrb[0].mxu0
        %2120 = vdwg.mxu0
        %2121 = vrot.lane.b32.xlu0 %v1107, 120
        %v2122 = vpop.permute.xlu0 %2121
        %2123 = vrot.lane.b32.xlu0 %v1193, 120
        %v2124 = vpop.permute.xlu0 %2123
        %v2125 = vsel %vm1282, %v2122, 0
        %v2127 = vsel %vm1282, %v2124, 0
        %2129 = vmatprep.subr.mxu0 0.0
        %2130 = vmatpush1.xpose.msra.mxu0 %v2127
        %2131 = vmatprep.subr.mxu0 0.0
        %2132 = vmatpush1.xpose.msra.mxu0 0.0
        %2133 = vmatprep.subr.mxu0 0.0
        %2134 = vmatpush1.xpose.msra.mxu0 0.0
        %2135 = vmatprep.subr.mxu0 0.0
        %2136 = vmatpush1.xpose.msra.mxu0 0.0
        %2137 = vmatprep.subr.mxu0 0.0
        %2138 = vmatpush1.xpose.msra.mxu0 0.0
        %2139 = vmatprep.subr.mxu0 0.0
        %2140 = vmatpush1.xpose.msra.mxu0 0.0
        %2141 = vmatprep.subr.mxu0 0.0
        %2142 = vmatpush1.xpose.msra.mxu0 0.0
        %2143 = vmatprep.subr.mxu0 0.0
        %2144 = vmatpush1.xpose.msra.mxu0 0.0
        %2145 = vmatprep.subr.mxu0 0.0
        %2146 = vmatpush1.xpose.msra.mxu0 0.0
        %2147 = vmatprep.subr.mxu0 0.0
        %2148 = vmatpush1.xpose.msra.mxu0 0.0
        %2149 = vmatprep.subr.mxu0 0.0
        %2150 = vmatpush1.xpose.msra.mxu0 0.0
        %2151 = vmatprep.subr.mxu0 0.0
        %2152 = vmatpush1.xpose.msra.mxu0 0.0
        %2153 = vmatprep.subr.mxu0 0.0
        %2154 = vmatpush1.xpose.msra.mxu0 0.0
        %2155 = vmatprep.subr.mxu0 0.0
        %2156 = vmatpush1.xpose.msra.mxu0 0.0
        %2157 = vmatprep.subr.mxu0 0.0
        %2158 = vmatpush1.xpose.msra.mxu0 0.0
        %2159 = vmatprep.subr.mxu0 0.0
        %2160 = vmatpush1.xpose.msra.mxu0 0.0
        %2161 = vmatprep.subr.mxu0 0.0
        %2162 = vmatpush1.xpose.msra.mxu0 0.0
        %2163 = vmatprep.subr.mxu0 0.0
        %2164 = vmatpush1.xpose.msra.mxu0 0.0
        %2165 = vmatprep.subr.mxu0 0.0
        %2166 = vmatpush1.xpose.msra.mxu0 0.0
        %2167 = vmatprep.subr.mxu0 0.0
        %2168 = vmatpush1.xpose.msra.mxu0 0.0
        %2169 = vmatprep.subr.mxu0 0.0
        %2170 = vmatpush1.xpose.msra.mxu0 0.0
        %2171 = vmatprep.subr.mxu0 0.0
        %2172 = vmatpush1.xpose.msra.mxu0 0.0
        %2173 = vmatprep.subr.mxu0 0.0
        %2174 = vmatpush1.xpose.msra.mxu0 0.0
        %2175 = vmatprep.subr.mxu0 0.0
        %2176 = vmatpush1.xpose.msra.mxu0 0.0
        %2177 = vmatprep.subr.mxu0 0.0
        %2178 = vmatpush1.xpose.msra.mxu0 0.0
        %2179 = vmatprep.subr.mxu0 0.0
        %2180 = vmatpush1.xpose.msra.mxu0 0.0
        %2181 = vmatprep.subr.mxu0 0.0
        %2182 = vmatpush1.xpose.msra.mxu0 0.0
        %2183 = vmatprep.subr.mxu0 0.0
        %2184 = vmatpush1.xpose.msra.mxu0 0.0
        %2185 = vmatprep.subr.mxu0 0.0
        %2186 = vmatpush1.xpose.msra.mxu0 0.0
        %2187 = vmatprep.subr.mxu0 0.0
        %2188 = vmatpush1.xpose.msra.mxu0 0.0
        %2189 = vmatprep.subr.mxu0 0.0
        %2190 = vmatpush1.xpose.msra.mxu0 0.0
        %2191 = vmatprep.subr.mxu0 0.0
        %2192 = vmatpush1.xpose.msra.mxu0 0.0
        %2193 = vmatprep.mubr.f32.mxu0 0.0
        %2194 = vmatmul.mubr.f32.gmra.mrb[0].mxu0 %v2125
        %v2195 = vpop.f32.mrb[0].mxu0
        %v2196 = vadd.f32 0.0, %v2195
        %v2197 = vpop.f32.mrb[0].mxu0
        %2198 = vdwg.mxu0
        %v2199 = vmul.f32 %v2196, 0.35355338
        %v2200 = vsel %vm1282, %v2199, -inf
        %2201 = vmax.xlane.f32.xlu0 %v2200
        %v2202 = vpop.xlane.xlu0 %2201
        %v2203 = vsub.f32 %v2199, %v2202
        %v2204 = vmul.f32 %v2203, 1.442695
        %v2205 = vpow.pop %v2204
        %v2206 = vsel %vm1282, %v2205, 0.0
        %2207 = vadd.xlane.f32.xlu0 %v2206
        %v2208 = vpop.xlane.xlu0 %2207
        %v2209 = vrcp.pop %v2208
        %v2210 = vmul.f32 %v2205, %v2209
        %2212 = vrot.lane.b32.xlu0 %v1279, 120
        %v2213 = vpop.permute.xlu0 %2212
        %v2216 = vsel %vm1282, %v2210, 0
        %2218 = vmatprep.subr.mxu0 0.0
        %2219 = vmatpush1.msra.mxu0 %v2213
        %2220 = vmatprep.subr.mxu0 0.0
        %2221 = vmatpush1.msra.mxu0 0.0
        %2222 = vmatprep.subr.mxu0 0.0
        %2223 = vmatpush1.msra.mxu0 0.0
        %2224 = vmatprep.subr.mxu0 0.0
        %2225 = vmatpush1.msra.mxu0 0.0
        %2226 = vmatprep.subr.mxu0 0.0
        %2227 = vmatpush1.msra.mxu0 0.0
        %2228 = vmatprep.subr.mxu0 0.0
        %2229 = vmatpush1.msra.mxu0 0.0
        %2230 = vmatprep.subr.mxu0 0.0
        %2231 = vmatpush1.msra.mxu0 0.0
        %2232 = vmatprep.subr.mxu0 0.0
        %2233 = vmatpush1.msra.mxu0 0.0
        %2234 = vmatprep.subr.mxu0 0.0
        %2235 = vmatpush1.msra.mxu0 0.0
        %2236 = vmatprep.subr.mxu0 0.0
        %2237 = vmatpush1.msra.mxu0 0.0
        %2238 = vmatprep.subr.mxu0 0.0
        %2239 = vmatpush1.msra.mxu0 0.0
        %2240 = vmatprep.subr.mxu0 0.0
        %2241 = vmatpush1.msra.mxu0 0.0
        %2242 = vmatprep.subr.mxu0 0.0
        %2243 = vmatpush1.msra.mxu0 0.0
        %2244 = vmatprep.subr.mxu0 0.0
        %2245 = vmatpush1.msra.mxu0 0.0
        %2246 = vmatprep.subr.mxu0 0.0
        %2247 = vmatpush1.msra.mxu0 0.0
        %2248 = vmatprep.subr.mxu0 0.0
        %2249 = vmatpush1.msra.mxu0 0.0
        %2250 = vmatprep.subr.mxu0 0.0
        %2251 = vmatpush1.msra.mxu0 0.0
        %2252 = vmatprep.subr.mxu0 0.0
        %2253 = vmatpush1.msra.mxu0 0.0
        %2254 = vmatprep.subr.mxu0 0.0
        %2255 = vmatpush1.msra.mxu0 0.0
        %2256 = vmatprep.subr.mxu0 0.0
        %2257 = vmatpush1.msra.mxu0 0.0
        %2258 = vmatprep.subr.mxu0 0.0
        %2259 = vmatpush1.msra.mxu0 0.0
        %2260 = vmatprep.subr.mxu0 0.0
        %2261 = vmatpush1.msra.mxu0 0.0
        %2262 = vmatprep.subr.mxu0 0.0
        %2263 = vmatpush1.msra.mxu0 0.0
        %2264 = vmatprep.subr.mxu0 0.0
        %2265 = vmatpush1.msra.mxu0 0.0
        %2266 = vmatprep.subr.mxu0 0.0
        %2267 = vmatpush1.msra.mxu0 0.0
        %2268 = vmatprep.subr.mxu0 0.0
        %2269 = vmatpush1.msra.mxu0 0.0
        %2270 = vmatprep.subr.mxu0 0.0
        %2271 = vmatpush1.msra.mxu0 0.0
        %2272 = vmatprep.subr.mxu0 0.0
        %2273 = vmatpush1.msra.mxu0 0.0
        %2274 = vmatprep.subr.mxu0 0.0
        %2275 = vmatpush1.msra.mxu0 0.0
        %2276 = vmatprep.subr.mxu0 0.0
        %2277 = vmatpush1.msra.mxu0 0.0
        %2278 = vmatprep.subr.mxu0 0.0
        %2279 = vmatpush1.msra.mxu0 0.0
        %2280 = vmatprep.subr.mxu0 0.0
        %2281 = vmatpush1.msra.mxu0 0.0
        %2282 = vmatprep.mubr.f32.mxu0 0.0
        %2283 = vmatmul.mubr.f32.gmra.mrb[0].mxu0 %v2216
        %v2284 = vpop.f32.mrb[0].mxu0
        %v2285 = vadd.f32 0.0, %v2284
        %v2286 = vpop.f32.mrb[0].mxu0
        %2287 = vdwg.mxu0
        %2288 = vrot.lane.b32.xlu0 %v1107, 112
        %v2289 = vpop.permute.xlu0 %2288
        %2290 = vrot.lane.b32.xlu0 %v1193, 112
        %v2291 = vpop.permute.xlu0 %2290
        %v2292 = vsel %vm1282, %v2289, 0
        %v2294 = vsel %vm1282, %v2291, 0
        %2296 = vmatprep.subr.mxu0 0.0
        %2297 = vmatpush1.xpose.msra.mxu0 %v2294
        %2298 = vmatprep.subr.mxu0 0.0
        %2299 = vmatpush1.xpose.msra.mxu0 0.0
        %2300 = vmatprep.subr.mxu0 0.0
        %2301 = vmatpush1.xpose.msra.mxu0 0.0
        %2302 = vmatprep.subr.mxu0 0.0
        %2303 = vmatpush1.xpose.msra.mxu0 0.0
        %2304 = vmatprep.subr.mxu0 0.0
        %2305 = vmatpush1.xpose.msra.mxu0 0.0
        %2306 = vmatprep.subr.mxu0 0.0
        %2307 = vmatpush1.xpose.msra.mxu0 0.0
        %2308 = vmatprep.subr.mxu0 0.0
        %2309 = vmatpush1.xpose.msra.mxu0 0.0
        %2310 = vmatprep.subr.mxu0 0.0
        %2311 = vmatpush1.xpose.msra.mxu0 0.0
        %2312 = vmatprep.subr.mxu0 0.0
        %2313 = vmatpush1.xpose.msra.mxu0 0.0
        %2314 = vmatprep.subr.mxu0 0.0
        %2315 = vmatpush1.xpose.msra.mxu0 0.0
        %2316 = vmatprep.subr.mxu0 0.0
        %2317 = vmatpush1.xpose.msra.mxu0 0.0
        %2318 = vmatprep.subr.mxu0 0.0
        %2319 = vmatpush1.xpose.msra.mxu0 0.0
        %2320 = vmatprep.subr.mxu0 0.0
        %2321 = vmatpush1.xpose.msra.mxu0 0.0
        %2322 = vmatprep.subr.mxu0 0.0
        %2323 = vmatpush1.xpose.msra.mxu0 0.0
        %2324 = vmatprep.subr.mxu0 0.0
        %2325 = vmatpush1.xpose.msra.mxu0 0.0
        %2326 = vmatprep.subr.mxu0 0.0
        %2327 = vmatpush1.xpose.msra.mxu0 0.0
        %2328 = vmatprep.subr.mxu0 0.0
        %2329 = vmatpush1.xpose.msra.mxu0 0.0
        %2330 = vmatprep.subr.mxu0 0.0
        %2331 = vmatpush1.xpose.msra.mxu0 0.0
        %2332 = vmatprep.subr.mxu0 0.0
        %2333 = vmatpush1.xpose.msra.mxu0 0.0
        %2334 = vmatprep.subr.mxu0 0.0
        %2335 = vmatpush1.xpose.msra.mxu0 0.0
        %2336 = vmatprep.subr.mxu0 0.0
        %2337 = vmatpush1.xpose.msra.mxu0 0.0
        %2338 = vmatprep.subr.mxu0 0.0
        %2339 = vmatpush1.xpose.msra.mxu0 0.0
        %2340 = vmatprep.subr.mxu0 0.0
        %2341 = vmatpush1.xpose.msra.mxu0 0.0
        %2342 = vmatprep.subr.mxu0 0.0
        %2343 = vmatpush1.xpose.msra.mxu0 0.0
        %2344 = vmatprep.subr.mxu0 0.0
        %2345 = vmatpush1.xpose.msra.mxu0 0.0
        %2346 = vmatprep.subr.mxu0 0.0
        %2347 = vmatpush1.xpose.msra.mxu0 0.0
        %2348 = vmatprep.subr.mxu0 0.0
        %2349 = vmatpush1.xpose.msra.mxu0 0.0
        %2350 = vmatprep.subr.mxu0 0.0
        %2351 = vmatpush1.xpose.msra.mxu0 0.0
        %2352 = vmatprep.subr.mxu0 0.0
        %2353 = vmatpush1.xpose.msra.mxu0 0.0
        %2354 = vmatprep.subr.mxu0 0.0
        %2355 = vmatpush1.xpose.msra.mxu0 0.0
        %2356 = vmatprep.subr.mxu0 0.0
        %2357 = vmatpush1.xpose.msra.mxu0 0.0
        %2358 = vmatprep.subr.mxu0 0.0
        %2359 = vmatpush1.xpose.msra.mxu0 0.0
        %2360 = vmatprep.mubr.f32.mxu0 0.0
        %2361 = vmatmul.mubr.f32.gmra.mrb[0].mxu0 %v2292
        %v2362 = vpop.f32.mrb[0].mxu0
        %v2363 = vadd.f32 0.0, %v2362
        %v2364 = vpop.f32.mrb[0].mxu0
        %2365 = vdwg.mxu0
        %v2366 = vmul.f32 %v2363, 0.35355338
        %v2367 = vsel %vm1282, %v2366, -inf
        %2368 = vmax.xlane.f32.xlu0 %v2367
        %v2369 = vpop.xlane.xlu0 %2368
        %v2370 = vsub.f32 %v2366, %v2369
        %v2371 = vmul.f32 %v2370, 1.442695
        %v2372 = vpow.pop %v2371
        %v2373 = vsel %vm1282, %v2372, 0.0
        %2374 = vadd.xlane.f32.xlu0 %v2373
        %v2375 = vpop.xlane.xlu0 %2374
        %v2376 = vrcp.pop %v2375
        %v2377 = vmul.f32 %v2372, %v2376
        %2378 = vrot.lane.b32.xlu0 %v1279, 112
        %v2379 = vpop.permute.xlu0 %2378
        %v2382 = vsel %vm1282, %v2377, 0
        %2384 = vmatprep.subr.mxu0 0.0
        %2385 = vmatpush1.msra.mxu0 %v2379
        %2386 = vmatprep.subr.mxu0 0.0
        %2387 = vmatpush1.msra.mxu0 0.0
        %2388 = vmatprep.subr.mxu0 0.0
        %2389 = vmatpush1.msra.mxu0 0.0
        %2390 = vmatprep.subr.mxu0 0.0
        %2391 = vmatpush1.msra.mxu0 0.0
        %2392 = vmatprep.subr.mxu0 0.0
        %2393 = vmatpush1.msra.mxu0 0.0
        %2394 = vmatprep.subr.mxu0 0.0
        %2395 = vmatpush1.msra.mxu0 0.0
        %2396 = vmatprep.subr.mxu0 0.0
        %2397 = vmatpush1.msra.mxu0 0.0
        %2398 = vmatprep.subr.mxu0 0.0
        %2399 = vmatpush1.msra.mxu0 0.0
        %2400 = vmatprep.subr.mxu0 0.0
        %2401 = vmatpush1.msra.mxu0 0.0
        %2402 = vmatprep.subr.mxu0 0.0
        %2403 = vmatpush1.msra.mxu0 0.0
        %2404 = vmatprep.subr.mxu0 0.0
        %2405 = vmatpush1.msra.mxu0 0.0
        %2406 = vmatprep.subr.mxu0 0.0
        %2407 = vmatpush1.msra.mxu0 0.0
        %2408 = vmatprep.subr.mxu0 0.0
        %2409 = vmatpush1.msra.mxu0 0.0
        %2410 = vmatprep.subr.mxu0 0.0
        %2411 = vmatpush1.msra.mxu0 0.0
        %2412 = vmatprep.subr.mxu0 0.0
        %2413 = vmatpush1.msra.mxu0 0.0
        %2414 = vmatprep.subr.mxu0 0.0
        %2415 = vmatpush1.msra.mxu0 0.0
        %2416 = vmatprep.subr.mxu0 0.0
        %2417 = vmatpush1.msra.mxu0 0.0
        %2418 = vmatprep.subr.mxu0 0.0
        %2419 = vmatpush1.msra.mxu0 0.0
        %2420 = vmatprep.subr.mxu0 0.0
        %2421 = vmatpush1.msra.mxu0 0.0
        %2422 = vmatprep.subr.mxu0 0.0
        %2423 = vmatpush1.msra.mxu0 0.0
        %2424 = vmatprep.subr.mxu0 0.0
        %2425 = vmatpush1.msra.mxu0 0.0
        %2426 = vmatprep.subr.mxu0 0.0
        %2427 = vmatpush1.msra.mxu0 0.0
        %2428 = vmatprep.subr.mxu0 0.0
        %2429 = vmatpush1.msra.mxu0 0.0
        %2430 = vmatprep.subr.mxu0 0.0
        %2431 = vmatpush1.msra.mxu0 0.0
        %2432 = vmatprep.subr.mxu0 0.0
        %2433 = vmatpush1.msra.mxu0 0.0
        %2434 = vmatprep.subr.mxu0 0.0
        %2435 = vmatpush1.msra.mxu0 0.0
        %2436 = vmatprep.subr.mxu0 0.0
        %2437 = vmatpush1.msra.mxu0 0.0
        %2438 = vmatprep.subr.mxu0 0.0
        %2439 = vmatpush1.msra.mxu0 0.0
        %2440 = vmatprep.subr.mxu0 0.0
        %2441 = vmatpush1.msra.mxu0 0.0
        %2442 = vmatprep.subr.mxu0 0.0
        %2443 = vmatpush1.msra.mxu0 0.0
        %2444 = vmatprep.subr.mxu0 0.0
        %2445 = vmatpush1.msra.mxu0 0.0
        %2446 = vmatprep.subr.mxu0 0.0
        %2447 = vmatpush1.msra.mxu0 0.0
        %2448 = vmatprep.mubr.f32.mxu0 0.0
        %2449 = vmatmul.mubr.f32.gmra.mrb[0].mxu0 %v2382
        %v2450 = vpop.f32.mrb[0].mxu0
        %v2451 = vadd.f32 0.0, %v2450
        %v2452 = vpop.f32.mrb[0].mxu0
        %2453 = vdwg.mxu0
        %2454 = vrot.lane.b32.xlu0 %v1107, 104
        %v2455 = vpop.permute.xlu0 %2454
        %2456 = vrot.lane.b32.xlu0 %v1193, 104
        %v2457 = vpop.permute.xlu0 %2456
        %v2458 = vsel %vm1282, %v2455, 0
        %v2460 = vsel %vm1282, %v2457, 0
        %2462 = vmatprep.subr.mxu0 0.0
        %2463 = vmatpush1.xpose.msra.mxu0 %v2460
        %2464 = vmatprep.subr.mxu0 0.0
        %2465 = vmatpush1.xpose.msra.mxu0 0.0
        %2466 = vmatprep.subr.mxu0 0.0
        %2467 = vmatpush1.xpose.msra.mxu0 0.0
        %2468 = vmatprep.subr.mxu0 0.0
        %2469 = vmatpush1.xpose.msra.mxu0 0.0
        %2470 = vmatprep.subr.mxu0 0.0
        %2471 = vmatpush1.xpose.msra.mxu0 0.0
        %2472 = vmatprep.subr.mxu0 0.0
        %2473 = vmatpush1.xpose.msra.mxu0 0.0
        %2474 = vmatprep.subr.mxu0 0.0
        %2475 = vmatpush1.xpose.msra.mxu0 0.0
        %2476 = vmatprep.subr.mxu0 0.0
        %2477 = vmatpush1.xpose.msra.mxu0 0.0
        %2478 = vmatprep.subr.mxu0 0.0
        %2479 = vmatpush1.xpose.msra.mxu0 0.0
        %2480 = vmatprep.subr.mxu0 0.0
        %2481 = vmatpush1.xpose.msra.mxu0 0.0
        %2482 = vmatprep.subr.mxu0 0.0
        %2483 = vmatpush1.xpose.msra.mxu0 0.0
        %2484 = vmatprep.subr.mxu0 0.0
        %2485 = vmatpush1.xpose.msra.mxu0 0.0
        %2486 = vmatprep.subr.mxu0 0.0
        %2487 = vmatpush1.xpose.msra.mxu0 0.0
        %2488 = vmatprep.subr.mxu0 0.0
        %2489 = vmatpush1.xpose.msra.mxu0 0.0
        %2490 = vmatprep.subr.mxu0 0.0
        %2491 = vmatpush1.xpose.msra.mxu0 0.0
        %2492 = vmatprep.subr.mxu0 0.0
        %2493 = vmatpush1.xpose.msra.mxu0 0.0
        %2494 = vmatprep.subr.mxu0 0.0
        %2495 = vmatpush1.xpose.msra.mxu0 0.0
        %2496 = vmatprep.subr.mxu0 0.0
        %2497 = vmatpush1.xpose.msra.mxu0 0.0
        %2498 = vmatprep.subr.mxu0 0.0
        %2499 = vmatpush1.xpose.msra.mxu0 0.0
        %2500 = vmatprep.subr.mxu0 0.0
        %2501 = vmatpush1.xpose.msra.mxu0 0.0
        %2502 = vmatprep.subr.mxu0 0.0
        %2503 = vmatpush1.xpose.msra.mxu0 0.0
        %2504 = vmatprep.subr.mxu0 0.0
        %2505 = vmatpush1.xpose.msra.mxu0 0.0
        %2506 = vmatprep.subr.mxu0 0.0
        %2507 = vmatpush1.xpose.msra.mxu0 0.0
        %2508 = vmatprep.subr.mxu0 0.0
        %2509 = vmatpush1.xpose.msra.mxu0 0.0
        %2510 = vmatprep.subr.mxu0 0.0
        %2511 = vmatpush1.xpose.msra.mxu0 0.0
        %2512 = vmatprep.subr.mxu0 0.0
        %2513 = vmatpush1.xpose.msra.mxu0 0.0
        %2514 = vmatprep.subr.mxu0 0.0
        %2515 = vmatpush1.xpose.msra.mxu0 0.0
        %2516 = vmatprep.subr.mxu0 0.0
        %2517 = vmatpush1.xpose.msra.mxu0 0.0
        %2518 = vmatprep.subr.mxu0 0.0
        %2519 = vmatpush1.xpose.msra.mxu0 0.0
        %2520 = vmatprep.subr.mxu0 0.0
        %2521 = vmatpush1.xpose.msra.mxu0 0.0
        %2522 = vmatprep.subr.mxu0 0.0
        %2523 = vmatpush1.xpose.msra.mxu0 0.0
        %2524 = vmatprep.subr.mxu0 0.0
        %2525 = vmatpush1.xpose.msra.mxu0 0.0
        %2526 = vmatprep.mubr.f32.mxu0 0.0
        %2527 = vmatmul.mubr.f32.gmra.mrb[0].mxu0 %v2458
        %v2528 = vpop.f32.mrb[0].mxu0
        %v2529 = vadd.f32 0.0, %v2528
        %v2530 = vpop.f32.mrb[0].mxu0
        %2531 = vdwg.mxu0
        %v2532 = vmul.f32 %v2529, 0.35355338
        %v2533 = vsel %vm1282, %v2532, -inf
        %2534 = vmax.xlane.f32.xlu0 %v2533
        %v2535 = vpop.xlane.xlu0 %2534
        %v2536 = vsub.f32 %v2532, %v2535
        %v2537 = vmul.f32 %v2536, 1.442695
        %v2538 = vpow.pop %v2537
        %v2539 = vsel %vm1282, %v2538, 0.0
        %2540 = vadd.xlane.f32.xlu0 %v2539
        %v2541 = vpop.xlane.xlu0 %2540
        %v2542 = vrcp.pop %v2541
        %v2543 = vmul.f32 %v2538, %v2542
        %2544 = vrot.lane.b32.xlu0 %v1279, 104
        %v2545 = vpop.permute.xlu0 %2544
        %v2548 = vsel %vm1282, %v2543, 0
        %2550 = vmatprep.subr.mxu0 0.0
        %2551 = vmatpush1.msra.mxu0 %v2545
        %2552 = vmatprep.subr.mxu0 0.0
        %2553 = vmatpush1.msra.mxu0 0.0
        %2554 = vmatprep.subr.mxu0 0.0
        %2555 = vmatpush1.msra.mxu0 0.0
        %2556 = vmatprep.subr.mxu0 0.0
        %2557 = vmatpush1.msra.mxu0 0.0
        %2558 = vmatprep.subr.mxu0 0.0
        %2559 = vmatpush1.msra.mxu0 0.0
        %2560 = vmatprep.subr.mxu0 0.0
        %2561 = vmatpush1.msra.mxu0 0.0
        %2562 = vmatprep.subr.mxu0 0.0
        %2563 = vmatpush1.msra.mxu0 0.0
        %2564 = vmatprep.subr.mxu0 0.0
        %2565 = vmatpush1.msra.mxu0 0.0
        %2566 = vmatprep.subr.mxu0 0.0
        %2567 = vmatpush1.msra.mxu0 0.0
        %2568 = vmatprep.subr.mxu0 0.0
        %2569 = vmatpush1.msra.mxu0 0.0
        %2570 = vmatprep.subr.mxu0 0.0
        %2571 = vmatpush1.msra.mxu0 0.0
        %2572 = vmatprep.subr.mxu0 0.0
        %2573 = vmatpush1.msra.mxu0 0.0
        %2574 = vmatprep.subr.mxu0 0.0
        %2575 = vmatpush1.msra.mxu0 0.0
        %2576 = vmatprep.subr.mxu0 0.0
        %2577 = vmatpush1.msra.mxu0 0.0
        %2578 = vmatprep.subr.mxu0 0.0
        %2579 = vmatpush1.msra.mxu0 0.0
        %2580 = vmatprep.subr.mxu0 0.0
        %2581 = vmatpush1.msra.mxu0 0.0
        %2582 = vmatprep.subr.mxu0 0.0
        %2583 = vmatpush1.msra.mxu0 0.0
        %2584 = vmatprep.subr.mxu0 0.0
        %2585 = vmatpush1.msra.mxu0 0.0
        %2586 = vmatprep.subr.mxu0 0.0
        %2587 = vmatpush1.msra.mxu0 0.0
        %2588 = vmatprep.subr.mxu0 0.0
        %2589 = vmatpush1.msra.mxu0 0.0
        %2590 = vmatprep.subr.mxu0 0.0
        %2591 = vmatpush1.msra.mxu0 0.0
        %2592 = vmatprep.subr.mxu0 0.0
        %2593 = vmatpush1.msra.mxu0 0.0
        %2594 = vmatprep.subr.mxu0 0.0
        %2595 = vmatpush1.msra.mxu0 0.0
        %2596 = vmatprep.subr.mxu0 0.0
        %2597 = vmatpush1.msra.mxu0 0.0
        %2598 = vmatprep.subr.mxu0 0.0
        %2599 = vmatpush1.msra.mxu0 0.0
        %2600 = vmatprep.subr.mxu0 0.0
        %2601 = vmatpush1.msra.mxu0 0.0
        %2602 = vmatprep.subr.mxu0 0.0
        %2603 = vmatpush1.msra.mxu0 0.0
        %2604 = vmatprep.subr.mxu0 0.0
        %2605 = vmatpush1.msra.mxu0 0.0
        %2606 = vmatprep.subr.mxu0 0.0
        %2607 = vmatpush1.msra.mxu0 0.0
        %2608 = vmatprep.subr.mxu0 0.0
        %2609 = vmatpush1.msra.mxu0 0.0
        %2610 = vmatprep.subr.mxu0 0.0
        %2611 = vmatpush1.msra.mxu0 0.0
        %2612 = vmatprep.subr.mxu0 0.0
        %2613 = vmatpush1.msra.mxu0 0.0
        %2614 = vmatprep.mubr.f32.mxu0 0.0
        %2615 = vmatmul.mubr.f32.gmra.mrb[0].mxu0 %v2548
        %v2616 = vpop.f32.mrb[0].mxu0
        %v2617 = vadd.f32 0.0, %v2616
        %v2618 = vpop.f32.mrb[0].mxu0
        %2619 = vdwg.mxu0
        %2621 = vrot.lane.b32.xlu0 %v2285, 8
        %v2622 = vpop.permute.xlu0 %2621
        %2625 = vrot.lane.b32.xlu0 %v2451, 16
        %v2626 = vpop.permute.xlu0 %2625
        %2629 = vrot.lane.b32.xlu0 %v2617, 24
        %v2630 = vpop.permute.xlu0 %2629
        %v2632 = vsel %vm1282, %v2118, %v2622
        %v2633 = vsel %vm1956, %v2632, %v2626
        %v2634 = vsel %vm1958, %v2633, %v2630
        %v2635 = vld [vmem:[%s880] sm:$0xff]
        %v2636 = vld [vmem:[%s880 + $0x8] sm:$0xff]
        %v2637 = vld [vmem:[%s880 + $0x10] sm:$0xff]
        %v2638 = vld [vmem:[%s880 + $0x18] sm:$0xff]
        %v2639 = vld [vmem:[%s883] sm:$0x1]
        %v2641 = vlaneseq
        %v2642 = vshrl.u32 %v2641, 7
        %v2643 = vsub.s32 0, %v2642
        %v2644 = vrot.slane %v2639, %v2643
        %v2647 = vsel %vm1028, %v1959, 0
        %v2650 = vsel %vm1028, %v2634, 0
        %2652 = vmatprep.subr.mxu0 0.0
        %2653 = vmatpush1.msra.mxu0 %v2635
        %2654 = vmatprep.subr.mxu0 0.0
        %2655 = vmatpush1.msra.mxu0 %v2636
        %2656 = vmatprep.subr.mxu0 0.0
        %2657 = vmatpush1.msra.mxu0 %v2637
        %2658 = vmatprep.subr.mxu0 0.0
        %2659 = vmatpush1.msra.mxu0 %v2638
        %2660 = vmatprep.subr.mxu0 0.0
        %2661 = vmatpush1.msra.mxu0 0.0
        %2662 = vmatprep.subr.mxu0 0.0
        %2663 = vmatpush1.msra.mxu0 0.0
        %2664 = vmatprep.subr.mxu0 0.0
        %2665 = vmatpush1.msra.mxu0 0.0
        %2666 = vmatprep.subr.mxu0 0.0
        %2667 = vmatpush1.msra.mxu0 0.0
        %2668 = vmatprep.subr.mxu0 0.0
        %2669 = vmatpush1.msra.mxu0 0.0
        %2670 = vmatprep.subr.mxu0 0.0
        %2671 = vmatpush1.msra.mxu0 0.0
        %2672 = vmatprep.subr.mxu0 0.0
        %2673 = vmatpush1.msra.mxu0 0.0
        %2674 = vmatprep.subr.mxu0 0.0
        %2675 = vmatpush1.msra.mxu0 0.0
        %2676 = vmatprep.subr.mxu0 0.0
        %2677 = vmatpush1.msra.mxu0 0.0
        %2678 = vmatprep.subr.mxu0 0.0
        %2679 = vmatpush1.msra.mxu0 0.0
        %2680 = vmatprep.subr.mxu0 0.0
        %2681 = vmatpush1.msra.mxu0 0.0
        %2682 = vmatprep.subr.mxu0 0.0
        %2683 = vmatpush1.msra.mxu0 0.0
        %2684 = vmatprep.subr.mxu0 0.0
        %2685 = vmatpush1.msra.mxu0 0.0
        %2686 = vmatprep.subr.mxu0 0.0
        %2687 = vmatpush1.msra.mxu0 0.0
        %2688 = vmatprep.subr.mxu0 0.0
        %2689 = vmatpush1.msra.mxu0 0.0
        %2690 = vmatprep.subr.mxu0 0.0
        %2691 = vmatpush1.msra.mxu0 0.0
        %2692 = vmatprep.subr.mxu0 0.0
        %2693 = vmatpush1.msra.mxu0 0.0
        %2694 = vmatprep.subr.mxu0 0.0
        %2695 = vmatpush1.msra.mxu0 0.0
        %2696 = vmatprep.subr.mxu0 0.0
        %2697 = vmatpush1.msra.mxu0 0.0
        %2698 = vmatprep.subr.mxu0 0.0
        %2699 = vmatpush1.msra.mxu0 0.0
        %2700 = vmatprep.subr.mxu0 0.0
        %2701 = vmatpush1.msra.mxu0 0.0
        %2702 = vmatprep.subr.mxu0 0.0
        %2703 = vmatpush1.msra.mxu0 0.0
        %2704 = vmatprep.subr.mxu0 0.0
        %2705 = vmatpush1.msra.mxu0 0.0
        %2706 = vmatprep.subr.mxu0 0.0
        %2707 = vmatpush1.msra.mxu0 0.0
        %2708 = vmatprep.subr.mxu0 0.0
        %2709 = vmatpush1.msra.mxu0 0.0
        %2710 = vmatprep.subr.mxu0 0.0
        %2711 = vmatpush1.msra.mxu0 0.0
        %2712 = vmatprep.subr.mxu0 0.0
        %2713 = vmatpush1.msra.mxu0 0.0
        %2714 = vmatprep.subr.mxu0 0.0
        %2715 = vmatpush1.msra.mxu0 0.0
        %2716 = vmatprep.mubr.f32.mxu0 0.0
        %2717 = vmatmul.mubr.f32.gmra.mrb[0].mxu0 %v2647
        %v2718 = vpop.f32.mrb[0].mxu0
        %v2719 = vadd.f32 %v2644, %v2718
        %v2720 = vpop.f32.mrb[0].mxu0
        %2721 = vmatprep.mubr.f32.mxu0 0.0
        %2722 = vmatmul.mubr.f32.gmra.mrb[0].mxu0 %v2650
        %v2723 = vpop.f32.mrb[0].mxu0
        %v2724 = vadd.f32 %v2644, %v2723
        %v2725 = vpop.f32.mrb[0].mxu0
        %2726 = vdwg.mxu0
        %v2727 = vadd.f32 %v1015, %v2719
        %v2728 = vadd.f32 %v1016, %v2724
        %v2729 = vsel %vm1028, %v2727, 0.0
        %2730 = vadd.xlane.f32.xlu0 %v2729
        %v2731 = vpop.xlane.xlu0 %2730
        %v2732 = vsel %vm1028, %v2728, 0.0
        %2733 = vadd.xlane.f32.xlu0 %v2732
        %v2734 = vpop.xlane.xlu0 %2733
        %v2735 = vrcp.pop 32.0
        %v2736 = vmul.f32 %v2731, %v2735
        %v2737 = vmul.f32 %v2734, %v2735
        %v2738 = vsub.f32 %v2727, %v2736
        %v2739 = vsub.f32 %v2728, %v2737
        %v2740 = vmul.f32 %v2738, %v2738
        %v2741 = vmul.f32 %v2739, %v2739
        %v2742 = vsel %vm1028, %v2740, 0.0
        %2743 = vadd.xlane.f32.xlu0 %v2742
        %v2744 = vpop.xlane.xlu0 %2743
        %v2745 = vsel %vm1028, %v2741, 0.0
        %2746 = vadd.xlane.f32.xlu0 %v2745
        %v2747 = vpop.xlane.xlu0 %2746
        %v2748 = vmul.f32 %v2744, %v2735
        %v2749 = vmul.f32 %v2747, %v2735
        %v2750 = vadd.f32 %v2748, 1e-05
        %v2751 = vadd.f32 %v2749, 1e-05
        %v2752 = vrsqrt.pop %v2750
        %v2753 = vrsqrt.pop %v2751
        %v2754 = vmul.f32 %v2738, %v2752
        %v2755 = vmul.f32 %v2739, %v2753
        %v2756 = vld [vmem:[%s886] sm:$0x1]
        %v2758 = vlaneseq
        %v2759 = vshrl.u32 %v2758, 7
        %v2760 = vsub.s32 0, %v2759
        %v2761 = vrot.slane %v2756, %v2760
        %v2763 = vmul.f32 %v2754, %v2761
        %v2764 = vmul.f32 %v2755, %v2761
        %v2765 = vld [vmem:[%s889] sm:$0x1]
        %v2767 = vlaneseq
        %v2768 = vshrl.u32 %v2767, 7
        %v2769 = vsub.s32 0, %v2768
        %v2770 = vrot.slane %v2765, %v2769
        %v2772 = vadd.f32 %v2763, %v2770
        %v2773 = vadd.f32 %v2764, %v2770
        %v2774 = vld [vmem:[%s894] sm:$0xff]
        %v2775 = vld [vmem:[%s894 + $0x8] sm:$0xff]
        %v2776 = vld [vmem:[%s894 + $0x10] sm:$0xff]
        %v2777 = vld [vmem:[%s894 + $0x18] sm:$0xff]
        %v2778 = vld [vmem:[%s894 + $0x20] sm:$0xff]
        %v2779 = vld [vmem:[%s894 + $0x28] sm:$0xff]
        %v2780 = vld [vmem:[%s894 + $0x30] sm:$0xff]
        %v2781 = vld [vmem:[%s894 + $0x38] sm:$0xff]
        %v2782 = vld [vmem:[%s894 + $0x40] sm:$0xff]
        %v2783 = vld [vmem:[%s894 + $0x48] sm:$0xff]
        %v2784 = vld [vmem:[%s894 + $0x50] sm:$0xff]
        %v2785 = vld [vmem:[%s894 + $0x58] sm:$0xff]
        %v2786 = vld [vmem:[%s894 + $0x60] sm:$0xff]
        %v2787 = vld [vmem:[%s894 + $0x68] sm:$0xff]
        %v2788 = vld [vmem:[%s894 + $0x70] sm:$0xff]
        %v2789 = vld [vmem:[%s894 + $0x78] sm:$0xff]
        %v2790 = vld [vmem:[%s894 + $0x80] sm:$0xff]
        %v2791 = vld [vmem:[%s894 + $0x88] sm:$0xff]
        %v2792 = vld [vmem:[%s894 + $0x90] sm:$0xff]
        %v2793 = vld [vmem:[%s894 + $0x98] sm:$0xff]
        %v2794 = vld [vmem:[%s894 + $0xa0] sm:$0xff]
        %v2795 = vld [vmem:[%s894 + $0xa8] sm:$0xff]
        %v2796 = vld [vmem:[%s894 + $0xb0] sm:$0xff]
        %v2797 = vld [vmem:[%s894 + $0xb8] sm:$0xff]
        %v2798 = vld [vmem:[%s894 + $0xc0] sm:$0xff]
        %v2799 = vld [vmem:[%s894 + $0xc8] sm:$0xff]
        %v2800 = vld [vmem:[%s894 + $0xd0] sm:$0xff]
        %v2801 = vld [vmem:[%s894 + $0xd8] sm:$0xff]
        %v2802 = vld [vmem:[%s894 + $0xe0] sm:$0xff]
        %v2803 = vld [vmem:[%s894 + $0xe8] sm:$0xff]
        %v2804 = vld [vmem:[%s894 + $0xf0] sm:$0xff]
        %v2805 = vld [vmem:[%s894 + $0xf8] sm:$0xff]
        %v2806 = vld [vmem:[%s894 + $0x100] sm:$0xff]
        %v2807 = vld [vmem:[%s894 + $0x108] sm:$0xff]
        %v2808 = vld [vmem:[%s894 + $0x110] sm:$0xff]
        %v2809 = vld [vmem:[%s894 + $0x118] sm:$0xff]
        %v2810 = vld [vmem:[%s894 + $0x120] sm:$0xff]
        %v2811 = vld [vmem:[%s894 + $0x128] sm:$0xff]
        %v2812 = vld [vmem:[%s894 + $0x130] sm:$0xff]
        %v2813 = vld [vmem:[%s894 + $0x138] sm:$0xff]
        %v2814 = vld [vmem:[%s894 + $0x140] sm:$0xff]
        %v2815 = vld [vmem:[%s894 + $0x148] sm:$0xff]
        %v2816 = vld [vmem:[%s894 + $0x150] sm:$0xff]
        %v2817 = vld [vmem:[%s894 + $0x158] sm:$0xff]
        %v2818 = vld [vmem:[%s894 + $0x160] sm:$0xff]
        %v2819 = vld [vmem:[%s894 + $0x168] sm:$0xff]
        %v2820 = vld [vmem:[%s894 + $0x170] sm:$0xff]
        %v2821 = vld [vmem:[%s894 + $0x178] sm:$0xff]
        %v2822 = vld [vmem:[%s894 + $0x180] sm:$0xff]
        %v2823 = vld [vmem:[%s894 + $0x188] sm:$0xff]
        %v2824 = vld [vmem:[%s894 + $0x190] sm:$0xff]
        %v2825 = vld [vmem:[%s894 + $0x198] sm:$0xff]
        %v2826 = vld [vmem:[%s894 + $0x1a0] sm:$0xff]
        %v2827 = vld [vmem:[%s894 + $0x1a8] sm:$0xff]
        %v2828 = vld [vmem:[%s894 + $0x1b0] sm:$0xff]
        %v2829 = vld [vmem:[%s894 + $0x1b8] sm:$0xff]
        %v2830 = vld [vmem:[%s894 + $0x1c0] sm:$0xff]
        %v2831 = vld [vmem:[%s894 + $0x1c8] sm:$0xff]
        %v2832 = vld [vmem:[%s894 + $0x1d0] sm:$0xff]
        %v2833 = vld [vmem:[%s894 + $0x1d8] sm:$0xff]
        %v2834 = vld [vmem:[%s894 + $0x1e0] sm:$0xff]
        %v2835 = vld [vmem:[%s894 + $0x1e8] sm:$0xff]
        %v2836 = vld [vmem:[%s894 + $0x1f0] sm:$0xff]
        %v2837 = vld [vmem:[%s894 + $0x1f8] sm:$0xff]
        %v2838 = vld [vmem:[%s898] sm:$0xff]
        %v2839 = vld [vmem:[%s898 + $0x8] sm:$0xff]
        %v2842 = vlaneseq
        %v2843 = vshrl.u32 %v2842, 7
        %v2844 = vsub.s32 0, %v2843
        %v2845 = vrot.slane %v2838, %v2844
        %v2846 = vlaneseq
        %v2847 = vshrl.u32 %v2846, 7
        %v2848 = vsub.s32 1, %v2847
        %v2849 = vrot.slane %v2838, %v2848
        %v2850 = vlaneseq
        %v2851 = vshrl.u32 %v2850, 7
        %v2852 = vsub.s32 2, %v2851
        %v2853 = vrot.slane %v2838, %v2852
        %v2854 = vlaneseq
        %v2855 = vshrl.u32 %v2854, 7
        %v2856 = vsub.s32 3, %v2855
        %v2857 = vrot.slane %v2838, %v2856
        %v2858 = vlaneseq
        %v2859 = vshrl.u32 %v2858, 7
        %v2860 = vsub.s32 4, %v2859
        %v2861 = vrot.slane %v2838, %v2860
        %v2862 = vlaneseq
        %v2863 = vshrl.u32 %v2862, 7
        %v2864 = vsub.s32 5, %v2863
        %v2865 = vrot.slane %v2838, %v2864
        %v2866 = vlaneseq
        %v2867 = vshrl.u32 %v2866, 7
        %v2868 = vsub.s32 6, %v2867
        %v2869 = vrot.slane %v2838, %v2868
        %v2870 = vlaneseq
        %v2871 = vshrl.u32 %v2870, 7
        %v2872 = vsub.s32 7, %v2871
        %v2873 = vrot.slane %v2838, %v2872
        %v2874 = vlaneseq
        %v2875 = vshrl.u32 %v2874, 7
        %v2876 = vsub.s32 0, %v2875
        %v2877 = vrot.slane %v2839, %v2876
        %v2878 = vlaneseq
        %v2879 = vshrl.u32 %v2878, 7
        %v2880 = vsub.s32 1, %v2879
        %v2881 = vrot.slane %v2839, %v2880
        %v2882 = vlaneseq
        %v2883 = vshrl.u32 %v2882, 7
        %v2884 = vsub.s32 2, %v2883
        %v2885 = vrot.slane %v2839, %v2884
        %v2886 = vlaneseq
        %v2887 = vshrl.u32 %v2886, 7
        %v2888 = vsub.s32 3, %v2887
        %v2889 = vrot.slane %v2839, %v2888
        %v2890 = vlaneseq
        %v2891 = vshrl.u32 %v2890, 7
        %v2892 = vsub.s32 4, %v2891
        %v2893 = vrot.slane %v2839, %v2892
        %v2894 = vlaneseq
        %v2895 = vshrl.u32 %v2894, 7
        %v2896 = vsub.s32 5, %v2895
        %v2897 = vrot.slane %v2839, %v2896
        %v2898 = vlaneseq
        %v2899 = vshrl.u32 %v2898, 7
        %v2900 = vsub.s32 6, %v2899
        %v2901 = vrot.slane %v2839, %v2900
        %v2902 = vlaneseq
        %v2903 = vshrl.u32 %v2902, 7
        %v2904 = vsub.s32 7, %v2903
        %v2905 = vrot.slane %v2839, %v2904
        %v2923 = vsel %vm1028, %v2772, 0
        %v2926 = vsel %vm1028, %v2773, 0
        %2928 = vmatprep.subr.mxu0 %v2775
        %2929 = vmatpush1.msra.mxu0 %v2774
        %2930 = vmatprep.subr.mxu0 %v2791
        %2931 = vmatpush1.msra.mxu0 %v2790
        %2932 = vmatprep.subr.mxu0 %v2807
        %2933 = vmatpush1.msra.mxu0 %v2806
        %2934 = vmatprep.subr.mxu0 %v2823
        %2935 = vmatpush1.msra.mxu0 %v2822
        %2936 = vmatprep.subr.mxu0 0.0
        %2937 = vmatpush1.msra.mxu0 0.0
        %2938 = vmatprep.subr.mxu0 0.0
        %2939 = vmatpush1.msra.mxu0 0.0
        %2940 = vmatprep.subr.mxu0 0.0
        %2941 = vmatpush1.msra.mxu0 0.0
        %2942 = vmatprep.subr.mxu0 0.0
        %2943 = vmatpush1.msra.mxu0 0.0
        %2944 = vmatprep.subr.mxu0 0.0
        %2945 = vmatpush1.msra.mxu0 0.0
        %2946 = vmatprep.subr.mxu0 0.0
        %2947 = vmatpush1.msra.mxu0 0.0
        %2948 = vmatprep.subr.mxu0 0.0
        %2949 = vmatpush1.msra.mxu0 0.0
        %2950 = vmatprep.subr.mxu0 0.0
        %2951 = vmatpush1.msra.mxu0 0.0
        %2952 = vmatprep.subr.mxu0 0.0
        %2953 = vmatpush1.msra.mxu0 0.0
        %2954 = vmatprep.subr.mxu0 0.0
        %2955 = vmatpush1.msra.mxu0 0.0
        %2956 = vmatprep.subr.mxu0 0.0
        %2957 = vmatpush1.msra.mxu0 0.0
        %2958 = vmatprep.subr.mxu0 0.0
        %2959 = vmatpush1.msra.mxu0 0.0
        %2960 = vmatprep.subr.mxu0 0.0
        %2961 = vmatpush1.msra.mxu0 0.0
        %2962 = vmatprep.subr.mxu0 0.0
        %2963 = vmatpush1.msra.mxu0 0.0
        %2964 = vmatprep.subr.mxu0 0.0
        %2965 = vmatpush1.msra.mxu0 0.0
        %2966 = vmatprep.subr.mxu0 0.0
        %2967 = vmatpush1.msra.mxu0 0.0
        %2968 = vmatprep.subr.mxu0 0.0
        %2969 = vmatpush1.msra.mxu0 0.0
        %2970 = vmatprep.subr.mxu0 0.0
        %2971 = vmatpush1.msra.mxu0 0.0
        %2972 = vmatprep.subr.mxu0 0.0
        %2973 = vmatpush1.msra.mxu0 0.0
        %2974 = vmatprep.subr.mxu0 0.0
        %2975 = vmatpush1.msra.mxu0 0.0
        %2976 = vmatprep.subr.mxu0 0.0
        %2977 = vmatpush1.msra.mxu0 0.0
        %2978 = vmatprep.subr.mxu0 0.0
        %2979 = vmatpush1.msra.mxu0 0.0
        %2980 = vmatprep.subr.mxu0 0.0
        %2981 = vmatpush1.msra.mxu0 0.0
        %2982 = vmatprep.subr.mxu0 0.0
        %2983 = vmatpush1.msra.mxu0 0.0
        %2984 = vmatprep.subr.mxu0 0.0
        %2985 = vmatpush1.msra.mxu0 0.0
        %2986 = vmatprep.subr.mxu0 0.0
        %2987 = vmatpush1.msra.mxu0 0.0
        %2988 = vmatprep.subr.mxu0 0.0
        %2989 = vmatpush1.msra.mxu0 0.0
        %2990 = vmatprep.subr.mxu0 0.0
        %2991 = vmatpush1.msra.mxu0 0.0
        %2992 = vmatprep.mubr.f32.mxu0 0.0
        %2993 = vmatmul.mubr.f32.gmra.mrb[0].mxu0 %v2923
        %v2994 = vpop.f32.mrb[0].mxu0
        %v2995 = vadd.f32 %v2845, %v2994
        %v2996 = vpop.f32.mrb[0].mxu0
        %v2997 = vadd.f32 %v2849, %v2996
        %2998 = vmatprep.mubr.f32.mxu0 0.0
        %2999 = vmatmul.mubr.f32.gmra.mrb[0].mxu0 %v2926
        %v3000 = vpop.f32.mrb[0].mxu0
        %v3001 = vadd.f32 %v2845, %v3000
        %v3002 = vpop.f32.mrb[0].mxu0
        %v3003 = vadd.f32 %v2849, %v3002
        %3004 = vdwg.mxu0
        %3005 = vmatprep.subr.mxu0 %v2777
        %3006 = vmatpush1.msra.mxu0 %v2776
        %3007 = vmatprep.subr.mxu0 %v2793
        %3008 = vmatpush1.msra.mxu0 %v2792
        %3009 = vmatprep.subr.mxu0 %v2809
        %3010 = vmatpush1.msra.mxu0 %v2808
        %3011 = vmatprep.subr.mxu0 %v2825
        %3012 = vmatpush1.msra.mxu0 %v2824
        %3013 = vmatprep.subr.mxu0 0.0
        %3014 = vmatpush1.msra.mxu0 0.0
        %3015 = vmatprep.subr.mxu0 0.0
        %3016 = vmatpush1.msra.mxu0 0.0
        %3017 = vmatprep.subr.mxu0 0.0
        %3018 = vmatpush1.msra.mxu0 0.0
        %3019 = vmatprep.subr.mxu0 0.0
        %3020 = vmatpush1.msra.mxu0 0.0
        %3021 = vmatprep.subr.mxu0 0.0
        %3022 = vmatpush1.msra.mxu0 0.0
        %3023 = vmatprep.subr.mxu0 0.0
        %3024 = vmatpush1.msra.mxu0 0.0
        %3025 = vmatprep.subr.mxu0 0.0
        %3026 = vmatpush1.msra.mxu0 0.0
        %3027 = vmatprep.subr.mxu0 0.0
        %3028 = vmatpush1.msra.mxu0 0.0
        %3029 = vmatprep.subr.mxu0 0.0
        %3030 = vmatpush1.msra.mxu0 0.0
        %3031 = vmatprep.subr.mxu0 0.0
        %3032 = vmatpush1.msra.mxu0 0.0
        %3033 = vmatprep.subr.mxu0 0.0
        %3034 = vmatpush1.msra.mxu0 0.0
        %3035 = vmatprep.subr.mxu0 0.0
        %3036 = vmatpush1.msra.mxu0 0.0
        %3037 = vmatprep.subr.mxu0 0.0
        %3038 = vmatpush1.msra.mxu0 0.0
        %3039 = vmatprep.subr.mxu0 0.0
        %3040 = vmatpush1.msra.mxu0 0.0
        %3041 = vmatprep.subr.mxu0 0.0
        %3042 = vmatpush1.msra.mxu0 0.0
        %3043 = vmatprep.subr.mxu0 0.0
        %3044 = vmatpush1.msra.mxu0 0.0
        %3045 = vmatprep.subr.mxu0 0.0
        %3046 = vmatpush1.msra.mxu0 0.0
        %3047 = vmatprep.subr.mxu0 0.0
        %3048 = vmatpush1.msra.mxu0 0.0
        %3049 = vmatprep.subr.mxu0 0.0
        %3050 = vmatpush1.msra.mxu0 0.0
        %3051 = vmatprep.subr.mxu0 0.0
        %3052 = vmatpush1.msra.mxu0 0.0
        %3053 = vmatprep.subr.mxu0 0.0
        %3054 = vmatpush1.msra.mxu0 0.0
        %3055 = vmatprep.subr.mxu0 0.0
        %3056 = vmatpush1.msra.mxu0 0.0
        %3057 = vmatprep.subr.mxu0 0.0
        %3058 = vmatpush1.msra.mxu0 0.0
        %3059 = vmatprep.subr.mxu0 0.0
        %3060 = vmatpush1.msra.mxu0 0.0
        %3061 = vmatprep.subr.mxu0 0.0
        %3062 = vmatpush1.msra.mxu0 0.0
        %3063 = vmatprep.subr.mxu0 0.0
        %3064 = vmatpush1.msra.mxu0 0.0
        %3065 = vmatprep.subr.mxu0 0.0
        %3066 = vmatpush1.msra.mxu0 0.0
        %3067 = vmatprep.subr.mxu0 0.0
        %3068 = vmatpush1.msra.mxu0 0.0
        %3069 = vmatprep.mubr.f32.mxu0 0.0
        %3070 = vmatmul.mubr.f32.gmra.mrb[0].mxu0 %v2923
        %v3071 = vpop.f32.mrb[0].mxu0
        %v3072 = vadd.f32 %v2853, %v3071
        %v3073 = vpop.f32.mrb[0].mxu0
        %v3074 = vadd.f32 %v2857, %v3073
        %3075 = vmatprep.mubr.f32.mxu0 0.0
        %3076 = vmatmul.mubr.f32.gmra.mrb[0].mxu0 %v2926
        %v3077 = vpop.f32.mrb[0].mxu0
        %v3078 = vadd.f32 %v2853, %v3077
        %v3079 = vpop.f32.mrb[0].mxu0
        %v3080 = vadd.f32 %v2857, %v3079
        %3081 = vdwg.mxu0
        %3082 = vmatprep.subr.mxu0 %v2779
        %3083 = vmatpush1.msra.mxu0 %v2778
        %3084 = vmatprep.subr.mxu0 %v2795
        %3085 = vmatpush1.msra.mxu0 %v2794
        %3086 = vmatprep.subr.mxu0 %v2811
        %3087 = vmatpush1.msra.mxu0 %v2810
        %3088 = vmatprep.subr.mxu0 %v2827
        %3089 = vmatpush1.msra.mxu0 %v2826
        %3090 = vmatprep.subr.mxu0 0.0
        %3091 = vmatpush1.msra.mxu0 0.0
        %3092 = vmatprep.subr.mxu0 0.0
        %3093 = vmatpush1.msra.mxu0 0.0
        %3094 = vmatprep.subr.mxu0 0.0
        %3095 = vmatpush1.msra.mxu0 0.0
        %3096 = vmatprep.subr.mxu0 0.0
        %3097 = vmatpush1.msra.mxu0 0.0
        %3098 = vmatprep.subr.mxu0 0.0
        %3099 = vmatpush1.msra.mxu0 0.0
        %3100 = vmatprep.subr.mxu0 0.0
        %3101 = vmatpush1.msra.mxu0 0.0
        %3102 = vmatprep.subr.mxu0 0.0
        %3103 = vmatpush1.msra.mxu0 0.0
        %3104 = vmatprep.subr.mxu0 0.0
        %3105 = vmatpush1.msra.mxu0 0.0
        %3106 = vmatprep.subr.mxu0 0.0
        %3107 = vmatpush1.msra.mxu0 0.0
        %3108 = vmatprep.subr.mxu0 0.0
        %3109 = vmatpush1.msra.mxu0 0.0
        %3110 = vmatprep.subr.mxu0 0.0
        %3111 = vmatpush1.msra.mxu0 0.0
        %3112 = vmatprep.subr.mxu0 0.0
        %3113 = vmatpush1.msra.mxu0 0.0
        %3114 = vmatprep.subr.mxu0 0.0
        %3115 = vmatpush1.msra.mxu0 0.0
        %3116 = vmatprep.subr.mxu0 0.0
        %3117 = vmatpush1.msra.mxu0 0.0
        %3118 = vmatprep.subr.mxu0 0.0
        %3119 = vmatpush1.msra.mxu0 0.0
        %3120 = vmatprep.subr.mxu0 0.0
        %3121 = vmatpush1.msra.mxu0 0.0
        %3122 = vmatprep.subr.mxu0 0.0
        %3123 = vmatpush1.msra.mxu0 0.0
        %3124 = vmatprep.subr.mxu0 0.0
        %3125 = vmatpush1.msra.mxu0 0.0
        %3126 = vmatprep.subr.mxu0 0.0
        %3127 = vmatpush1.msra.mxu0 0.0
        %3128 = vmatprep.subr.mxu0 0.0
        %3129 = vmatpush1.msra.mxu0 0.0
        %3130 = vmatprep.subr.mxu0 0.0
        %3131 = vmatpush1.msra.mxu0 0.0
        %3132 = vmatprep.subr.mxu0 0.0
        %3133 = vmatpush1.msra.mxu0 0.0
        %3134 = vmatprep.subr.mxu0 0.0
        %3135 = vmatpush1.msra.mxu0 0.0
        %3136 = vmatprep.subr.mxu0 0.0
        %3137 = vmatpush1.msra.mxu0 0.0
        %3138 = vmatprep.subr.mxu0 0.0
        %3139 = vmatpush1.msra.mxu0 0.0
        %3140 = vmatprep.subr.mxu0 0.0
        %3141 = vmatpush1.msra.mxu0 0.0
        %3142 = vmatprep.subr.mxu0 0.0
        %3143 = vmatpush1.msra.mxu0 0.0
        %3144 = vmatprep.subr.mxu0 0.0
        %3145 = vmatpush1.msra.mxu0 0.0
        %3146 = vmatprep.mubr.f32.mxu0 0.0
        %3147 = vmatmul.mubr.f32.gmra.mrb[0].mxu0 %v2923
        %v3148 = vpop.f32.mrb[0].mxu0
        %v3149 = vadd.f32 %v2861, %v3148
        %v3150 = vpop.f32.mrb[0].mxu0
        %v3151 = vadd.f32 %v2865, %v3150
        %3152 = vmatprep.mubr.f32.mxu0 0.0
        %3153 = vmatmul.mubr.f32.gmra.mrb[0].mxu0 %v2926
        %v3154 = vpop.f32.mrb[0].mxu0
        %v3155 = vadd.f32 %v2861, %v3154
        %v3156 = vpop.f32.mrb[0].mxu0
        %v3157 = vadd.f32 %v2865, %v3156
        %3158 = vdwg.mxu0
        %3159 = vmatprep.subr.mxu0 %v2781
        %3160 = vmatpush1.msra.mxu0 %v2780
        %3161 = vmatprep.subr.mxu0 %v2797
        %3162 = vmatpush1.msra.mxu0 %v2796
        %3163 = vmatprep.subr.mxu0 %v2813
        %3164 = vmatpush1.msra.mxu0 %v2812
        %3165 = vmatprep.subr.mxu0 %v2829
        %3166 = vmatpush1.msra.mxu0 %v2828
        %3167 = vmatprep.subr.mxu0 0.0
        %3168 = vmatpush1.msra.mxu0 0.0
        %3169 = vmatprep.subr.mxu0 0.0
        %3170 = vmatpush1.msra.mxu0 0.0
        %3171 = vmatprep.subr.mxu0 0.0
        %3172 = vmatpush1.msra.mxu0 0.0
        %3173 = vmatprep.subr.mxu0 0.0
        %3174 = vmatpush1.msra.mxu0 0.0
        %3175 = vmatprep.subr.mxu0 0.0
        %3176 = vmatpush1.msra.mxu0 0.0
        %3177 = vmatprep.subr.mxu0 0.0
        %3178 = vmatpush1.msra.mxu0 0.0
        %3179 = vmatprep.subr.mxu0 0.0
        %3180 = vmatpush1.msra.mxu0 0.0
        %3181 = vmatprep.subr.mxu0 0.0
        %3182 = vmatpush1.msra.mxu0 0.0
        %3183 = vmatprep.subr.mxu0 0.0
        %3184 = vmatpush1.msra.mxu0 0.0
        %3185 = vmatprep.subr.mxu0 0.0
        %3186 = vmatpush1.msra.mxu0 0.0
        %3187 = vmatprep.subr.mxu0 0.0
        %3188 = vmatpush1.msra.mxu0 0.0
        %3189 = vmatprep.subr.mxu0 0.0
        %3190 = vmatpush1.msra.mxu0 0.0
        %3191 = vmatprep.subr.mxu0 0.0
        %3192 = vmatpush1.msra.mxu0 0.0
        %3193 = vmatprep.subr.mxu0 0.0
        %3194 = vmatpush1.msra.mxu0 0.0
        %3195 = vmatprep.subr.mxu0 0.0
        %3196 = vmatpush1.msra.mxu0 0.0
        %3197 = vmatprep.subr.mxu0 0.0
        %3198 = vmatpush1.msra.mxu0 0.0
        %3199 = vmatprep.subr.mxu0 0.0
        %3200 = vmatpush1.msra.mxu0 0.0
        %3201 = vmatprep.subr.mxu0 0.0
        %3202 = vmatpush1.msra.mxu0 0.0
        %3203 = vmatprep.subr.mxu0 0.0
        %3204 = vmatpush1.msra.mxu0 0.0
        %3205 = vmatprep.subr.mxu0 0.0
        %3206 = vmatpush1.msra.mxu0 0.0
        %3207 = vmatprep.subr.mxu0 0.0
        %3208 = vmatpush1.msra.mxu0 0.0
        %3209 = vmatprep.subr.mxu0 0.0
        %3210 = vmatpush1.msra.mxu0 0.0
        %3211 = vmatprep.subr.mxu0 0.0
        %3212 = vmatpush1.msra.mxu0 0.0
        %3213 = vmatprep.subr.mxu0 0.0
        %3214 = vmatpush1.msra.mxu0 0.0
        %3215 = vmatprep.subr.mxu0 0.0
        %3216 = vmatpush1.msra.mxu0 0.0
        %3217 = vmatprep.subr.mxu0 0.0
        %3218 = vmatpush1.msra.mxu0 0.0
        %3219 = vmatprep.subr.mxu0 0.0
        %3220 = vmatpush1.msra.mxu0 0.0
        %3221 = vmatprep.subr.mxu0 0.0
        %3222 = vmatpush1.msra.mxu0 0.0
        %3223 = vmatprep.mubr.f32.mxu0 0.0
        %3224 = vmatmul.mubr.f32.gmra.mrb[0].mxu0 %v2923
        %v3225 = vpop.f32.mrb[0].mxu0
        %v3226 = vadd.f32 %v2869, %v3225
        %v3227 = vpop.f32.mrb[0].mxu0
        %v3228 = vadd.f32 %v2873, %v3227
        %3229 = vmatprep.mubr.f32.mxu0 0.0
        %3230 = vmatmul.mubr.f32.gmra.mrb[0].mxu0 %v2926
        %v3231 = vpop.f32.mrb[0].mxu0
        %v3232 = vadd.f32 %v2869, %v3231
        %v3233 = vpop.f32.mrb[0].mxu0
        %v3234 = vadd.f32 %v2873, %v3233
        %3235 = vdwg.mxu0
        %3236 = vmatprep.subr.mxu0 %v2783
        %3237 = vmatpush1.msra.mxu0 %v2782
        %3238 = vmatprep.subr.mxu0 %v2799
        %3239 = vmatpush1.msra.mxu0 %v2798
        %3240 = vmatprep.subr.mxu0 %v2815
        %3241 = vmatpush1.msra.mxu0 %v2814
        %3242 = vmatprep.subr.mxu0 %v2831
        %3243 = vmatpush1.msra.mxu0 %v2830
        %3244 = vmatprep.subr.mxu0 0.0
        %3245 = vmatpush1.msra.mxu0 0.0
        %3246 = vmatprep.subr.mxu0 0.0
        %3247 = vmatpush1.msra.mxu0 0.0
        %3248 = vmatprep.subr.mxu0 0.0
        %3249 = vmatpush1.msra.mxu0 0.0
        %3250 = vmatprep.subr.mxu0 0.0
        %3251 = vmatpush1.msra.mxu0 0.0
        %3252 = vmatprep.subr.mxu0 0.0
        %3253 = vmatpush1.msra.mxu0 0.0
        %3254 = vmatprep.subr.mxu0 0.0
        %3255 = vmatpush1.msra.mxu0 0.0
        %3256 = vmatprep.subr.mxu0 0.0
        %3257 = vmatpush1.msra.mxu0 0.0
        %3258 = vmatprep.subr.mxu0 0.0
        %3259 = vmatpush1.msra.mxu0 0.0
        %3260 = vmatprep.subr.mxu0 0.0
        %3261 = vmatpush1.msra.mxu0 0.0
        %3262 = vmatprep.subr.mxu0 0.0
        %3263 = vmatpush1.msra.mxu0 0.0
        %3264 = vmatprep.subr.mxu0 0.0
        %3265 = vmatpush1.msra.mxu0 0.0
        %3266 = vmatprep.subr.mxu0 0.0
        %3267 = vmatpush1.msra.mxu0 0.0
        %3268 = vmatprep.subr.mxu0 0.0
        %3269 = vmatpush1.msra.mxu0 0.0
        %3270 = vmatprep.subr.mxu0 0.0
        %3271 = vmatpush1.msra.mxu0 0.0
        %3272 = vmatprep.subr.mxu0 0.0
        %3273 = vmatpush1.msra.mxu0 0.0
        %3274 = vmatprep.subr.mxu0 0.0
        %3275 = vmatpush1.msra.mxu0 0.0
        %3276 = vmatprep.subr.mxu0 0.0
        %3277 = vmatpush1.msra.mxu0 0.0
        %3278 = vmatprep.subr.mxu0 0.0
        %3279 = vmatpush1.msra.mxu0 0.0
        %3280 = vmatprep.subr.mxu0 0.0
        %3281 = vmatpush1.msra.mxu0 0.0
        %3282 = vmatprep.subr.mxu0 0.0
        %3283 = vmatpush1.msra.mxu0 0.0
        %3284 = vmatprep.subr.mxu0 0.0
        %3285 = vmatpush1.msra.mxu0 0.0
        %3286 = vmatprep.subr.mxu0 0.0
        %3287 = vmatpush1.msra.mxu0 0.0
        %3288 = vmatprep.subr.mxu0 0.0
        %3289 = vmatpush1.msra.mxu0 0.0
        %3290 = vmatprep.subr.mxu0 0.0
        %3291 = vmatpush1.msra.mxu0 0.0
        %3292 = vmatprep.subr.mxu0 0.0
        %3293 = vmatpush1.msra.mxu0 0.0
        %3294 = vmatprep.subr.mxu0 0.0
        %3295 = vmatpush1.msra.mxu0 0.0
        %3296 = vmatprep.subr.mxu0 0.0
        %3297 = vmatpush1.msra.mxu0 0.0
        %3298 = vmatprep.subr.mxu0 0.0
        %3299 = vmatpush1.msra.mxu0 0.0
        %3300 = vmatprep.mubr.f32.mxu0 0.0
        %3301 = vmatmul.mubr.f32.gmra.mrb[0].mxu0 %v2923
        %v3302 = vpop.f32.mrb[0].mxu0
        %v3303 = vadd.f32 %v2877, %v3302
        %v3304 = vpop.f32.mrb[0].mxu0
        %v3305 = vadd.f32 %v2881, %v3304
        %3306 = vmatprep.mubr.f32.mxu0 0.0
        %3307 = vmatmul.mubr.f32.gmra.mrb[0].mxu0 %v2926
        %v3308 = vpop.f32.mrb[0].mxu0
        %v3309 = vadd.f32 %v2877, %v3308
        %v3310 = vpop.f32.mrb[0].mxu0
        %v3311 = vadd.f32 %v2881, %v3310
        %3312 = vdwg.mxu0
        %3313 = vmatprep.subr.mxu0 %v2785
        %3314 = vmatpush1.msra.mxu0 %v2784
        %3315 = vmatprep.subr.mxu0 %v2801
        %3316 = vmatpush1.msra.mxu0 %v2800
        %3317 = vmatprep.subr.mxu0 %v2817
        %3318 = vmatpush1.msra.mxu0 %v2816
        %3319 = vmatprep.subr.mxu0 %v2833
        %3320 = vmatpush1.msra.mxu0 %v2832
        %3321 = vmatprep.subr.mxu0 0.0
        %3322 = vmatpush1.msra.mxu0 0.0
        %3323 = vmatprep.subr.mxu0 0.0
        %3324 = vmatpush1.msra.mxu0 0.0
        %3325 = vmatprep.subr.mxu0 0.0
        %3326 = vmatpush1.msra.mxu0 0.0
        %3327 = vmatprep.subr.mxu0 0.0
        %3328 = vmatpush1.msra.mxu0 0.0
        %3329 = vmatprep.subr.mxu0 0.0
        %3330 = vmatpush1.msra.mxu0 0.0
        %3331 = vmatprep.subr.mxu0 0.0
        %3332 = vmatpush1.msra.mxu0 0.0
        %3333 = vmatprep.subr.mxu0 0.0
        %3334 = vmatpush1.msra.mxu0 0.0
        %3335 = vmatprep.subr.mxu0 0.0
        %3336 = vmatpush1.msra.mxu0 0.0
        %3337 = vmatprep.subr.mxu0 0.0
        %3338 = vmatpush1.msra.mxu0 0.0
        %3339 = vmatprep.subr.mxu0 0.0
        %3340 = vmatpush1.msra.mxu0 0.0
        %3341 = vmatprep.subr.mxu0 0.0
        %3342 = vmatpush1.msra.mxu0 0.0
        %3343 = vmatprep.subr.mxu0 0.0
        %3344 = vmatpush1.msra.mxu0 0.0
        %3345 = vmatprep.subr.mxu0 0.0
        %3346 = vmatpush1.msra.mxu0 0.0
        %3347 = vmatprep.subr.mxu0 0.0
        %3348 = vmatpush1.msra.mxu0 0.0
        %3349 = vmatprep.subr.mxu0 0.0
        %3350 = vmatpush1.msra.mxu0 0.0
        %3351 = vmatprep.subr.mxu0 0.0
        %3352 = vmatpush1.msra.mxu0 0.0
        %3353 = vmatprep.subr.mxu0 0.0
        %3354 = vmatpush1.msra.mxu0 0.0
        %3355 = vmatprep.subr.mxu0 0.0
        %3356 = vmatpush1.msra.mxu0 0.0
        %3357 = vmatprep.subr.mxu0 0.0
        %3358 = vmatpush1.msra.mxu0 0.0
        %3359 = vmatprep.subr.mxu0 0.0
        %3360 = vmatpush1.msra.mxu0 0.0
        %3361 = vmatprep.subr.mxu0 0.0
        %3362 = vmatpush1.msra.mxu0 0.0
        %3363 = vmatprep.subr.mxu0 0.0
        %3364 = vmatpush1.msra.mxu0 0.0
        %3365 = vmatprep.subr.mxu0 0.0
        %3366 = vmatpush1.msra.mxu0 0.0
        %3367 = vmatprep.subr.mxu0 0.0
        %3368 = vmatpush1.msra.mxu0 0.0
        %3369 = vmatprep.subr.mxu0 0.0
        %3370 = vmatpush1.msra.mxu0 0.0
        %3371 = vmatprep.subr.mxu0 0.0
        %3372 = vmatpush1.msra.mxu0 0.0
        %3373 = vmatprep.subr.mxu0 0.0
        %3374 = vmatpush1.msra.mxu0 0.0
        %3375 = vmatprep.subr.mxu0 0.0
        %3376 = vmatpush1.msra.mxu0 0.0
        %3377 = vmatprep.mubr.f32.mxu0 0.0
        %3378 = vmatmul.mubr.f32.gmra.mrb[0].mxu0 %v2923
        %v3379 = vpop.f32.mrb[0].mxu0
        %v3380 = vadd.f32 %v2885, %v3379
        %v3381 = vpop.f32.mrb[0].mxu0
        %v3382 = vadd.f32 %v2889, %v3381
        %3383 = vmatprep.mubr.f32.mxu0 0.0
        %3384 = vmatmul.mubr.f32.gmra.mrb[0].mxu0 %v2926
        %v3385 = vpop.f32.mrb[0].mxu0
        %v3386 = vadd.f32 %v2885, %v3385
        %v3387 = vpop.f32.mrb[0].mxu0
        %v3388 = vadd.f32 %v2889, %v3387
        %3389 = vdwg.mxu0
        %3390 = vmatprep.subr.mxu0 %v2787
        %3391 = vmatpush1.msra.mxu0 %v2786
        %3392 = vmatprep.subr.mxu0 %v2803
        %3393 = vmatpush1.msra.mxu0 %v2802
        %3394 = vmatprep.subr.mxu0 %v2819
        %3395 = vmatpush1.msra.mxu0 %v2818
        %3396 = vmatprep.subr.mxu0 %v2835
        %3397 = vmatpush1.msra.mxu0 %v2834
        %3398 = vmatprep.subr.mxu0 0.0
        %3399 = vmatpush1.msra.mxu0 0.0
        %3400 = vmatprep.subr.mxu0 0.0
        %3401 = vmatpush1.msra.mxu0 0.0
        %3402 = vmatprep.subr.mxu0 0.0
        %3403 = vmatpush1.msra.mxu0 0.0
        %3404 = vmatprep.subr.mxu0 0.0
        %3405 = vmatpush1.msra.mxu0 0.0
        %3406 = vmatprep.subr.mxu0 0.0
        %3407 = vmatpush1.msra.mxu0 0.0
        %3408 = vmatprep.subr.mxu0 0.0
        %3409 = vmatpush1.msra.mxu0 0.0
        %3410 = vmatprep.subr.mxu0 0.0
        %3411 = vmatpush1.msra.mxu0 0.0
        %3412 = vmatprep.subr.mxu0 0.0
        %3413 = vmatpush1.msra.mxu0 0.0
        %3414 = vmatprep.subr.mxu0 0.0
        %3415 = vmatpush1.msra.mxu0 0.0
        %3416 = vmatprep.subr.mxu0 0.0
        %3417 = vmatpush1.msra.mxu0 0.0
        %3418 = vmatprep.subr.mxu0 0.0
        %3419 = vmatpush1.msra.mxu0 0.0
        %3420 = vmatprep.subr.mxu0 0.0
        %3421 = vmatpush1.msra.mxu0 0.0
        %3422 = vmatprep.subr.mxu0 0.0
        %3423 = vmatpush1.msra.mxu0 0.0
        %3424 = vmatprep.subr.mxu0 0.0
        %3425 = vmatpush1.msra.mxu0 0.0
        %3426 = vmatprep.subr.mxu0 0.0
        %3427 = vmatpush1.msra.mxu0 0.0
        %3428 = vmatprep.subr.mxu0 0.0
        %3429 = vmatpush1.msra.mxu0 0.0
        %3430 = vmatprep.subr.mxu0 0.0
        %3431 = vmatpush1.msra.mxu0 0.0
        %3432 = vmatprep.subr.mxu0 0.0
        %3433 = vmatpush1.msra.mxu0 0.0
        %3434 = vmatprep.subr.mxu0 0.0
        %3435 = vmatpush1.msra.mxu0 0.0
        %3436 = vmatprep.subr.mxu0 0.0
        %3437 = vmatpush1.msra.mxu0 0.0
        %3438 = vmatprep.subr.mxu0 0.0
        %3439 = vmatpush1.msra.mxu0 0.0
        %3440 = vmatprep.subr.mxu0 0.0
        %3441 = vmatpush1.msra.mxu0 0.0
        %3442 = vmatprep.subr.mxu0 0.0
        %3443 = vmatpush1.msra.mxu0 0.0
        %3444 = vmatprep.subr.mxu0 0.0
        %3445 = vmatpush1.msra.mxu0 0.0
        %3446 = vmatprep.subr.mxu0 0.0
        %3447 = vmatpush1.msra.mxu0 0.0
        %3448 = vmatprep.subr.mxu0 0.0
        %3449 = vmatpush1.msra.mxu0 0.0
        %3450 = vmatprep.subr.mxu0 0.0
        %3451 = vmatpush1.msra.mxu0 0.0
        %3452 = vmatprep.subr.mxu0 0.0
        %3453 = vmatpush1.msra.mxu0 0.0
        %3454 = vmatprep.mubr.f32.mxu0 0.0
        %3455 = vmatmul.mubr.f32.gmra.mrb[0].mxu0 %v2923
        %v3456 = vpop.f32.mrb[0].mxu0
        %v3457 = vadd.f32 %v2893, %v3456
        %v3458 = vpop.f32.mrb[0].mxu0
        %v3459 = vadd.f32 %v2897, %v3458
        %3460 = vmatprep.mubr.f32.mxu0 0.0
        %3461 = vmatmul.mubr.f32.gmra.mrb[0].mxu0 %v2926
        %v3462 = vpop.f32.mrb[0].mxu0
        %v3463 = vadd.f32 %v2893, %v3462
        %v3464 = vpop.f32.mrb[0].mxu0
        %v3465 = vadd.f32 %v2897, %v3464
        %3466 = vdwg.mxu0
        %3467 = vmatprep.subr.mxu0 %v2789
        %3468 = vmatpush1.msra.mxu0 %v2788
        %3469 = vmatprep.subr.mxu0 %v2805
        %3470 = vmatpush1.msra.mxu0 %v2804
        %3471 = vmatprep.subr.mxu0 %v2821
        %3472 = vmatpush1.msra.mxu0 %v2820
        %3473 = vmatprep.subr.mxu0 %v2837
        %3474 = vmatpush1.msra.mxu0 %v2836
        %3475 = vmatprep.subr.mxu0 0.0
        %3476 = vmatpush1.msra.mxu0 0.0
        %3477 = vmatprep.subr.mxu0 0.0
        %3478 = vmatpush1.msra.mxu0 0.0
        %3479 = vmatprep.subr.mxu0 0.0
        %3480 = vmatpush1.msra.mxu0 0.0
        %3481 = vmatprep.subr.mxu0 0.0
        %3482 = vmatpush1.msra.mxu0 0.0
        %3483 = vmatprep.subr.mxu0 0.0
        %3484 = vmatpush1.msra.mxu0 0.0
        %3485 = vmatprep.subr.mxu0 0.0
        %3486 = vmatpush1.msra.mxu0 0.0
        %3487 = vmatprep.subr.mxu0 0.0
        %3488 = vmatpush1.msra.mxu0 0.0
        %3489 = vmatprep.subr.mxu0 0.0
        %3490 = vmatpush1.msra.mxu0 0.0
        %3491 = vmatprep.subr.mxu0 0.0
        %3492 = vmatpush1.msra.mxu0 0.0
        %3493 = vmatprep.subr.mxu0 0.0
        %3494 = vmatpush1.msra.mxu0 0.0
        %3495 = vmatprep.subr.mxu0 0.0
        %3496 = vmatpush1.msra.mxu0 0.0
        %3497 = vmatprep.subr.mxu0 0.0
        %3498 = vmatpush1.msra.mxu0 0.0
        %3499 = vmatprep.subr.mxu0 0.0
        %3500 = vmatpush1.msra.mxu0 0.0
        %3501 = vmatprep.subr.mxu0 0.0
        %3502 = vmatpush1.msra.mxu0 0.0
        %3503 = vmatprep.subr.mxu0 0.0
        %3504 = vmatpush1.msra.mxu0 0.0
        %3505 = vmatprep.subr.mxu0 0.0
        %3506 = vmatpush1.msra.mxu0 0.0
        %3507 = vmatprep.subr.mxu0 0.0
        %3508 = vmatpush1.msra.mxu0 0.0
        %3509 = vmatprep.subr.mxu0 0.0
        %3510 = vmatpush1.msra.mxu0 0.0
        %3511 = vmatprep.subr.mxu0 0.0
        %3512 = vmatpush1.msra.mxu0 0.0
        %3513 = vmatprep.subr.mxu0 0.0
        %3514 = vmatpush1.msra.mxu0 0.0
        %3515 = vmatprep.subr.mxu0 0.0
        %3516 = vmatpush1.msra.mxu0 0.0
        %3517 = vmatprep.subr.mxu0 0.0
        %3518 = vmatpush1.msra.mxu0 0.0
        %3519 = vmatprep.subr.mxu0 0.0
        %3520 = vmatpush1.msra.mxu0 0.0
        %3521 = vmatprep.subr.mxu0 0.0
        %3522 = vmatpush1.msra.mxu0 0.0
        %3523 = vmatprep.subr.mxu0 0.0
        %3524 = vmatpush1.msra.mxu0 0.0
        %3525 = vmatprep.subr.mxu0 0.0
        %3526 = vmatpush1.msra.mxu0 0.0
        %3527 = vmatprep.subr.mxu0 0.0
        %3528 = vmatpush1.msra.mxu0 0.0
        %3529 = vmatprep.subr.mxu0 0.0
        %3530 = vmatpush1.msra.mxu0 0.0
        %3531 = vmatprep.mubr.f32.mxu0 0.0
        %3532 = vmatmul.mubr.f32.gmra.mrb[0].mxu0 %v2923
        %v3533 = vpop.f32.mrb[0].mxu0
        %v3534 = vadd.f32 %v2901, %v3533
        %v3535 = vpop.f32.mrb[0].mxu0
        %v3536 = vadd.f32 %v2905, %v3535
        %3537 = vmatprep.mubr.f32.mxu0 0.0
        %3538 = vmatmul.mubr.f32.gmra.mrb[0].mxu0 %v2926
        %v3539 = vpop.f32.mrb[0].mxu0
        %v3540 = vadd.f32 %v2901, %v3539
        %v3541 = vpop.f32.mrb[0].mxu0
        %v3542 = vadd.f32 %v2905, %v3541
        %3543 = vdwg.mxu0
        %v3544 = vmax.f32 %v2995, 0.0
        %v3545 = vmax.f32 %v2997, 0.0
        %v3546 = vmax.f32 %v3072, 0.0
        %v3547 = vmax.f32 %v3074, 0.0
        %v3548 = vmax.f32 %v3149, 0.0
        %v3549 = vmax.f32 %v3151, 0.0
        %v3550 = vmax.f32 %v3226, 0.0
        %v3551 = vmax.f32 %v3228, 0.0
        %v3552 = vmax.f32 %v3303, 0.0
        %v3553 = vmax.f32 %v3305, 0.0
        %v3554 = vmax.f32 %v3380, 0.0
        %v3555 = vmax.f32 %v3382, 0.0
        %v3556 = vmax.f32 %v3457, 0.0
        %v3557 = vmax.f32 %v3459, 0.0
        %v3558 = vmax.f32 %v3534, 0.0
        %v3559 = vmax.f32 %v3536, 0.0
        %v3560 = vmax.f32 %v3001, 0.0
        %v3561 = vmax.f32 %v3003, 0.0
        %v3562 = vmax.f32 %v3078, 0.0
        %v3563 = vmax.f32 %v3080, 0.0
        %v3564 = vmax.f32 %v3155, 0.0
        %v3565 = vmax.f32 %v3157, 0.0
        %v3566 = vmax.f32 %v3232, 0.0
        %v3567 = vmax.f32 %v3234, 0.0
        %v3568 = vmax.f32 %v3309, 0.0
        %v3569 = vmax.f32 %v3311, 0.0
        %v3570 = vmax.f32 %v3386, 0.0
        %v3571 = vmax.f32 %v3388, 0.0
        %v3572 = vmax.f32 %v3463, 0.0
        %v3573 = vmax.f32 %v3465, 0.0
        %v3574 = vmax.f32 %v3540, 0.0
        %v3575 = vmax.f32 %v3542, 0.0
        %v3576 = vld [vmem:[%s903] sm:$0xff]
        %v3577 = vld [vmem:[%s903 + $0x8] sm:$0xff]
        %v3578 = vld [vmem:[%s903 + $0x10] sm:$0xff]
        %v3579 = vld [vmem:[%s903 + $0x18] sm:$0xff]
        %v3580 = vld [vmem:[%s903 + $0x20] sm:$0xff]
        %v3581 = vld [vmem:[%s903 + $0x28] sm:$0xff]
        %v3582 = vld [vmem:[%s903 + $0x30] sm:$0xff]
        %v3583 = vld [vmem:[%s903 + $0x38] sm:$0xff]
        %v3584 = vld [vmem:[%s903 + $0x40] sm:$0xff]
        %v3585 = vld [vmem:[%s903 + $0x48] sm:$0xff]
        %v3586 = vld [vmem:[%s903 + $0x50] sm:$0xff]
        %v3587 = vld [vmem:[%s903 + $0x58] sm:$0xff]
        %v3588 = vld [vmem:[%s903 + $0x60] sm:$0xff]
        %v3589 = vld [vmem:[%s903 + $0x68] sm:$0xff]
        %v3590 = vld [vmem:[%s903 + $0x70] sm:$0xff]
        %v3591 = vld [vmem:[%s903 + $0x78] sm:$0xff]
        %v3592 = vld [vmem:[%s903 + $0x80] sm:$0xff]
        %v3593 = vld [vmem:[%s903 + $0x88] sm:$0xff]
        %v3594 = vld [vmem:[%s903 + $0x90] sm:$0xff]
        %v3595 = vld [vmem:[%s903 + $0x98] sm:$0xff]
        %v3596 = vld [vmem:[%s903 + $0xa0] sm:$0xff]
        %v3597 = vld [vmem:[%s903 + $0xa8] sm:$0xff]
        %v3598 = vld [vmem:[%s903 + $0xb0] sm:$0xff]
        %v3599 = vld [vmem:[%s903 + $0xb8] sm:$0xff]
        %v3600 = vld [vmem:[%s903 + $0xc0] sm:$0xff]
        %v3601 = vld [vmem:[%s903 + $0xc8] sm:$0xff]
        %v3602 = vld [vmem:[%s903 + $0xd0] sm:$0xff]
        %v3603 = vld [vmem:[%s903 + $0xd8] sm:$0xff]
        %v3604 = vld [vmem:[%s903 + $0xe0] sm:$0xff]
        %v3605 = vld [vmem:[%s903 + $0xe8] sm:$0xff]
        %v3606 = vld [vmem:[%s903 + $0xf0] sm:$0xff]
        %v3607 = vld [vmem:[%s903 + $0xf8] sm:$0xff]
        %v3608 = vld [vmem:[%s903 + $0x100] sm:$0xff]
        %v3609 = vld [vmem:[%s903 + $0x108] sm:$0xff]
        %v3610 = vld [vmem:[%s903 + $0x110] sm:$0xff]
        %v3611 = vld [vmem:[%s903 + $0x118] sm:$0xff]
        %v3612 = vld [vmem:[%s903 + $0x120] sm:$0xff]
        %v3613 = vld [vmem:[%s903 + $0x128] sm:$0xff]
        %v3614 = vld [vmem:[%s903 + $0x130] sm:$0xff]
        %v3615 = vld [vmem:[%s903 + $0x138] sm:$0xff]
        %v3616 = vld [vmem:[%s903 + $0x140] sm:$0xff]
        %v3617 = vld [vmem:[%s903 + $0x148] sm:$0xff]
        %v3618 = vld [vmem:[%s903 + $0x150] sm:$0xff]
        %v3619 = vld [vmem:[%s903 + $0x158] sm:$0xff]
        %v3620 = vld [vmem:[%s903 + $0x160] sm:$0xff]
        %v3621 = vld [vmem:[%s903 + $0x168] sm:$0xff]
        %v3622 = vld [vmem:[%s903 + $0x170] sm:$0xff]
        %v3623 = vld [vmem:[%s903 + $0x178] sm:$0xff]
        %v3624 = vld [vmem:[%s903 + $0x180] sm:$0xff]
        %v3625 = vld [vmem:[%s903 + $0x188] sm:$0xff]
        %v3626 = vld [vmem:[%s903 + $0x190] sm:$0xff]
        %v3627 = vld [vmem:[%s903 + $0x198] sm:$0xff]
        %v3628 = vld [vmem:[%s903 + $0x1a0] sm:$0xff]
        %v3629 = vld [vmem:[%s903 + $0x1a8] sm:$0xff]
        %v3630 = vld [vmem:[%s903 + $0x1b0] sm:$0xff]
        %v3631 = vld [vmem:[%s903 + $0x1b8] sm:$0xff]
        %v3632 = vld [vmem:[%s903 + $0x1c0] sm:$0xff]
        %v3633 = vld [vmem:[%s903 + $0x1c8] sm:$0xff]
        %v3634 = vld [vmem:[%s903 + $0x1d0] sm:$0xff]
        %v3635 = vld [vmem:[%s903 + $0x1d8] sm:$0xff]
        %v3636 = vld [vmem:[%s903 + $0x1e0] sm:$0xff]
        %v3637 = vld [vmem:[%s903 + $0x1e8] sm:$0xff]
        %v3638 = vld [vmem:[%s903 + $0x1f0] sm:$0xff]
        %v3639 = vld [vmem:[%s903 + $0x1f8] sm:$0xff]
        %v3640 = vld [vmem:[%s903 + $0x200] sm:$0xff]
        %v3641 = vld [vmem:[%s903 + $0x208] sm:$0xff]
        %v3642 = vld [vmem:[%s903 + $0x210] sm:$0xff]
        %v3643 = vld [vmem:[%s903 + $0x218] sm:$0xff]
        %v3644 = vld [vmem:[%s903 + $0x220] sm:$0xff]
        %v3645 = vld [vmem:[%s903 + $0x228] sm:$0xff]
        %v3646 = vld [vmem:[%s903 + $0x230] sm:$0xff]
        %v3647 = vld [vmem:[%s903 + $0x238] sm:$0xff]
        %v3648 = vld [vmem:[%s903 + $0x240] sm:$0xff]
        %v3649 = vld [vmem:[%s903 + $0x248] sm:$0xff]
        %v3650 = vld [vmem:[%s903 + $0x250] sm:$0xff]
        %v3651 = vld [vmem:[%s903 + $0x258] sm:$0xff]
        %v3652 = vld [vmem:[%s903 + $0x260] sm:$0xff]
        %v3653 = vld [vmem:[%s903 + $0x268] sm:$0xff]
        %v3654 = vld [vmem:[%s903 + $0x270] sm:$0xff]
        %v3655 = vld [vmem:[%s903 + $0x278] sm:$0xff]
        %v3656 = vld [vmem:[%s903 + $0x280] sm:$0xff]
        %v3657 = vld [vmem:[%s903 + $0x288] sm:$0xff]
        %v3658 = vld [vmem:[%s903 + $0x290] sm:$0xff]
        %v3659 = vld [vmem:[%s903 + $0x298] sm:$0xff]
        %v3660 = vld [vmem:[%s903 + $0x2a0] sm:$0xff]
        %v3661 = vld [vmem:[%s903 + $0x2a8] sm:$0xff]
        %v3662 = vld [vmem:[%s903 + $0x2b0] sm:$0xff]
        %v3663 = vld [vmem:[%s903 + $0x2b8] sm:$0xff]
        %v3664 = vld [vmem:[%s903 + $0x2c0] sm:$0xff]
        %v3665 = vld [vmem:[%s903 + $0x2c8] sm:$0xff]
        %v3666 = vld [vmem:[%s903 + $0x2d0] sm:$0xff]
        %v3667 = vld [vmem:[%s903 + $0x2d8] sm:$0xff]
        %v3668 = vld [vmem:[%s903 + $0x2e0] sm:$0xff]
        %v3669 = vld [vmem:[%s903 + $0x2e8] sm:$0xff]
        %v3670 = vld [vmem:[%s903 + $0x2f0] sm:$0xff]
        %v3671 = vld [vmem:[%s903 + $0x2f8] sm:$0xff]
        %v3672 = vld [vmem:[%s903 + $0x300] sm:$0xff]
        %v3673 = vld [vmem:[%s903 + $0x308] sm:$0xff]
        %v3674 = vld [vmem:[%s903 + $0x310] sm:$0xff]
        %v3675 = vld [vmem:[%s903 + $0x318] sm:$0xff]
        %v3676 = vld [vmem:[%s903 + $0x320] sm:$0xff]
        %v3677 = vld [vmem:[%s903 + $0x328] sm:$0xff]
        %v3678 = vld [vmem:[%s903 + $0x330] sm:$0xff]
        %v3679 = vld [vmem:[%s903 + $0x338] sm:$0xff]
        %v3680 = vld [vmem:[%s903 + $0x340] sm:$0xff]
        %v3681 = vld [vmem:[%s903 + $0x348] sm:$0xff]
        %v3682 = vld [vmem:[%s903 + $0x350] sm:$0xff]
        %v3683 = vld [vmem:[%s903 + $0x358] sm:$0xff]
        %v3684 = vld [vmem:[%s903 + $0x360] sm:$0xff]
        %v3685 = vld [vmem:[%s903 + $0x368] sm:$0xff]
        %v3686 = vld [vmem:[%s903 + $0x370] sm:$0xff]
        %v3687 = vld [vmem:[%s903 + $0x378] sm:$0xff]
        %v3688 = vld [vmem:[%s903 + $0x380] sm:$0xff]
        %v3689 = vld [vmem:[%s903 + $0x388] sm:$0xff]
        %v3690 = vld [vmem:[%s903 + $0x390] sm:$0xff]
        %v3691 = vld [vmem:[%s903 + $0x398] sm:$0xff]
        %v3692 = vld [vmem:[%s903 + $0x3a0] sm:$0xff]
        %v3693 = vld [vmem:[%s903 + $0x3a8] sm:$0xff]
        %v3694 = vld [vmem:[%s903 + $0x3b0] sm:$0xff]
        %v3695 = vld [vmem:[%s903 + $0x3b8] sm:$0xff]
        %v3696 = vld [vmem:[%s903 + $0x3c0] sm:$0xff]
        %v3697 = vld [vmem:[%s903 + $0x3c8] sm:$0xff]
        %v3698 = vld [vmem:[%s903 + $0x3d0] sm:$0xff]
        %v3699 = vld [vmem:[%s903 + $0x3d8] sm:$0xff]
        %v3700 = vld [vmem:[%s903 + $0x3e0] sm:$0xff]
        %v3701 = vld [vmem:[%s903 + $0x3e8] sm:$0xff]
        %v3702 = vld [vmem:[%s903 + $0x3f0] sm:$0xff]
        %v3703 = vld [vmem:[%s903 + $0x3f8] sm:$0xff]
        %v3704 = vld [vmem:[%s903 + $0x400] sm:$0xff]
        %v3705 = vld [vmem:[%s903 + $0x408] sm:$0xff]
        %v3706 = vld [vmem:[%s903 + $0x410] sm:$0xff]
        %v3707 = vld [vmem:[%s903 + $0x418] sm:$0xff]
        %v3708 = vld [vmem:[%s903 + $0x420] sm:$0xff]
        %v3709 = vld [vmem:[%s903 + $0x428] sm:$0xff]
        %v3710 = vld [vmem:[%s903 + $0x430] sm:$0xff]
        %v3711 = vld [vmem:[%s903 + $0x438] sm:$0xff]
        %v3712 = vld [vmem:[%s903 + $0x440] sm:$0xff]
        %v3713 = vld [vmem:[%s903 + $0x448] sm:$0xff]
        %v3714 = vld [vmem:[%s903 + $0x450] sm:$0xff]
        %v3715 = vld [vmem:[%s903 + $0x458] sm:$0xff]
        %v3716 = vld [vmem:[%s903 + $0x460] sm:$0xff]
        %v3717 = vld [vmem:[%s903 + $0x468] sm:$0xff]
        %v3718 = vld [vmem:[%s903 + $0x470] sm:$0xff]
        %v3719 = vld [vmem:[%s903 + $0x478] sm:$0xff]
        %v3720 = vld [vmem:[%s903 + $0x480] sm:$0xff]
        %v3721 = vld [vmem:[%s903 + $0x488] sm:$0xff]
        %v3722 = vld [vmem:[%s903 + $0x490] sm:$0xff]
        %v3723 = vld [vmem:[%s903 + $0x498] sm:$0xff]
        %v3724 = vld [vmem:[%s903 + $0x4a0] sm:$0xff]
        %v3725 = vld [vmem:[%s903 + $0x4a8] sm:$0xff]
        %v3726 = vld [vmem:[%s903 + $0x4b0] sm:$0xff]
        %v3727 = vld [vmem:[%s903 + $0x4b8] sm:$0xff]
        %v3728 = vld [vmem:[%s903 + $0x4c0] sm:$0xff]
        %v3729 = vld [vmem:[%s903 + $0x4c8] sm:$0xff]
        %v3730 = vld [vmem:[%s903 + $0x4d0] sm:$0xff]
        %v3731 = vld [vmem:[%s903 + $0x4d8] sm:$0xff]
        %v3732 = vld [vmem:[%s903 + $0x4e0] sm:$0xff]
        %v3733 = vld [vmem:[%s903 + $0x4e8] sm:$0xff]
        %v3734 = vld [vmem:[%s903 + $0x4f0] sm:$0xff]
        %v3735 = vld [vmem:[%s903 + $0x4f8] sm:$0xff]
        %v3736 = vld [vmem:[%s903 + $0x500] sm:$0xff]
        %v3737 = vld [vmem:[%s903 + $0x508] sm:$0xff]
        %v3738 = vld [vmem:[%s903 + $0x510] sm:$0xff]
        %v3739 = vld [vmem:[%s903 + $0x518] sm:$0xff]
        %v3740 = vld [vmem:[%s903 + $0x520] sm:$0xff]
        %v3741 = vld [vmem:[%s903 + $0x528] sm:$0xff]
        %v3742 = vld [vmem:[%s903 + $0x530] sm:$0xff]
        %v3743 = vld [vmem:[%s903 + $0x538] sm:$0xff]
        %v3744 = vld [vmem:[%s903 + $0x540] sm:$0xff]
        %v3745 = vld [vmem:[%s903 + $0x548] sm:$0xff]
        %v3746 = vld [vmem:[%s903 + $0x550] sm:$0xff]
        %v3747 = vld [vmem:[%s903 + $0x558] sm:$0xff]
        %v3748 = vld [vmem:[%s903 + $0x560] sm:$0xff]
        %v3749 = vld [vmem:[%s903 + $0x568] sm:$0xff]
        %v3750 = vld [vmem:[%s903 + $0x570] sm:$0xff]
        %v3751 = vld [vmem:[%s903 + $0x578] sm:$0xff]
        %v3752 = vld [vmem:[%s903 + $0x580] sm:$0xff]
        %v3753 = vld [vmem:[%s903 + $0x588] sm:$0xff]
        %v3754 = vld [vmem:[%s903 + $0x590] sm:$0xff]
        %v3755 = vld [vmem:[%s903 + $0x598] sm:$0xff]
        %v3756 = vld [vmem:[%s903 + $0x5a0] sm:$0xff]
        %v3757 = vld [vmem:[%s903 + $0x5a8] sm:$0xff]
        %v3758 = vld [vmem:[%s903 + $0x5b0] sm:$0xff]
        %v3759 = vld [vmem:[%s903 + $0x5b8] sm:$0xff]
        %v3760 = vld [vmem:[%s903 + $0x5c0] sm:$0xff]
        %v3761 = vld [vmem:[%s903 + $0x5c8] sm:$0xff]
        %v3762 = vld [vmem:[%s903 + $0x5d0] sm:$0xff]
        %v3763 = vld [vmem:[%s903 + $0x5d8] sm:$0xff]
        %v3764 = vld [vmem:[%s903 + $0x5e0] sm:$0xff]
        %v3765 = vld [vmem:[%s903 + $0x5e8] sm:$0xff]
        %v3766 = vld [vmem:[%s903 + $0x5f0] sm:$0xff]
        %v3767 = vld [vmem:[%s903 + $0x5f8] sm:$0xff]
        %v3768 = vld [vmem:[%s903 + $0x600] sm:$0xff]
        %v3769 = vld [vmem:[%s903 + $0x608] sm:$0xff]
        %v3770 = vld [vmem:[%s903 + $0x610] sm:$0xff]
        %v3771 = vld [vmem:[%s903 + $0x618] sm:$0xff]
        %v3772 = vld [vmem:[%s903 + $0x620] sm:$0xff]
        %v3773 = vld [vmem:[%s903 + $0x628] sm:$0xff]
        %v3774 = vld [vmem:[%s903 + $0x630] sm:$0xff]
        %v3775 = vld [vmem:[%s903 + $0x638] sm:$0xff]
        %v3776 = vld [vmem:[%s903 + $0x640] sm:$0xff]
        %v3777 = vld [vmem:[%s903 + $0x648] sm:$0xff]
        %v3778 = vld [vmem:[%s903 + $0x650] sm:$0xff]
        %v3779 = vld [vmem:[%s903 + $0x658] sm:$0xff]
        %v3780 = vld [vmem:[%s903 + $0x660] sm:$0xff]
        %v3781 = vld [vmem:[%s903 + $0x668] sm:$0xff]
        %v3782 = vld [vmem:[%s903 + $0x670] sm:$0xff]
        %v3783 = vld [vmem:[%s903 + $0x678] sm:$0xff]
        %v3784 = vld [vmem:[%s903 + $0x680] sm:$0xff]
        %v3785 = vld [vmem:[%s903 + $0x688] sm:$0xff]
        %v3786 = vld [vmem:[%s903 + $0x690] sm:$0xff]
        %v3787 = vld [vmem:[%s903 + $0x698] sm:$0xff]
        %v3788 = vld [vmem:[%s903 + $0x6a0] sm:$0xff]
        %v3789 = vld [vmem:[%s903 + $0x6a8] sm:$0xff]
        %v3790 = vld [vmem:[%s903 + $0x6b0] sm:$0xff]
        %v3791 = vld [vmem:[%s903 + $0x6b8] sm:$0xff]
        %v3792 = vld [vmem:[%s903 + $0x6c0] sm:$0xff]
        %v3793 = vld [vmem:[%s903 + $0x6c8] sm:$0xff]
        %v3794 = vld [vmem:[%s903 + $0x6d0] sm:$0xff]
        %v3795 = vld [vmem:[%s903 + $0x6d8] sm:$0xff]
        %v3796 = vld [vmem:[%s903 + $0x6e0] sm:$0xff]
        %v3797 = vld [vmem:[%s903 + $0x6e8] sm:$0xff]
        %v3798 = vld [vmem:[%s903 + $0x6f0] sm:$0xff]
        %v3799 = vld [vmem:[%s903 + $0x6f8] sm:$0xff]
        %v3800 = vld [vmem:[%s903 + $0x700] sm:$0xff]
        %v3801 = vld [vmem:[%s903 + $0x708] sm:$0xff]
        %v3802 = vld [vmem:[%s903 + $0x710] sm:$0xff]
        %v3803 = vld [vmem:[%s903 + $0x718] sm:$0xff]
        %v3804 = vld [vmem:[%s903 + $0x720] sm:$0xff]
        %v3805 = vld [vmem:[%s903 + $0x728] sm:$0xff]
        %v3806 = vld [vmem:[%s903 + $0x730] sm:$0xff]
        %v3807 = vld [vmem:[%s903 + $0x738] sm:$0xff]
        %v3808 = vld [vmem:[%s903 + $0x740] sm:$0xff]
        %v3809 = vld [vmem:[%s903 + $0x748] sm:$0xff]
        %v3810 = vld [vmem:[%s903 + $0x750] sm:$0xff]
        %v3811 = vld [vmem:[%s903 + $0x758] sm:$0xff]
        %v3812 = vld [vmem:[%s903 + $0x760] sm:$0xff]
        %v3813 = vld [vmem:[%s903 + $0x768] sm:$0xff]
        %v3814 = vld [vmem:[%s903 + $0x770] sm:$0xff]
        %v3815 = vld [vmem:[%s903 + $0x778] sm:$0xff]
        %v3816 = vld [vmem:[%s903 + $0x780] sm:$0xff]
        %v3817 = vld [vmem:[%s903 + $0x788] sm:$0xff]
        %v3818 = vld [vmem:[%s903 + $0x790] sm:$0xff]
        %v3819 = vld [vmem:[%s903 + $0x798] sm:$0xff]
        %v3820 = vld [vmem:[%s903 + $0x7a0] sm:$0xff]
        %v3821 = vld [vmem:[%s903 + $0x7a8] sm:$0xff]
        %v3822 = vld [vmem:[%s903 + $0x7b0] sm:$0xff]
        %v3823 = vld [vmem:[%s903 + $0x7b8] sm:$0xff]
        %v3824 = vld [vmem:[%s903 + $0x7c0] sm:$0xff]
        %v3825 = vld [vmem:[%s903 + $0x7c8] sm:$0xff]
        %v3826 = vld [vmem:[%s903 + $0x7d0] sm:$0xff]
        %v3827 = vld [vmem:[%s903 + $0x7d8] sm:$0xff]
        %v3828 = vld [vmem:[%s903 + $0x7e0] sm:$0xff]
        %v3829 = vld [vmem:[%s903 + $0x7e8] sm:$0xff]
        %v3830 = vld [vmem:[%s903 + $0x7f0] sm:$0xff]
        %v3831 = vld [vmem:[%s903 + $0x7f8] sm:$0xff]
        %v3832 = vld [vmem:[%s906] sm:$0x1]
        %v3834 = vlaneseq
        %v3835 = vshrl.u32 %v3834, 7
        %v3836 = vsub.s32 0, %v3835
        %v3837 = vrot.slane %v3832, %v3836
        %3839 = vmatprep.subr.mxu0 0.0
        %3840 = vmatpush1.msra.mxu0 %v3576
        %3841 = vmatprep.subr.mxu0 0.0
        %3842 = vmatpush1.msra.mxu0 %v3577
        %3843 = vmatprep.subr.mxu0 0.0
        %3844 = vmatpush1.msra.mxu0 %v3578
        %3845 = vmatprep.subr.mxu0 0.0
        %3846 = vmatpush1.msra.mxu0 %v3579
        %3847 = vmatprep.subr.mxu0 0.0
        %3848 = vmatpush1.msra.mxu0 %v3580
        %3849 = vmatprep.subr.mxu0 0.0
        %3850 = vmatpush1.msra.mxu0 %v3581
        %3851 = vmatprep.subr.mxu0 0.0
        %3852 = vmatpush1.msra.mxu0 %v3582
        %3853 = vmatprep.subr.mxu0 0.0
        %3854 = vmatpush1.msra.mxu0 %v3583
        %3855 = vmatprep.subr.mxu0 0.0
        %3856 = vmatpush1.msra.mxu0 %v3584
        %3857 = vmatprep.subr.mxu0 0.0
        %3858 = vmatpush1.msra.mxu0 %v3585
        %3859 = vmatprep.subr.mxu0 0.0
        %3860 = vmatpush1.msra.mxu0 %v3586
        %3861 = vmatprep.subr.mxu0 0.0
        %3862 = vmatpush1.msra.mxu0 %v3587
        %3863 = vmatprep.subr.mxu0 0.0
        %3864 = vmatpush1.msra.mxu0 %v3588
        %3865 = vmatprep.subr.mxu0 0.0
        %3866 = vmatpush1.msra.mxu0 %v3589
        %3867 = vmatprep.subr.mxu0 0.0
        %3868 = vmatpush1.msra.mxu0 %v3590
        %3869 = vmatprep.subr.mxu0 0.0
        %3870 = vmatpush1.msra.mxu0 %v3591
        %3871 = vmatprep.subr.mxu0 0.0
        %3872 = vmatpush1.msra.mxu0 %v3592
        %3873 = vmatprep.subr.mxu0 0.0
        %3874 = vmatpush1.msra.mxu0 %v3593
        %3875 = vmatprep.subr.mxu0 0.0
        %3876 = vmatpush1.msra.mxu0 %v3594
        %3877 = vmatprep.subr.mxu0 0.0
        %3878 = vmatpush1.msra.mxu0 %v3595
        %3879 = vmatprep.subr.mxu0 0.0
        %3880 = vmatpush1.msra.mxu0 %v3596
        %3881 = vmatprep.subr.mxu0 0.0
        %3882 = vmatpush1.msra.mxu0 %v3597
        %3883 = vmatprep.subr.mxu0 0.0
        %3884 = vmatpush1.msra.mxu0 %v3598
        %3885 = vmatprep.subr.mxu0 0.0
        %3886 = vmatpush1.msra.mxu0 %v3599
        %3887 = vmatprep.subr.mxu0 0.0
        %3888 = vmatpush1.msra.mxu0 %v3600
        %3889 = vmatprep.subr.mxu0 0.0
        %3890 = vmatpush1.msra.mxu0 %v3601
        %3891 = vmatprep.subr.mxu0 0.0
        %3892 = vmatpush1.msra.mxu0 %v3602
        %3893 = vmatprep.subr.mxu0 0.0
        %3894 = vmatpush1.msra.mxu0 %v3603
        %3895 = vmatprep.subr.mxu0 0.0
        %3896 = vmatpush1.msra.mxu0 %v3604
        %3897 = vmatprep.subr.mxu0 0.0
        %3898 = vmatpush1.msra.mxu0 %v3605
        %3899 = vmatprep.subr.mxu0 0.0
        %3900 = vmatpush1.msra.mxu0 %v3606
        %3901 = vmatprep.subr.mxu0 0.0
        %3902 = vmatpush1.msra.mxu0 %v3607
        %3903 = vmatprep.mubr.f32.mxu0 %v3545
        %3904 = vmatmul.mubr.f32.gmra.mrb[0].mxu0 %v3544
        %v3905 = vpop.f32.mrb[0].mxu0
        %v3906 = vadd.f32 %v3837, %v3905
        %v3907 = vpop.f32.mrb[0].mxu0
        %3908 = vmatprep.mubr.f32.mxu0 %v3561
        %3909 = vmatmul.mubr.f32.gmra.mrb[0].mxu0 %v3560
        %v3910 = vpop.f32.mrb[0].mxu0
        %v3911 = vadd.f32 %v3837, %v3910
        %v3912 = vpop.f32.mrb[0].mxu0
        %3913 = vdwg.mxu0
        %3914 = vmatprep.subr.mxu0 0.0
        %3915 = vmatpush1.msra.mxu0 %v3608
        %3916 = vmatprep.subr.mxu0 0.0
        %3917 = vmatpush1.msra.mxu0 %v3609
        %3918 = vmatprep.subr.mxu0 0.0
        %3919 = vmatpush1.msra.mxu0 %v3610
        %3920 = vmatprep.subr.mxu0 0.0
        %3921 = vmatpush1.msra.mxu0 %v3611
        %3922 = vmatprep.subr.mxu0 0.0
        %3923 = vmatpush1.msra.mxu0 %v3612
        %3924 = vmatprep.subr.mxu0 0.0
        %3925 = vmatpush1.msra.mxu0 %v3613
        %3926 = vmatprep.subr.mxu0 0.0
        %3927 = vmatpush1.msra.mxu0 %v3614
        %3928 = vmatprep.subr.mxu0 0.0
        %3929 = vmatpush1.msra.mxu0 %v3615
        %3930 = vmatprep.subr.mxu0 0.0
        %3931 = vmatpush1.msra.mxu0 %v3616
        %3932 = vmatprep.subr.mxu0 0.0
        %3933 = vmatpush1.msra.mxu0 %v3617
        %3934 = vmatprep.subr.mxu0 0.0
        %3935 = vmatpush1.msra.mxu0 %v3618
        %3936 = vmatprep.subr.mxu0 0.0
        %3937 = vmatpush1.msra.mxu0 %v3619
        %3938 = vmatprep.subr.mxu0 0.0
        %3939 = vmatpush1.msra.mxu0 %v3620
        %3940 = vmatprep.subr.mxu0 0.0
        %3941 = vmatpush1.msra.mxu0 %v3621
        %3942 = vmatprep.subr.mxu0 0.0
        %3943 = vmatpush1.msra.mxu0 %v3622
        %3944 = vmatprep.subr.mxu0 0.0
        %3945 = vmatpush1.msra.mxu0 %v3623
        %3946 = vmatprep.subr.mxu0 0.0
        %3947 = vmatpush1.msra.mxu0 %v3624
        %3948 = vmatprep.subr.mxu0 0.0
        %3949 = vmatpush1.msra.mxu0 %v3625
        %3950 = vmatprep.subr.mxu0 0.0
        %3951 = vmatpush1.msra.mxu0 %v3626
        %3952 = vmatprep.subr.mxu0 0.0
        %3953 = vmatpush1.msra.mxu0 %v3627
        %3954 = vmatprep.subr.mxu0 0.0
        %3955 = vmatpush1.msra.mxu0 %v3628
        %3956 = vmatprep.subr.mxu0 0.0
        %3957 = vmatpush1.msra.mxu0 %v3629
        %3958 = vmatprep.subr.mxu0 0.0
        %3959 = vmatpush1.msra.mxu0 %v3630
        %3960 = vmatprep.subr.mxu0 0.0
        %3961 = vmatpush1.msra.mxu0 %v3631
        %3962 = vmatprep.subr.mxu0 0.0
        %3963 = vmatpush1.msra.mxu0 %v3632
        %3964 = vmatprep.subr.mxu0 0.0
        %3965 = vmatpush1.msra.mxu0 %v3633
        %3966 = vmatprep.subr.mxu0 0.0
        %3967 = vmatpush1.msra.mxu0 %v3634
        %3968 = vmatprep.subr.mxu0 0.0
        %3969 = vmatpush1.msra.mxu0 %v3635
        %3970 = vmatprep.subr.mxu0 0.0
        %3971 = vmatpush1.msra.mxu0 %v3636
        %3972 = vmatprep.subr.mxu0 0.0
        %3973 = vmatpush1.msra.mxu0 %v3637
        %3974 = vmatprep.subr.mxu0 0.0
        %3975 = vmatpush1.msra.mxu0 %v3638
        %3976 = vmatprep.subr.mxu0 0.0
        %3977 = vmatpush1.msra.mxu0 %v3639
        %3978 = vmatprep.mubr.f32.mxu0 %v3547
        %3979 = vmatmul.mubr.f32.gmra.mrb[0].mxu0 %v3546
        %v3980 = vpop.f32.mrb[0].mxu0
        %v3981 = vadd.f32 %v3906, %v3980
        %v3982 = vpop.f32.mrb[0].mxu0
        %3983 = vmatprep.mubr.f32.mxu0 %v3563
        %3984 = vmatmul.mubr.f32.gmra.mrb[0].mxu0 %v3562
        %v3985 = vpop.f32.mrb[0].mxu0
        %v3986 = vadd.f32 %v3911, %v3985
        %v3987 = vpop.f32.mrb[0].mxu0
        %3988 = vdwg.mxu0
        %3989 = vmatprep.subr.mxu0 0.0
        %3990 = vmatpush1.msra.mxu0 %v3640
        %3991 = vmatprep.subr.mxu0 0.0
        %3992 = vmatpush1.msra.mxu0 %v3641
        %3993 = vmatprep.subr.mxu0 0.0
        %3994 = vmatpush1.msra.mxu0 %v3642
        %3995 = vmatprep.subr.mxu0 0.0
        %3996 = vmatpush1.msra.mxu0 %v3643
        %3997 = vmatprep.subr.mxu0 0.0
        %3998 = vmatpush1.msra.mxu0 %v3644
        %3999 = vmatprep.subr.mxu0 0.0
        %4000 = vmatpush1.msra.mxu0 %v3645
        %4001 = vmatprep.subr.mxu0 0.0
        %4002 = vmatpush1.msra.mxu0 %v3646
        %4003 = vmatprep.subr.mxu0 0.0
        %4004 = vmatpush1.msra.mxu0 %v3647
        %4005 = vmatprep.subr.mxu0 0.0
        %4006 = vmatpush1.msra.mxu0 %v3648
        %4007 = vmatprep.subr.mxu0 0.0
        %4008 = vmatpush1.msra.mxu0 %v3649
        %4009 = vmatprep.subr.mxu0 0.0
        %4010 = vmatpush1.msra.mxu0 %v3650
        %4011 = vmatprep.subr.mxu0 0.0
        %4012 = vmatpush1.msra.mxu0 %v3651
        %4013 = vmatprep.subr.mxu0 0.0
        %4014 = vmatpush1.msra.mxu0 %v3652
        %4015 = vmatprep.subr.mxu0 0.0
        %4016 = vmatpush1.msra.mxu0 %v3653
        %4017 = vmatprep.subr.mxu0 0.0
        %4018 = vmatpush1.msra.mxu0 %v3654
        %4019 = vmatprep.subr.mxu0 0.0
        %4020 = vmatpush1.msra.mxu0 %v3655
        %4021 = vmatprep.subr.mxu0 0.0
        %4022 = vmatpush1.msra.mxu0 %v3656
        %4023 = vmatprep.subr.mxu0 0.0
        %4024 = vmatpush1.msra.mxu0 %v3657
        %4025 = vmatprep.subr.mxu0 0.0
        %4026 = vmatpush1.msra.mxu0 %v3658
        %4027 = vmatprep.subr.mxu0 0.0
        %4028 = vmatpush1.msra.mxu0 %v3659
        %4029 = vmatprep.subr.mxu0 0.0
        %4030 = vmatpush1.msra.mxu0 %v3660
        %4031 = vmatprep.subr.mxu0 0.0
        %4032 = vmatpush1.msra.mxu0 %v3661
        %4033 = vmatprep.subr.mxu0 0.0
        %4034 = vmatpush1.msra.mxu0 %v3662
        %4035 = vmatprep.subr.mxu0 0.0
        %4036 = vmatpush1.msra.mxu0 %v3663
        %4037 = vmatprep.subr.mxu0 0.0
        %4038 = vmatpush1.msra.mxu0 %v3664
        %4039 = vmatprep.subr.mxu0 0.0
        %4040 = vmatpush1.msra.mxu0 %v3665
        %4041 = vmatprep.subr.mxu0 0.0
        %4042 = vmatpush1.msra.mxu0 %v3666
        %4043 = vmatprep.subr.mxu0 0.0
        %4044 = vmatpush1.msra.mxu0 %v3667
        %4045 = vmatprep.subr.mxu0 0.0
        %4046 = vmatpush1.msra.mxu0 %v3668
        %4047 = vmatprep.subr.mxu0 0.0
        %4048 = vmatpush1.msra.mxu0 %v3669
        %4049 = vmatprep.subr.mxu0 0.0
        %4050 = vmatpush1.msra.mxu0 %v3670
        %4051 = vmatprep.subr.mxu0 0.0
        %4052 = vmatpush1.msra.mxu0 %v3671
        %4053 = vmatprep.mubr.f32.mxu0 %v3549
        %4054 = vmatmul.mubr.f32.gmra.mrb[0].mxu0 %v3548
        %v4055 = vpop.f32.mrb[0].mxu0
        %v4056 = vadd.f32 %v3981, %v4055
        %v4057 = vpop.f32.mrb[0].mxu0
        %4058 = vmatprep.mubr.f32.mxu0 %v3565
        %4059 = vmatmul.mubr.f32.gmra.mrb[0].mxu0 %v3564
        %v4060 = vpop.f32.mrb[0].mxu0
        %v4061 = vadd.f32 %v3986, %v4060
        %v4062 = vpop.f32.mrb[0].mxu0
        %4063 = vdwg.mxu0
        %4064 = vmatprep.subr.mxu0 0.0
        %4065 = vmatpush1.msra.mxu0 %v3672
        %4066 = vmatprep.subr.mxu0 0.0
        %4067 = vmatpush1.msra.mxu0 %v3673
        %4068 = vmatprep.subr.mxu0 0.0
        %4069 = vmatpush1.msra.mxu0 %v3674
        %4070 = vmatprep.subr.mxu0 0.0
        %4071 = vmatpush1.msra.mxu0 %v3675
        %4072 = vmatprep.subr.mxu0 0.0
        %4073 = vmatpush1.msra.mxu0 %v3676
        %4074 = vmatprep.subr.mxu0 0.0
        %4075 = vmatpush1.msra.mxu0 %v3677
        %4076 = vmatprep.subr.mxu0 0.0
        %4077 = vmatpush1.msra.mxu0 %v3678
        %4078 = vmatprep.subr.mxu0 0.0
        %4079 = vmatpush1.msra.mxu0 %v3679
        %4080 = vmatprep.subr.mxu0 0.0
        %4081 = vmatpush1.msra.mxu0 %v3680
        %4082 = vmatprep.subr.mxu0 0.0
        %4083 = vmatpush1.msra.mxu0 %v3681
        %4084 = vmatprep.subr.mxu0 0.0
        %4085 = vmatpush1.msra.mxu0 %v3682
        %4086 = vmatprep.subr.mxu0 0.0
        %4087 = vmatpush1.msra.mxu0 %v3683
        %4088 = vmatprep.subr.mxu0 0.0
        %4089 = vmatpush1.msra.mxu0 %v3684
        %4090 = vmatprep.subr.mxu0 0.0
        %4091 = vmatpush1.msra.mxu0 %v3685
        %4092 = vmatprep.subr.mxu0 0.0
        %4093 = vmatpush1.msra.mxu0 %v3686
        %4094 = vmatprep.subr.mxu0 0.0
        %4095 = vmatpush1.msra.mxu0 %v3687
        %4096 = vmatprep.subr.mxu0 0.0
        %4097 = vmatpush1.msra.mxu0 %v3688
        %4098 = vmatprep.subr.mxu0 0.0
        %4099 = vmatpush1.msra.mxu0 %v3689
        %4100 = vmatprep.subr.mxu0 0.0
        %4101 = vmatpush1.msra.mxu0 %v3690
        %4102 = vmatprep.subr.mxu0 0.0
        %4103 = vmatpush1.msra.mxu0 %v3691
        %4104 = vmatprep.subr.mxu0 0.0
        %4105 = vmatpush1.msra.mxu0 %v3692
        %4106 = vmatprep.subr.mxu0 0.0
        %4107 = vmatpush1.msra.mxu0 %v3693
        %4108 = vmatprep.subr.mxu0 0.0
        %4109 = vmatpush1.msra.mxu0 %v3694
        %4110 = vmatprep.subr.mxu0 0.0
        %4111 = vmatpush1.msra.mxu0 %v3695
        %4112 = vmatprep.subr.mxu0 0.0
        %4113 = vmatpush1.msra.mxu0 %v3696
        %4114 = vmatprep.subr.mxu0 0.0
        %4115 = vmatpush1.msra.mxu0 %v3697
        %4116 = vmatprep.subr.mxu0 0.0
        %4117 = vmatpush1.msra.mxu0 %v3698
        %4118 = vmatprep.subr.mxu0 0.0
        %4119 = vmatpush1.msra.mxu0 %v3699
        %4120 = vmatprep.subr.mxu0 0.0
        %4121 = vmatpush1.msra.mxu0 %v3700
        %4122 = vmatprep.subr.mxu0 0.0
        %4123 = vmatpush1.msra.mxu0 %v3701
        %4124 = vmatprep.subr.mxu0 0.0
        %4125 = vmatpush1.msra.mxu0 %v3702
        %4126 = vmatprep.subr.mxu0 0.0
        %4127 = vmatpush1.msra.mxu0 %v3703
        %4128 = vmatprep.mubr.f32.mxu0 %v3551
        %4129 = vmatmul.mubr.f32.gmra.mrb[0].mxu0 %v3550
        %v4130 = vpop.f32.mrb[0].mxu0
        %v4131 = vadd.f32 %v4056, %v4130
        %v4132 = vpop.f32.mrb[0].mxu0
        %4133 = vmatprep.mubr.f32.mxu0 %v3567
        %4134 = vmatmul.mubr.f32.gmra.mrb[0].mxu0 %v3566
        %v4135 = vpop.f32.mrb[0].mxu0
        %v4136 = vadd.f32 %v4061, %v4135
        %v4137 = vpop.f32.mrb[0].mxu0
        %4138 = vdwg.mxu0
        %4139 = vmatprep.subr.mxu0 0.0
        %4140 = vmatpush1.msra.mxu0 %v3704
        %4141 = vmatprep.subr.mxu0 0.0
        %4142 = vmatpush1.msra.mxu0 %v3705
        %4143 = vmatprep.subr.mxu0 0.0
        %4144 = vmatpush1.msra.mxu0 %v3706
        %4145 = vmatprep.subr.mxu0 0.0
        %4146 = vmatpush1.msra.mxu0 %v3707
        %4147 = vmatprep.subr.mxu0 0.0
        %4148 = vmatpush1.msra.mxu0 %v3708
        %4149 = vmatprep.subr.mxu0 0.0
        %4150 = vmatpush1.msra.mxu0 %v3709
        %4151 = vmatprep.subr.mxu0 0.0
        %4152 = vmatpush1.msra.mxu0 %v3710
        %4153 = vmatprep.subr.mxu0 0.0
        %4154 = vmatpush1.msra.mxu0 %v3711
        %4155 = vmatprep.subr.mxu0 0.0
        %4156 = vmatpush1.msra.mxu0 %v3712
        %4157 = vmatprep.subr.mxu0 0.0
        %4158 = vmatpush1.msra.mxu0 %v3713
        %4159 = vmatprep.subr.mxu0 0.0
        %4160 = vmatpush1.msra.mxu0 %v3714
        %4161 = vmatprep.subr.mxu0 0.0
        %4162 = vmatpush1.msra.mxu0 %v3715
        %4163 = vmatprep.subr.mxu0 0.0
        %4164 = vmatpush1.msra.mxu0 %v3716
        %4165 = vmatprep.subr.mxu0 0.0
        %4166 = vmatpush1.msra.mxu0 %v3717
        %4167 = vmatprep.subr.mxu0 0.0
        %4168 = vmatpush1.msra.mxu0 %v3718
        %4169 = vmatprep.subr.mxu0 0.0
        %4170 = vmatpush1.msra.mxu0 %v3719
        %4171 = vmatprep.subr.mxu0 0.0
        %4172 = vmatpush1.msra.mxu0 %v3720
        %4173 = vmatprep.subr.mxu0 0.0
        %4174 = vmatpush1.msra.mxu0 %v3721
        %4175 = vmatprep.subr.mxu0 0.0
        %4176 = vmatpush1.msra.mxu0 %v3722
        %4177 = vmatprep.subr.mxu0 0.0
        %4178 = vmatpush1.msra.mxu0 %v3723
        %4179 = vmatprep.subr.mxu0 0.0
        %4180 = vmatpush1.msra.mxu0 %v3724
        %4181 = vmatprep.subr.mxu0 0.0
        %4182 = vmatpush1.msra.mxu0 %v3725
        %4183 = vmatprep.subr.mxu0 0.0
        %4184 = vmatpush1.msra.mxu0 %v3726
        %4185 = vmatprep.subr.mxu0 0.0
        %4186 = vmatpush1.msra.mxu0 %v3727
        %4187 = vmatprep.subr.mxu0 0.0
        %4188 = vmatpush1.msra.mxu0 %v3728
        %4189 = vmatprep.subr.mxu0 0.0
        %4190 = vmatpush1.msra.mxu0 %v3729
        %4191 = vmatprep.subr.mxu0 0.0
        %4192 = vmatpush1.msra.mxu0 %v3730
        %4193 = vmatprep.subr.mxu0 0.0
        %4194 = vmatpush1.msra.mxu0 %v3731
        %4195 = vmatprep.subr.mxu0 0.0
        %4196 = vmatpush1.msra.mxu0 %v3732
        %4197 = vmatprep.subr.mxu0 0.0
        %4198 = vmatpush1.msra.mxu0 %v3733
        %4199 = vmatprep.subr.mxu0 0.0
        %4200 = vmatpush1.msra.mxu0 %v3734
        %4201 = vmatprep.subr.mxu0 0.0
        %4202 = vmatpush1.msra.mxu0 %v3735
        %4203 = vmatprep.mubr.f32.mxu0 %v3553
        %4204 = vmatmul.mubr.f32.gmra.mrb[0].mxu0 %v3552
        %v4205 = vpop.f32.mrb[0].mxu0
        %v4206 = vadd.f32 %v4131, %v4205
        %v4207 = vpop.f32.mrb[0].mxu0
        %4208 = vmatprep.mubr.f32.mxu0 %v3569
        %4209 = vmatmul.mubr.f32.gmra.mrb[0].mxu0 %v3568
        %v4210 = vpop.f32.mrb[0].mxu0
        %v4211 = vadd.f32 %v4136, %v4210
        %v4212 = vpop.f32.mrb[0].mxu0
        %4213 = vdwg.mxu0
        %4214 = vmatprep.subr.mxu0 0.0
        %4215 = vmatpush1.msra.mxu0 %v3736
        %4216 = vmatprep.subr.mxu0 0.0
        %4217 = vmatpush1.msra.mxu0 %v3737
        %4218 = vmatprep.subr.mxu0 0.0
        %4219 = vmatpush1.msra.mxu0 %v3738
        %4220 = vmatprep.subr.mxu0 0.0
        %4221 = vmatpush1.msra.mxu0 %v3739
        %4222 = vmatprep.subr.mxu0 0.0
        %4223 = vmatpush1.msra.mxu0 %v3740
        %4224 = vmatprep.subr.mxu0 0.0
        %4225 = vmatpush1.msra.mxu0 %v3741
        %4226 = vmatprep.subr.mxu0 0.0
        %4227 = vmatpush1.msra.mxu0 %v3742
        %4228 = vmatprep.subr.mxu0 0.0
        %4229 = vmatpush1.msra.mxu0 %v3743
        %4230 = vmatprep.subr.mxu0 0.0
        %4231 = vmatpush1.msra.mxu0 %v3744
        %4232 = vmatprep.subr.mxu0 0.0
        %4233 = vmatpush1.msra.mxu0 %v3745
        %4234 = vmatprep.subr.mxu0 0.0
        %4235 = vmatpush1.msra.mxu0 %v3746
        %4236 = vmatprep.subr.mxu0 0.0
        %4237 = vmatpush1.msra.mxu0 %v3747
        %4238 = vmatprep.subr.mxu0 0.0
        %4239 = vmatpush1.msra.mxu0 %v3748
        %4240 = vmatprep.subr.mxu0 0.0
        %4241 = vmatpush1.msra.mxu0 %v3749
        %4242 = vmatprep.subr.mxu0 0.0
        %4243 = vmatpush1.msra.mxu0 %v3750
        %4244 = vmatprep.subr.mxu0 0.0
        %4245 = vmatpush1.msra.mxu0 %v3751
        %4246 = vmatprep.subr.mxu0 0.0
        %4247 = vmatpush1.msra.mxu0 %v3752
        %4248 = vmatprep.subr.mxu0 0.0
        %4249 = vmatpush1.msra.mxu0 %v3753
        %4250 = vmatprep.subr.mxu0 0.0
        %4251 = vmatpush1.msra.mxu0 %v3754
        %4252 = vmatprep.subr.mxu0 0.0
        %4253 = vmatpush1.msra.mxu0 %v3755
        %4254 = vmatprep.subr.mxu0 0.0
        %4255 = vmatpush1.msra.mxu0 %v3756
        %4256 = vmatprep.subr.mxu0 0.0
        %4257 = vmatpush1.msra.mxu0 %v3757
        %4258 = vmatprep.subr.mxu0 0.0
        %4259 = vmatpush1.msra.mxu0 %v3758
        %4260 = vmatprep.subr.mxu0 0.0
        %4261 = vmatpush1.msra.mxu0 %v3759
        %4262 = vmatprep.subr.mxu0 0.0
        %4263 = vmatpush1.msra.mxu0 %v3760
        %4264 = vmatprep.subr.mxu0 0.0
        %4265 = vmatpush1.msra.mxu0 %v3761
        %4266 = vmatprep.subr.mxu0 0.0
        %4267 = vmatpush1.msra.mxu0 %v3762
        %4268 = vmatprep.subr.mxu0 0.0
        %4269 = vmatpush1.msra.mxu0 %v3763
        %4270 = vmatprep.subr.mxu0 0.0
        %4271 = vmatpush1.msra.mxu0 %v3764
        %4272 = vmatprep.subr.mxu0 0.0
        %4273 = vmatpush1.msra.mxu0 %v3765
        %4274 = vmatprep.subr.mxu0 0.0
        %4275 = vmatpush1.msra.mxu0 %v3766
        %4276 = vmatprep.subr.mxu0 0.0
        %4277 = vmatpush1.msra.mxu0 %v3767
        %4278 = vmatprep.mubr.f32.mxu0 %v3555
        %4279 = vmatmul.mubr.f32.gmra.mrb[0].mxu0 %v3554
        %v4280 = vpop.f32.mrb[0].mxu0
        %v4281 = vadd.f32 %v4206, %v4280
        %v4282 = vpop.f32.mrb[0].mxu0
        %4283 = vmatprep.mubr.f32.mxu0 %v3571
        %4284 = vmatmul.mubr.f32.gmra.mrb[0].mxu0 %v3570
        %v4285 = vpop.f32.mrb[0].mxu0
        %v4286 = vadd.f32 %v4211, %v4285
        %v4287 = vpop.f32.mrb[0].mxu0
        %4288 = vdwg.mxu0
        %4289 = vmatprep.subr.mxu0 0.0
        %4290 = vmatpush1.msra.mxu0 %v3768
        %4291 = vmatprep.subr.mxu0 0.0
        %4292 = vmatpush1.msra.mxu0 %v3769
        %4293 = vmatprep.subr.mxu0 0.0
        %4294 = vmatpush1.msra.mxu0 %v3770
        %4295 = vmatprep.subr.mxu0 0.0
        %4296 = vmatpush1.msra.mxu0 %v3771
        %4297 = vmatprep.subr.mxu0 0.0
        %4298 = vmatpush1.msra.mxu0 %v3772
        %4299 = vmatprep.subr.mxu0 0.0
        %4300 = vmatpush1.msra.mxu0 %v3773
        %4301 = vmatprep.subr.mxu0 0.0
        %4302 = vmatpush1.msra.mxu0 %v3774
        %4303 = vmatprep.subr.mxu0 0.0
        %4304 = vmatpush1.msra.mxu0 %v3775
        %4305 = vmatprep.subr.mxu0 0.0
        %4306 = vmatpush1.msra.mxu0 %v3776
        %4307 = vmatprep.subr.mxu0 0.0
        %4308 = vmatpush1.msra.mxu0 %v3777
        %4309 = vmatprep.subr.mxu0 0.0
        %4310 = vmatpush1.msra.mxu0 %v3778
        %4311 = vmatprep.subr.mxu0 0.0
        %4312 = vmatpush1.msra.mxu0 %v3779
        %4313 = vmatprep.subr.mxu0 0.0
        %4314 = vmatpush1.msra.mxu0 %v3780
        %4315 = vmatprep.subr.mxu0 0.0
        %4316 = vmatpush1.msra.mxu0 %v3781
        %4317 = vmatprep.subr.mxu0 0.0
        %4318 = vmatpush1.msra.mxu0 %v3782
        %4319 = vmatprep.subr.mxu0 0.0
        %4320 = vmatpush1.msra.mxu0 %v3783
        %4321 = vmatprep.subr.mxu0 0.0
        %4322 = vmatpush1.msra.mxu0 %v3784
        %4323 = vmatprep.subr.mxu0 0.0
        %4324 = vmatpush1.msra.mxu0 %v3785
        %4325 = vmatprep.subr.mxu0 0.0
        %4326 = vmatpush1.msra.mxu0 %v3786
        %4327 = vmatprep.subr.mxu0 0.0
        %4328 = vmatpush1.msra.mxu0 %v3787
        %4329 = vmatprep.subr.mxu0 0.0
        %4330 = vmatpush1.msra.mxu0 %v3788
        %4331 = vmatprep.subr.mxu0 0.0
        %4332 = vmatpush1.msra.mxu0 %v3789
        %4333 = vmatprep.subr.mxu0 0.0
        %4334 = vmatpush1.msra.mxu0 %v3790
        %4335 = vmatprep.subr.mxu0 0.0
        %4336 = vmatpush1.msra.mxu0 %v3791
        %4337 = vmatprep.subr.mxu0 0.0
        %4338 = vmatpush1.msra.mxu0 %v3792
        %4339 = vmatprep.subr.mxu0 0.0
        %4340 = vmatpush1.msra.mxu0 %v3793
        %4341 = vmatprep.subr.mxu0 0.0
        %4342 = vmatpush1.msra.mxu0 %v3794
        %4343 = vmatprep.subr.mxu0 0.0
        %4344 = vmatpush1.msra.mxu0 %v3795
        %4345 = vmatprep.subr.mxu0 0.0
        %4346 = vmatpush1.msra.mxu0 %v3796
        %4347 = vmatprep.subr.mxu0 0.0
        %4348 = vmatpush1.msra.mxu0 %v3797
        %4349 = vmatprep.subr.mxu0 0.0
        %4350 = vmatpush1.msra.mxu0 %v3798
        %4351 = vmatprep.subr.mxu0 0.0
        %4352 = vmatpush1.msra.mxu0 %v3799
        %4353 = vmatprep.mubr.f32.mxu0 %v3557
        %4354 = vmatmul.mubr.f32.gmra.mrb[0].mxu0 %v3556
        %v4355 = vpop.f32.mrb[0].mxu0
        %v4356 = vadd.f32 %v4281, %v4355
        %v4357 = vpop.f32.mrb[0].mxu0
        %4358 = vmatprep.mubr.f32.mxu0 %v3573
        %4359 = vmatmul.mubr.f32.gmra.mrb[0].mxu0 %v3572
        %v4360 = vpop.f32.mrb[0].mxu0
        %v4361 = vadd.f32 %v4286, %v4360
        %v4362 = vpop.f32.mrb[0].mxu0
        %4363 = vdwg.mxu0
        %4364 = vmatprep.subr.mxu0 0.0
        %4365 = vmatpush1.msra.mxu0 %v3800
        %4366 = vmatprep.subr.mxu0 0.0
        %4367 = vmatpush1.msra.mxu0 %v3801
        %4368 = vmatprep.subr.mxu0 0.0
        %4369 = vmatpush1.msra.mxu0 %v3802
        %4370 = vmatprep.subr.mxu0 0.0
        %4371 = vmatpush1.msra.mxu0 %v3803
        %4372 = vmatprep.subr.mxu0 0.0
        %4373 = vmatpush1.msra.mxu0 %v3804
        %4374 = vmatprep.subr.mxu0 0.0
        %4375 = vmatpush1.msra.mxu0 %v3805
        %4376 = vmatprep.subr.mxu0 0.0
        %4377 = vmatpush1.msra.mxu0 %v3806
        %4378 = vmatprep.subr.mxu0 0.0
        %4379 = vmatpush1.msra.mxu0 %v3807
        %4380 = vmatprep.subr.mxu0 0.0
        %4381 = vmatpush1.msra.mxu0 %v3808
        %4382 = vmatprep.subr.mxu0 0.0
        %4383 = vmatpush1.msra.mxu0 %v3809
        %4384 = vmatprep.subr.mxu0 0.0
        %4385 = vmatpush1.msra.mxu0 %v3810
        %4386 = vmatprep.subr.mxu0 0.0
        %4387 = vmatpush1.msra.mxu0 %v3811
        %4388 = vmatprep.subr.mxu0 0.0
        %4389 = vmatpush1.msra.mxu0 %v3812
        %4390 = vmatprep.subr.mxu0 0.0
        %4391 = vmatpush1.msra.mxu0 %v3813
        %4392 = vmatprep.subr.mxu0 0.0
        %4393 = vmatpush1.msra.mxu0 %v3814
        %4394 = vmatprep.subr.mxu0 0.0
        %4395 = vmatpush1.msra.mxu0 %v3815
        %4396 = vmatprep.subr.mxu0 0.0
        %4397 = vmatpush1.msra.mxu0 %v3816
        %4398 = vmatprep.subr.mxu0 0.0
        %4399 = vmatpush1.msra.mxu0 %v3817
        %4400 = vmatprep.subr.mxu0 0.0
        %4401 = vmatpush1.msra.mxu0 %v3818
        %4402 = vmatprep.subr.mxu0 0.0
        %4403 = vmatpush1.msra.mxu0 %v3819
        %4404 = vmatprep.subr.mxu0 0.0
        %4405 = vmatpush1.msra.mxu0 %v3820
        %4406 = vmatprep.subr.mxu0 0.0
        %4407 = vmatpush1.msra.mxu0 %v3821
        %4408 = vmatprep.subr.mxu0 0.0
        %4409 = vmatpush1.msra.mxu0 %v3822
        %4410 = vmatprep.subr.mxu0 0.0
        %4411 = vmatpush1.msra.mxu0 %v3823
        %4412 = vmatprep.subr.mxu0 0.0
        %4413 = vmatpush1.msra.mxu0 %v3824
        %4414 = vmatprep.subr.mxu0 0.0
        %4415 = vmatpush1.msra.mxu0 %v3825
        %4416 = vmatprep.subr.mxu0 0.0
        %4417 = vmatpush1.msra.mxu0 %v3826
        %4418 = vmatprep.subr.mxu0 0.0
        %4419 = vmatpush1.msra.mxu0 %v3827
        %4420 = vmatprep.subr.mxu0 0.0
        %4421 = vmatpush1.msra.mxu0 %v3828
        %4422 = vmatprep.subr.mxu0 0.0
        %4423 = vmatpush1.msra.mxu0 %v3829
        %4424 = vmatprep.subr.mxu0 0.0
        %4425 = vmatpush1.msra.mxu0 %v3830
        %4426 = vmatprep.subr.mxu0 0.0
        %4427 = vmatpush1.msra.mxu0 %v3831
        %4428 = vmatprep.mubr.f32.mxu0 %v3559
        %4429 = vmatmul.mubr.f32.gmra.mrb[0].mxu0 %v3558
        %v4430 = vpop.f32.mrb[0].mxu0
        %v4431 = vadd.f32 %v4356, %v4430
        %v4432 = vpop.f32.mrb[0].mxu0
        %4433 = vmatprep.mubr.f32.mxu0 %v3575
        %4434 = vmatmul.mubr.f32.gmra.mrb[0].mxu0 %v3574
        %v4435 = vpop.f32.mrb[0].mxu0
        %v4436 = vadd.f32 %v4361, %v4435
        %v4437 = vpop.f32.mrb[0].mxu0
        %4438 = vdwg.mxu0
        %v4439 = vadd.f32 %v2772, %v4431
        %v4440 = vadd.f32 %v2773, %v4436
        %v4441 = vsel %vm1028, %v4439, 0.0
        %4442 = vadd.xlane.f32.xlu0 %v4441
        %v4443 = vpop.xlane.xlu0 %4442
        %v4444 = vsel %vm1028, %v4440, 0.0
        %4445 = vadd.xlane.f32.xlu0 %v4444
        %v4446 = vpop.xlane.xlu0 %4445
        %v4447 = vmul.f32 %v4443, %v2735
        %v4448 = vmul.f32 %v4446, %v2735
        %v4449 = vsub.f32 %v4439, %v4447
        %v4450 = vsub.f32 %v4440, %v4448
        %v4451 = vmul.f32 %v4449, %v4449
        %v4452 = vmul.f32 %v4450, %v4450
        %v4453 = vsel %vm1028, %v4451, 0.0
        %4454 = vadd.xlane.f32.xlu0 %v4453
        %v4455 = vpop.xlane.xlu0 %4454
        %v4456 = vsel %vm1028, %v4452, 0.0
        %4457 = vadd.xlane.f32.xlu0 %v4456
        %v4458 = vpop.xlane.xlu0 %4457
        %v4459 = vmul.f32 %v4455, %v2735
        %v4460 = vmul.f32 %v4458, %v2735
        %v4461 = vadd.f32 %v4459, 1e-05
        %v4462 = vadd.f32 %v4460, 1e-05
        %v4463 = vrsqrt.pop %v4461
        %v4464 = vrsqrt.pop %v4462
        %v4465 = vmul.f32 %v4449, %v4463
        %v4466 = vmul.f32 %v4450, %v4464
        %v4467 = vld [vmem:[%s909] sm:$0x1]
        %v4469 = vlaneseq
        %v4470 = vshrl.u32 %v4469, 7
        %v4471 = vsub.s32 0, %v4470
        %v4472 = vrot.slane %v4467, %v4471
        %v4474 = vmul.f32 %v4465, %v4472
        %v4475 = vmul.f32 %v4466, %v4472
        %v4476 = vld [vmem:[%s912] sm:$0x1]
        %v4478 = vlaneseq
        %v4479 = vshrl.u32 %v4478, 7
        %v4480 = vsub.s32 0, %v4479
        %v4481 = vrot.slane %v4476, %v4480
        %v4483 = vadd.f32 %v4474, %v4481
        %v4484 = vadd.f32 %v4475, %v4481
        %4485 = vst.msk [vmem:[#allocation2] sm:$0xff] %vm1028, %v4483
        %4486 = vst.msk [vmem:[#allocation2 + $0x8] sm:$0xff] %vm1028, %v4484
        %p4487 = scmp.eq.s32.totalorder %s34, 1
        // Predicated region
        $region113: #{forward.1} parent=107 // pred_check
          %p4488 = pneg %p4487
        $region114: #{forward.1} parent=107 // pred_check_branch
          %4490 = sbr.rel (%p4488) target = $region116
        $region115: #{forward.1} parent=107 // pred_region
          %v4492 = vrot.slane %v4483, 7
          %v4495 = vrot.slane %v4484, 6
          %vm4497 = vcmask 1040384
          %v4498 = vsel %vm4497, %v4492, %v4495
          %v4499 = vld [vmem:[%s20] sm:$0xff]
          %v4500 = vld [vmem:[%s20 + $0x8] sm:$0xff]
          %v4501 = vld [vmem:[%s20 + $0x10] sm:$0xff]
          %v4502 = vld [vmem:[%s20 + $0x18] sm:$0xff]
          %v4503 = vld [vmem:[%s21] sm:$0x1]
          %v4505 = vlaneseq
          %v4506 = vshrl.u32 %v4505, 7
          %v4507 = vsub.s32 0, %v4506
          %v4508 = vrot.slane %v4503, %v4507
          %v4511 = vsel %vm1028, %v4498, 0
          %4513 = vmatprep.subr.mxu0 0.0
          %4514 = vmatpush1.msra.mxu0 %v4499
          %4515 = vmatprep.subr.mxu0 0.0
          %4516 = vmatpush1.msra.mxu0 %v4500
          %4517 = vmatprep.subr.mxu0 0.0
          %4518 = vmatpush1.msra.mxu0 %v4501
          %4519 = vmatprep.subr.mxu0 0.0
          %4520 = vmatpush1.msra.mxu0 %v4502
          %4521 = vmatprep.subr.mxu0 0.0
          %4522 = vmatpush1.msra.mxu0 0.0
          %4523 = vmatprep.subr.mxu0 0.0
          %4524 = vmatpush1.msra.mxu0 0.0
          %4525 = vmatprep.subr.mxu0 0.0
          %4526 = vmatpush1.msra.mxu0 0.0
          %4527 = vmatprep.subr.mxu0 0.0
          %4528 = vmatpush1.msra.mxu0 0.0
          %4529 = vmatprep.subr.mxu0 0.0
          %4530 = vmatpush1.msra.mxu0 0.0
          %4531 = vmatprep.subr.mxu0 0.0
          %4532 = vmatpush1.msra.mxu0 0.0
          %4533 = vmatprep.subr.mxu0 0.0
          %4534 = vmatpush1.msra.mxu0 0.0
          %4535 = vmatprep.subr.mxu0 0.0
          %4536 = vmatpush1.msra.mxu0 0.0
          %4537 = vmatprep.subr.mxu0 0.0
          %4538 = vmatpush1.msra.mxu0 0.0
          %4539 = vmatprep.subr.mxu0 0.0
          %4540 = vmatpush1.msra.mxu0 0.0
          %4541 = vmatprep.subr.mxu0 0.0
          %4542 = vmatpush1.msra.mxu0 0.0
          %4543 = vmatprep.subr.mxu0 0.0
          %4544 = vmatpush1.msra.mxu0 0.0
          %4545 = vmatprep.subr.mxu0 0.0
          %4546 = vmatpush1.msra.mxu0 0.0
          %4547 = vmatprep.subr.mxu0 0.0
          %4548 = vmatpush1.msra.mxu0 0.0
          %4549 = vmatprep.subr.mxu0 0.0
          %4550 = vmatpush1.msra.mxu0 0.0
          %4551 = vmatprep.subr.mxu0 0.0
          %4552 = vmatpush1.msra.mxu0 0.0
          %4553 = vmatprep.subr.mxu0 0.0
          %4554 = vmatpush1.msra.mxu0 0.0
          %4555 = vmatprep.subr.mxu0 0.0
          %4556 = vmatpush1.msra.mxu0 0.0
          %4557 = vmatprep.subr.mxu0 0.0
          %4558 = vmatpush1.msra.mxu0 0.0
          %4559 = vmatprep.subr.mxu0 0.0
          %4560 = vmatpush1.msra.mxu0 0.0
          %4561 = vmatprep.subr.mxu0 0.0
          %4562 = vmatpush1.msra.mxu0 0.0
          %4563 = vmatprep.subr.mxu0 0.0
          %4564 = vmatpush1.msra.mxu0 0.0
          %4565 = vmatprep.subr.mxu0 0.0
          %4566 = vmatpush1.msra.mxu0 0.0
          %4567 = vmatprep.subr.mxu0 0.0
          %4568 = vmatpush1.msra.mxu0 0.0
          %4569 = vmatprep.subr.mxu0 0.0
          %4570 = vmatpush1.msra.mxu0 0.0
          %4571 = vmatprep.subr.mxu0 0.0
          %4572 = vmatpush1.msra.mxu0 0.0
          %4573 = vmatprep.subr.mxu0 0.0
          %4574 = vmatpush1.msra.mxu0 0.0
          %4575 = vmatprep.subr.mxu0 0.0
          %4576 = vmatpush1.msra.mxu0 0.0
          %4577 = vmatprep.mubr.f32.mxu0 0.0
          %4578 = vmatmul.mubr.f32.gmra.mrb[0].mxu0 %v4511
          %v4579 = vpop.f32.mrb[0].mxu0
          %v4580 = vadd.f32 %v4508, %v4579
          %v4581 = vpop.f32.mrb[0].mxu0
          %4582 = vdwg.mxu0
          %v4583 = vmin.f32 %v4580, 20.0
          %vm4584 = vcmp.gt.f32.partialorder %v4580, 20.0
          %v4585 = vmul.f32 %v4583, 1.442695
          %v4586 = vpow.pop %v4585
          %v4587 = vadd.f32 %v4586, 1.0
          %v4588 = vlog2.pop %v4587
          %v4589 = vmul.f32 %v4588, 0.6931472
          %v4590 = vsel %vm4584, %v4580, %v4589
          %vm4591 = vcmask 17408
          %4592 = vst.msk [vmem:[#allocation3] sm:$0x3] %vm4591, %v4590
        $region116: #{forward.1} parent=107 // pred_fallthru
          _
        // Predicated region
        $region117: #{forward.1} parent=107 // pred_check
          %p4593 = pneg %p589
        $region118: #{forward.1} parent=107 // pred_check_branch
          %4595 = sbr.rel (%p4593) target = $region120
        $region119: #{forward.1} parent=107 // pred_region
          %s4597 = ssub.s32 32, 32
          %4598 = vsyncadd [#allocation4], %s4597
          %s4600 = sshll.u32 [#allocation3], 4
          %s4601 = int_to_ptr.vmem [resolvable:$true] %s4600
          %4603 = dma.vmem_to_hbm [thread:$0]  %s4601, 32, %s22, [#allocation4]
        $region120: #{forward.1} parent=107 // pred_fallthru
          _
        // Predicated region
        $region121: #{forward.1} parent=107 // pred_check
          %p4604 = pneg %p589
        $region122: #{forward.1} parent=107 // pred_check_branch
          %4606 = sbr.rel (%p4604) target = $region124
        $region123: #{forward.1} parent=107 // pred_region
          %4607 = dma.done [#allocation4], 32
        $region124: #{forward.1} parent=107 // pred_fallthru
          _
      $region108: #{forward.1} parent=5 // pred_fallthru
        _
      %p4608 = scmp.le.s32.totalorder 2, %s29
      // Predicated region
      $region125: #{forward.1} parent=5 // pred_check
        %p4609 = pneg %p4608
      $region126: #{forward.1} parent=5 // pred_check_branch
        %4611 = sbr.rel (%p4609) target = $region128
      $region127: #{forward.1} parent=5 // pred_region
        %s4612 = ssub.s32 %s29, 2
      $region128: #{forward.1} parent=5 // pred_fallthru
        _
    $region6: #{forward.1} parent=1 // loop_footer
      %s33 = sadd.s32 1, %s29
    $region7: #{forward.1} parent=1 // loop_footer_branch
      %28 = sbr.rel target = $region3
    $region8: #{forward.1} parent=1 // loop_exit
      _
    %4613 = vsyncpa [#allocation4], 1
    %s4614 = scalar_lea.sflag [#allocation4], 1
    %4615 = vsyncpa %s4614, 1

</llo_original>
